<compile_context>
chip_gen: v5e
topology: v5e:2x2
jax: 0.10.0
libtpu: 0.0.40
codegen_flags: <defaults>
</compile_context>

<pallas_src>
import numpy as np
import jax
import jax.numpy as jnp
from jax import lax
from jax.experimental import pallas as pl
from jax.experimental.pallas import tpu as pltpu

# ---------------- configuration (small shapes for the demo) ----------------
IMG_SIZE = 32      # imgSize (square)
CHANNELS = 3
LEVEL = 2          # pyramid level used by CW-SSIM (band size = IMG_SIZE / 2**(LEVEL-1))
ORI = 8            # number of orientations
BATCH = 2


# ---------------- plain-JAX glue: deterministic parameter / band setup -------
def fspecial_gauss(size, sigma):
    """Normalized 2-D gaussian window (matches fspecial_gauss semantics)."""
    size = int(size)
    coords = jnp.arange(size, dtype=jnp.float32) - (size - 1) / 2.0
    yy, xx = jnp.meshgrid(coords, coords, indexing="ij")
    g = jnp.exp(-(xx * xx + yy * yy) / (2.0 * sigma * sigma))
    return (g / jnp.sum(g)).astype(jnp.float32)          # (size, size)


def steerable_bands(img, ori, level):
    # TODO(synk): the original SteerablePyramid class was not provided in the
    # module source; this is a deterministic FFT-based complex steerable band
    # surrogate producing bands with the exact shape/layout the CW-SSIM hot
    # path expects: [B, 2(re/im), C, ori, s, s] with s = H / 2**(level-1).
    B, C, H, W = img.shape
    s = H // (2 ** (level - 1))
    F = jnp.fft.fftshift(jnp.fft.fft2(img.astype(jnp.complex64)), axes=(-2, -1))
    h0 = H // 2 - s // 2
    Fc = F[:, :, h0:h0 + s, h0:h0 + s]                    # crop == downsample
    f = jnp.arange(s, dtype=jnp.float32) - s // 2
    yy, xx = jnp.meshgrid(f, f, indexing="ij")
    r = jnp.sqrt(xx * xx + yy * yy)
    theta = jnp.arctan2(yy, xx)
    rn = r / (s / 2.0)
    rad = jnp.where(r > 0, jnp.exp(-((rn - 0.5) ** 2) / (2.0 * 0.15 ** 2)), 0.0)
    bands = []
    for k in range(ori):
        ca = jnp.cos(theta - np.pi * k / ori)
        amask = jnp.where(ca > 0, ca ** (ori - 1), 0.0) * 2.0   # analytic (Hilbert) half-plane
        mask = (rad * amask).astype(jnp.complex64)
        bk = jnp.fft.ifft2(jnp.fft.ifftshift(Fc * mask, axes=(-2, -1)))
        bands.append(jnp.stack([bk.real, bk.imag], axis=1).astype(jnp.float32))  # (B,2,C,s,s)
    return jnp.stack(bands, axis=3)                       # (B, 2, C, ori, s, s)


# ---------------- Pallas kernel: the CW-SSIM hot path -------------------------
def _cwssim_kernel(ah_ref, aw_ref, wb_ref, red_ref, bx_ref, by_ref, out_ref):
    # bx_ref/by_ref: (2, C*Hb, ORI*Wb) lane-dense re/im band planes for one batch.
    a = bx_ref[0]                                   # (C*Hb, ORI*Wb)
    b = bx_ref[1]
    c = by_ref[0]
    d = by_ref[1]

    # corr = band1 * conj(band2) ; varr = |band1|^2 + |band2|^2 (eps = 1e-12 each abs^2)
    corr_r = a * c + b * d
    corr_i = b * c - a * d
    varr = a * a + b * b + c * c + d * d + 2e-12

    AH = ah_ref[...]                                # (C*Ho, C*Hb)  block-diag, taps = 1/7
    AW = aw_ref[...]                                # (ORI*Wb, ORI*Wo) block-diag, taps = 1/7

    def box(v):
        # depthwise 7x7 "valid" box average (win7 = ones(7,7)/49) done as two
        # MXU matmuls; per-channel / per-orientation structure lives in the
        # block-diagonal constants so no plane ever mixes with its neighbours.
        t = jnp.dot(AH, v, preferred_element_type=jnp.float32,
                    precision=lax.Precision.HIGHEST)              # (C*Ho, ORI*Wb)
        return jnp.dot(t, AW, preferred_element_type=jnp.float32,
                       precision=lax.Precision.HIGHEST)           # (C*Ho, ORI*Wo)

    cbr = box(corr_r)
    cbi = box(corr_i)
    vb = box(varr)

    abs_cb = jnp.sqrt(cbr * cbr + cbi * cbi + 1e-12)
    cssim = (2.0 * abs_cb + 1e-12) / (vb + 1e-12)   # (C*Ho, ORI*Wo)

    # gaussian window (tiled over channels/orientations) + reduction to a
    # per-orientation score row:  score[o] = mean_c sum_{i,j} cssim * w[i,j]
    weighted = cssim * wb_ref[...]                  # (C*Ho, ORI*Wo)
    row = jnp.sum(weighted, axis=0, keepdims=True)  # (1, ORI*Wo)
    score_row = jnp.dot(row, red_ref[...], preferred_element_type=jnp.float32,
                        precision=lax.Precision.HIGHEST)          # (1, 128) lanes 0..ORI-1
    out_ref[...] = jnp.broadcast_to(score_row, out_ref.shape)     # lane-dense slab


def _band_matrix(n_out, n_in, taps):
    m = np.zeros((n_out, n_in), np.float32)
    for i in range(n_out):
        m[i, i:i + taps] = 1.0 / taps
    return m


def _pack_bands(bands):
    # (B, 2, C, ORI, Hb, Wb) -> lane-dense (B, 2, C*Hb, ORI*Wb); done in plain JAX.
    B, two, C, K, Hb, Wb = bands.shape
    t = jnp.transpose(bands, (0, 1, 2, 4, 3, 5))    # (B, 2, C, Hb, ORI, Wb)
    return t.reshape(B, two, C * Hb, K * Wb)


def cw_ssim_bands_pallas(band_x, band_y, w):
    B, _, C, K, Hb, Wb = band_x.shape
    Ho, Wo = Hb - 6, Wb - 6

    bx = _pack_bands(band_x)                        # (B, 2, C*Hb, K*Wb)
    by = _pack_bands(band_y)

    # compile-time constant filter / reduction matrices
    bh = _band_matrix(Ho, Hb, 7)                    # (Ho, Hb)
    bw = _band_matrix(Wo, Wb, 7)                    # (Wo, Wb)
    AH = jnp.asarray(np.kron(np.eye(C, dtype=np.float32), bh))      # (C*Ho, C*Hb)
    AW = jnp.asarray(np.kron(np.eye(K, dtype=np.float32), bw.T))    # (K*Wb, K*Wo)
    lanes = max(128, ((K + 127) // 128) * 128)
    red_np = np.zeros((K * Wo, lanes), np.float32)
    for o in range(K):
        red_np[o * Wo:(o + 1) * Wo, o] = 1.0 / C    # per-ori spatial sum + channel mean
    RED = jnp.asarray(red_np)
    WB = jnp.tile(w.astype(jnp.float32), (C, K))    # (C*Ho, K*Wo) gaussian window

    band_block = (pl.Squeezed(), 2, C * Hb, K * Wb)

    out = pl.pallas_call(
        _cwssim_kernel,
        out_shape=jax.ShapeDtypeStruct((B, 8, lanes), jnp.float32),
        grid=(B,),
        in_specs=[
            pl.BlockSpec(AH.shape, lambda b: (0, 0)),
            pl.BlockSpec(AW.shape, lambda b: (0, 0)),
            pl.BlockSpec(WB.shape, lambda b: (0, 0)),
            pl.BlockSpec(RED.shape, lambda b: (0, 0)),
            pl.BlockSpec(band_block, lambda b: (b, 0, 0, 0)),
            pl.BlockSpec(band_block, lambda b: (b, 0, 0, 0)),
        ],
        out_specs=pl.BlockSpec((1, 8, lanes), lambda b: (b, 0, 0)),
        compiler_params=pltpu.CompilerParams(
            dimension_semantics=("parallel",)),
    )(AH, AW, WB, RED, bx, by)
    return out[:, 0, :K]                            # (B, ORI)


# ---------------- full forward (matches CW_SSIM.forward semantics) ----------
def cw_ssim_forward(x, y, as_loss=True):
    x = x * 255.0
    y = y * 255.0
    bx = steerable_bands(x, ORI, LEVEL)
    by = steerable_bands(y, ORI, LEVEL)
    s = x.shape[-1] // (2 ** (LEVEL - 1))
    w = fspecial_gauss(s - 7 + 1, s / 4.0)
    per_ori = cw_ssim_bands_pallas(bx, by, w)       # (B, ORI)
    score = per_ori.mean(axis=1)                    # (B,)  == cw_ssim()
    if as_loss:
        return 1.0 - score.mean()
    return score


# ---------------- pure-JAX reference of the hot path (for validation) --------
def _ref_per_ori(bx, by, w):
    a, b = bx[:, 0], bx[:, 1]
    c, d = by[:, 0], by[:, 1]
    corr_r = a * c + b * d
    corr_i = b * c - a * d
    varr = a * a + b * b + c * c + d * d + 2e-12

    def box(v):
        Ho, Wo = v.shape[-2] - 6, v.shape[-1] - 6
        acc = jnp.zeros(v.shape[:-2] + (Ho, Wo), v.dtype)
        for dy in range(7):
            for dx in range(7):
                acc = acc + v[..., dy:dy + Ho, dx:dx + Wo]
        return acc / 49.0

    cbr, cbi, vb = box(corr_r), box(corr_i), box(varr)
    cs = (2.0 * jnp.sqrt(cbr ** 2 + cbi ** 2 + 1e-12) + 1e-12) / (vb + 1e-12)
    # cs: (B, C, ORI, Ho, Wo) -> weighted spatial sum, mean over channels
    val = (cs * w[None, None, None]).sum((-2, -1)).mean(1)           # (B, ORI)
    return val


if __name__ == "__main__":
    key = jax.random.PRNGKey(0)
    kx, ky = jax.random.split(key)
    x = jax.random.uniform(kx, (BATCH, CHANNELS, IMG_SIZE, IMG_SIZE), jnp.float32)
    y = jax.random.uniform(ky, (BATCH, CHANNELS, IMG_SIZE, IMG_SIZE), jnp.float32)

    # validate the Pallas hot path against a pure-JAX reference
    bx = steerable_bands(x * 255.0, ORI, LEVEL)
    by = steerable_bands(y * 255.0, ORI, LEVEL)
    s = IMG_SIZE // (2 ** (LEVEL - 1))
    w = fspecial_gauss(s - 7 + 1, s / 4.0)
    per_kernel = jax.block_until_ready(cw_ssim_bands_pallas(bx, by, w))
    per_ref = jax.block_until_ready(_ref_per_ori(bx, by, w))
    np.testing.assert_allclose(np.asarray(per_kernel), np.asarray(per_ref),
                               rtol=5e-3, atol=1e-5)

    # full forward (as_loss=True), jitted
    loss = jax.jit(cw_ssim_forward)(x, y)
    loss = jax.block_until_ready(loss)
    assert np.isfinite(float(loss))
    print("KERNEL_OK")
</pallas_src>

<mosaic_0001>
module attributes {stable_mosaic.version = 11 : i64} {
  func.func @_cwssim_kernel(%arg0: i32, %arg1: memref<30x48xf32, #tpu.memory_space<vmem>>, %arg2: memref<128x80xf32, #tpu.memory_space<vmem>>, %arg3: memref<30x80xf32, #tpu.memory_space<vmem>>, %arg4: memref<80x128xf32, #tpu.memory_space<vmem>>, %arg5: memref<1x2x48x128xf32, #tpu.memory_space<vmem>>, %arg6: memref<1x2x48x128xf32, #tpu.memory_space<vmem>>, %arg7: memref<1x8x128xf32, #tpu.memory_space<vmem>>) attributes {dimension_semantics = [#tpu.dimension_semantics<parallel>], iteration_bounds = array<i64: 2>, scalar_prefetch = 0 : i64, scratch_operands = 0 : i64, tpu.core_type = #tpu.core_type<tc>, window_params = [{pipeline_mode = #tpu.pipeline_mode<synchronous>, transform_indices = @transform_0, window_bounds = array<i64: 30, 48>}, {pipeline_mode = #tpu.pipeline_mode<synchronous>, transform_indices = @transform_1, window_bounds = array<i64: 128, 80>}, {pipeline_mode = #tpu.pipeline_mode<synchronous>, transform_indices = @transform_2, window_bounds = array<i64: 30, 80>}, {pipeline_mode = #tpu.pipeline_mode<synchronous>, transform_indices = @transform_3, window_bounds = array<i64: 80, 128>}, {transform_indices = @transform_4, window_bounds = array<i64: 1, 2, 48, 128>}, {transform_indices = @transform_5, window_bounds = array<i64: 1, 2, 48, 128>}, {transform_indices = @transform_6, window_bounds = array<i64: 1, 8, 128>}]} {
    %c0 = arith.constant 0 : index
    %c0_0 = arith.constant 0 : index
    %c0_1 = arith.constant 0 : index
    %c0_2 = arith.constant 0 : index
    %0 = vector.load %arg5[%c0, %c0_0, %c0_1, %c0_2] : memref<1x2x48x128xf32, #tpu.memory_space<vmem>>, vector<1x1x48x128xf32>
    %1 = vector.shape_cast %0 : vector<1x1x48x128xf32> to vector<48x128xf32>
    %c0_3 = arith.constant 0 : index
    %c1 = arith.constant 1 : index
    %c0_4 = arith.constant 0 : index
    %c0_5 = arith.constant 0 : index
    %2 = vector.load %arg5[%c0_3, %c1, %c0_4, %c0_5] : memref<1x2x48x128xf32, #tpu.memory_space<vmem>>, vector<1x1x48x128xf32>
    %3 = vector.shape_cast %2 : vector<1x1x48x128xf32> to vector<48x128xf32>
    %c0_6 = arith.constant 0 : index
    %c0_7 = arith.constant 0 : index
    %c0_8 = arith.constant 0 : index
    %c0_9 = arith.constant 0 : index
    %4 = vector.load %arg6[%c0_6, %c0_7, %c0_8, %c0_9] : memref<1x2x48x128xf32, #tpu.memory_space<vmem>>, vector<1x1x48x128xf32>
    %5 = vector.shape_cast %4 : vector<1x1x48x128xf32> to vector<48x128xf32>
    %c0_10 = arith.constant 0 : index
    %c1_11 = arith.constant 1 : index
    %c0_12 = arith.constant 0 : index
    %c0_13 = arith.constant 0 : index
    %6 = vector.load %arg6[%c0_10, %c1_11, %c0_12, %c0_13] : memref<1x2x48x128xf32, #tpu.memory_space<vmem>>, vector<1x1x48x128xf32>
    %7 = vector.shape_cast %6 : vector<1x1x48x128xf32> to vector<48x128xf32>
    %8 = arith.mulf %1, %5 : vector<48x128xf32>
    %9 = arith.mulf %3, %7 : vector<48x128xf32>
    %10 = arith.addf %8, %9 : vector<48x128xf32>
    %11 = arith.mulf %3, %5 : vector<48x128xf32>
    %12 = arith.mulf %1, %7 : vector<48x128xf32>
    %13 = arith.subf %11, %12 : vector<48x128xf32>
    %14 = arith.mulf %1, %1 : vector<48x128xf32>
    %15 = arith.mulf %3, %3 : vector<48x128xf32>
    %16 = arith.addf %14, %15 : vector<48x128xf32>
    %17 = arith.mulf %5, %5 : vector<48x128xf32>
    %18 = arith.addf %16, %17 : vector<48x128xf32>
    %19 = arith.mulf %7, %7 : vector<48x128xf32>
    %20 = arith.addf %18, %19 : vector<48x128xf32>
    %cst = arith.constant 2.000000e-12 : f32
    %21 = vector.broadcast %cst : f32 to vector<48x128xf32>
    %22 = arith.addf %20, %21 : vector<48x128xf32>
    %c0_14 = arith.constant 0 : index
    %c0_15 = arith.constant 0 : index
    %23 = vector.load %arg1[%c0_14, %c0_15] : memref<30x48xf32, #tpu.memory_space<vmem>>, vector<30x48xf32>
    %c0_16 = arith.constant 0 : index
    %c0_17 = arith.constant 0 : index
    %24 = vector.load %arg2[%c0_16, %c0_17] : memref<128x80xf32, #tpu.memory_space<vmem>>, vector<128x80xf32>
    %cst_18 = arith.constant dense<0.000000e+00> : vector<30x128xf32>
    %25 = tpu.matmul %23, %10, %cst_18 {dimension_numbers = #tpu.dot_dimension_numbers<[1], [0], [0], [1], [0, 0, 1, 1], [], []>, precision = #tpu.contract_precision<fp32>} : vector<30x48xf32>, vector<48x128xf32>, vector<30x128xf32> -> vector<30x128xf32>
    %cst_19 = arith.constant dense<0.000000e+00> : vector<30x80xf32>
    %26 = tpu.matmul %25, %24, %cst_19 {dimension_numbers = #tpu.dot_dimension_numbers<[1], [0], [0], [1], [0, 0, 1, 1], [], []>, precision = #tpu.contract_precision<fp32>} : vector<30x128xf32>, vector<128x80xf32>, vector<30x80xf32> -> vector<30x80xf32>
    %cst_20 = arith.constant dense<0.000000e+00> : vector<30x128xf32>
    %27 = tpu.matmul %23, %13, %cst_20 {dimension_numbers = #tpu.dot_dimension_numbers<[1], [0], [0], [1], [0, 0, 1, 1], [], []>, precision = #tpu.contract_precision<fp32>} : vector<30x48xf32>, vector<48x128xf32>, vector<30x128xf32> -> vector<30x128xf32>
    %cst_21 = arith.constant dense<0.000000e+00> : vector<30x80xf32>
    %28 = tpu.matmul %27, %24, %cst_21 {dimension_numbers = #tpu.dot_dimension_numbers<[1], [0], [0], [1], [0, 0, 1, 1], [], []>, precision = #tpu.contract_precision<fp32>} : vector<30x128xf32>, vector<128x80xf32>, vector<30x80xf32> -> vector<30x80xf32>
    %cst_22 = arith.constant dense<0.000000e+00> : vector<30x128xf32>
    %29 = tpu.matmul %23, %22, %cst_22 {dimension_numbers = #tpu.dot_dimension_numbers<[1], [0], [0], [1], [0, 0, 1, 1], [], []>, precision = #tpu.contract_precision<fp32>} : vector<30x48xf32>, vector<48x128xf32>, vector<30x128xf32> -> vector<30x128xf32>
    %cst_23 = arith.constant dense<0.000000e+00> : vector<30x80xf32>
    %30 = tpu.matmul %29, %24, %cst_23 {dimension_numbers = #tpu.dot_dimension_numbers<[1], [0], [0], [1], [0, 0, 1, 1], [], []>, precision = #tpu.contract_precision<fp32>} : vector<30x128xf32>, vector<128x80xf32>, vector<30x80xf32> -> vector<30x80xf32>
    %31 = arith.mulf %26, %26 : vector<30x80xf32>
    %32 = arith.mulf %28, %28 : vector<30x80xf32>
    %33 = arith.addf %31, %32 : vector<30x80xf32>
    %cst_24 = arith.constant 9.99999996E-13 : f32
    %34 = vector.broadcast %cst_24 : f32 to vector<30x80xf32>
    %35 = arith.addf %33, %34 : vector<30x80xf32>
    %36 = math.sqrt %35 : vector<30x80xf32>
    %cst_25 = arith.constant 2.000000e+00 : f32
    %37 = vector.broadcast %cst_25 : f32 to vector<30x80xf32>
    %38 = arith.mulf %37, %36 : vector<30x80xf32>
    %cst_26 = arith.constant 9.99999996E-13 : f32
    %39 = vector.broadcast %cst_26 : f32 to vector<30x80xf32>
    %40 = arith.addf %38, %39 : vector<30x80xf32>
    %cst_27 = arith.constant 9.99999996E-13 : f32
    %41 = vector.broadcast %cst_27 : f32 to vector<30x80xf32>
    %42 = arith.addf %30, %41 : vector<30x80xf32>
    %43 = arith.divf %40, %42 : vector<30x80xf32>
    %c0_28 = arith.constant 0 : index
    %c0_29 = arith.constant 0 : index
    %44 = vector.load %arg3[%c0_28, %c0_29] : memref<30x80xf32, #tpu.memory_space<vmem>>, vector<30x80xf32>
    %45 = arith.mulf %43, %44 : vector<30x80xf32>
    %cst_30 = arith.constant dense<0.000000e+00> : vector<80xf32>
    %46 = vector.multi_reduction <add>, %45, %cst_30 [0] : vector<30x80xf32> to vector<80xf32>
    %47 = vector.shape_cast %46 : vector<80xf32> to vector<1x80xf32>
    %c0_31 = arith.constant 0 : index
    %c0_32 = arith.constant 0 : index
    %48 = vector.load %arg4[%c0_31, %c0_32] : memref<80x128xf32, #tpu.memory_space<vmem>>, vector<80x128xf32>
    %cst_33 = arith.constant dense<0.000000e+00> : vector<1x128xf32>
    %49 = tpu.matmul %47, %48, %cst_33 {dimension_numbers = #tpu.dot_dimension_numbers<[1], [0], [0], [1], [0, 0, 1, 1], [], []>, precision = #tpu.contract_precision<fp32>} : vector<1x80xf32>, vector<80x128xf32>, vector<1x128xf32> -> vector<1x128xf32>
    %50 = vector.shape_cast %49 : vector<1x128xf32> to vector<1x1x128xf32>
    %51 = vector.broadcast %50 : vector<1x1x128xf32> to vector<1x8x128xf32>
    %c0_34 = arith.constant 0 : index
    %c0_35 = arith.constant 0 : index
    %c0_36 = arith.constant 0 : index
    %52 = vector.load %arg7[%c0_34, %c0_35, %c0_36] : memref<1x8x128xf32, #tpu.memory_space<vmem>>, vector<1x8x128xf32>
    tpu.vector_store %arg7[%c0_34, %c0_35, %c0_36], %51 {strides = array<i32>} : memref<1x8x128xf32, #tpu.memory_space<vmem>>, vector<1x8x128xf32>,
    return
  }
  func.func @transform_0(%arg0: i32) -> (i32, i32) {
    %c0_i32 = arith.constant 0 : i32
    %c0_i32_0 = arith.constant 0 : i32
    %c0_i32_1 = arith.constant 0 : i32
    return %c0_i32, %c0_i32_0 : i32, i32
  }
  func.func @transform_1(%arg0: i32) -> (i32, i32) {
    %c0_i32 = arith.constant 0 : i32
    %c0_i32_0 = arith.constant 0 : i32
    %c0_i32_1 = arith.constant 0 : i32
    return %c0_i32, %c0_i32_0 : i32, i32
  }
  func.func @transform_2(%arg0: i32) -> (i32, i32) {
    %c0_i32 = arith.constant 0 : i32
    %c0_i32_0 = arith.constant 0 : i32
    %c0_i32_1 = arith.constant 0 : i32
    return %c0_i32, %c0_i32_0 : i32, i32
  }
  func.func @transform_3(%arg0: i32) -> (i32, i32) {
    %c0_i32 = arith.constant 0 : i32
    %c0_i32_0 = arith.constant 0 : i32
    %c0_i32_1 = arith.constant 0 : i32
    return %c0_i32, %c0_i32_0 : i32, i32
  }
  func.func @transform_4(%arg0: i32) -> (i32, i32, i32, i32) {
    %c0_i32 = arith.constant 0 : i32
    %c0_i32_0 = arith.constant 0 : i32
    %c0_i32_1 = arith.constant 0 : i32
    %c0_i32_2 = arith.constant 0 : i32
    return %arg0, %c0_i32, %c0_i32_0, %c0_i32_1 : i32, i32, i32, i32
  }
  func.func @transform_5(%arg0: i32) -> (i32, i32, i32, i32) {
    %c0_i32 = arith.constant 0 : i32
    %c0_i32_0 = arith.constant 0 : i32
    %c0_i32_1 = arith.constant 0 : i32
    %c0_i32_2 = arith.constant 0 : i32
    return %arg0, %c0_i32, %c0_i32_0, %c0_i32_1 : i32, i32, i32, i32
  }
  func.func @transform_6(%arg0: i32) -> (i32, i32, i32) {
    %c0_i32 = arith.constant 0 : i32
    %c0_i32_0 = arith.constant 0 : i32
    %c0_i32_1 = arith.constant 0 : i32
    return %arg0, %c0_i32, %c0_i32_0 : i32, i32, i32
  }
}

</mosaic_0001>

<llo_original>
// kernel: tpu_custom_call.1
$region0: #{tpu_custom_call.1}
  #allocation0 [shape = 'u32[]', space=smem, size = 0x4, offset = 0x4, fixed_abs, tag = 'smem constant byte address 0x4 - core index']
  #allocation1 [shape = 'u32[72,128]{1,0:T(1,128)}', space=vmem, size = 0x9000, scoped, tag = 'internal scratch']
  %s0 = inlined_call_operand.hbm [shape: f32[30,48], index: 0, kind: input, shape index: {}]
  %s1 = inlined_call_operand.vmem [shape: f32[128,80], index: 1, kind: input, shape index: {}]
  %s2 = inlined_call_operand.hbm [shape: f32[30,80], index: 2, kind: input, shape index: {}]
  %s3 = inlined_call_operand.hbm [shape: f32[80,128], index: 3, kind: input, shape index: {}]
  %s4 = inlined_call_operand.vmem [shape: f32[2,2,48,128], index: 4, kind: input, shape index: {}]
  %s5 = inlined_call_operand.hbm [shape: f32[2,2,48,128], index: 5, kind: input, shape index: {}]
  %s6 = inlined_call_operand.hbm [shape: f32[2,8,128], index: 6, kind: output, shape index: {}]
  %s7 = sld [smem:[#allocation0]]
  $region73: #{tpu_custom_call.1} parent=0
    _
  %s9 = ssub.s32 1, %s7
  %s10 = scalar_select 0, %s9, %s7
  $region1: #{tpu_custom_call.1} parent=0
    #allocation2 [shape = 'u8[16384]{0}', space=vmem, size = 0x4000, scoped, tag = 'input window, operand 0, single buffered']
    #allocation3 [shape = 's32[2]{0}', space=sflag, size = 0x8, scoped, tag = 'scoped memory for tpu_custom_call.1']
    #allocation4 [shape = 's32[2]{0}', space=sflag, size = 0x8, scoped, tag = 'scoped memory for tpu_custom_call.1']
    #allocation5 [shape = 'u8[16384]{0}', space=vmem, size = 0x4000, scoped, tag = 'input window, operand 2, single buffered']
    #allocation6 [shape = 's32[1]{0}', space=sflag, size = 0x4, scoped, tag = 'scoped memory for tpu_custom_call.1']
    #allocation7 [shape = 'u8[40960]{0}', space=vmem, size = 0xa000, scoped, tag = 'input window, operand 3, single buffered']
    #allocation8 [shape = 'u8[98304]{0}', space=vmem, size = 0x18000, scoped, tag = 'input window, operand 5']
    #allocation9 [shape = 's32[2]{0}', space=sflag, size = 0x8, scoped, tag = 'scoped memory for tpu_custom_call.1']
    #allocation10 [shape = 'u8[8192]{0}', space=vmem, size = 0x2000, scoped, tag = 'output window, operand 0']
    %11 = vsyncpa [#allocation3], 0
    %12 = vsyncpa [#allocation6], 0
    %13 = vsyncpa [#allocation9], 0
    %s14 = scalar_lea.sflag [#allocation9], 1
    %15 = vsyncpa %s14, 0
    %16 = vsyncpa [#allocation4], 0
    %s17 = scalar_lea.sflag [#allocation4], 1
    %18 = vsyncpa %s17, 0
    loop: start=0, step=1, limit=4
    $region2: #{tpu_custom_call.1} parent=1 // loop_pre_header
      _
    $region3: #{tpu_custom_call.1} parent=1 // loop_header
      %s20 = sphi 0, %s24
      %p21 = scmp.ge.s32.totalorder %s20, 4
      %s28 = sphi 0, %s28
      %s30 = sphi 0, %s28
      %s31 = sphi 0, %s30
      %s45 = sphi 0, %s31
      %s49 = sphi 0, %s49
      %s51 = sphi 0, %s49
      %s52 = sphi 0, %s51
      %s66 = sphi 0, %s52
      %s70 = sphi 0, %s70
      %s72 = sphi 0, %s70
      %s73 = sphi 0, %s72
      %s87 = sphi 0, %s73
      %s91 = sphi 0, %s91
      %s93 = sphi 0, %s91
      %s94 = sphi 0, %s93
      %s108 = sphi 0, %s94
      %s114 = sphi 0, %s116
      %s117 = sphi 0, %s114
      %s118 = sphi 0, %s117
      %s134 = sphi 0, %s118
      %s140 = sphi 0, %s142
      %s143 = sphi 0, %s140
      %s144 = sphi 0, %s143
      %s160 = sphi 0, %s144
      %s166 = sphi 0, %s168
      %s169 = sphi 0, %s166
      %s170 = sphi 0, %s169
      %s186 = sphi 0, %s170
    $region4: #{tpu_custom_call.1} parent=1 // loop_header_branch
      %23 = sbr.rel (%p21) target = $region8
    $region5: #{tpu_custom_call.1} parent=1 // loop_body
      %s25 = ssub.s32 %s20, 1
      %s26 = ssub.s32 %s20, 2
      %s27 = sadd.s32 %s20, 1
      %s29 = sadd.s32 %s28, 1
      %p32 = scmp.eq.s32.totalorder %s20, 1
      %p33 = scmp.ne.s32.totalorder %s28, %s30
      %p34 = scmp.eq.s32.totalorder %s20, 0
      %p35 = por %p33, %p34
      %p36 = scmp.ne.s32.totalorder %s28, %s30
      %p37 = scmp.eq.s32.totalorder %s25, 1
      %p38 = por %p36, %p37
      %p39 = scmp.ne.s32.totalorder %s30, %s31
      %p40 = scmp.eq.s32.totalorder %s25, 0
      %p41 = por %p39, %p40
      %p42 = scmp.ne.s32.totalorder %s30, %s31
      %p43 = scmp.eq.s32.totalorder %s26, 1
      %p44 = por %p42, %p43
      %p46 = scmp.ne.s32.totalorder %s31, %s45
      %p47 = scmp.eq.s32.totalorder %s26, 0
      %p48 = por %p46, %p47
      %s50 = sadd.s32 %s49, 1
      %p53 = scmp.eq.s32.totalorder %s20, 1
      %p54 = scmp.ne.s32.totalorder %s49, %s51
      %p55 = scmp.eq.s32.totalorder %s20, 0
      %p56 = por %p54, %p55
      %p57 = scmp.ne.s32.totalorder %s49, %s51
      %p58 = scmp.eq.s32.totalorder %s25, 1
      %p59 = por %p57, %p58
      %p60 = scmp.ne.s32.totalorder %s51, %s52
      %p61 = scmp.eq.s32.totalorder %s25, 0
      %p62 = por %p60, %p61
      %p63 = scmp.ne.s32.totalorder %s51, %s52
      %p64 = scmp.eq.s32.totalorder %s26, 1
      %p65 = por %p63, %p64
      %p67 = scmp.ne.s32.totalorder %s52, %s66
      %p68 = scmp.eq.s32.totalorder %s26, 0
      %p69 = por %p67, %p68
      %s71 = sadd.s32 %s70, 1
      %p74 = scmp.eq.s32.totalorder %s20, 1
      %p75 = scmp.ne.s32.totalorder %s70, %s72
      %p76 = scmp.eq.s32.totalorder %s20, 0
      %p77 = por %p75, %p76
      %p78 = scmp.ne.s32.totalorder %s70, %s72
      %p79 = scmp.eq.s32.totalorder %s25, 1
      %p80 = por %p78, %p79
      %p81 = scmp.ne.s32.totalorder %s72, %s73
      %p82 = scmp.eq.s32.totalorder %s25, 0
      %p83 = por %p81, %p82
      %p84 = scmp.ne.s32.totalorder %s72, %s73
      %p85 = scmp.eq.s32.totalorder %s26, 1
      %p86 = por %p84, %p85
      %p88 = scmp.ne.s32.totalorder %s73, %s87
      %p89 = scmp.eq.s32.totalorder %s26, 0
      %p90 = por %p88, %p89
      %s92 = sadd.s32 %s91, 1
      %p95 = scmp.eq.s32.totalorder %s20, 1
      %p96 = scmp.ne.s32.totalorder %s91, %s93
      %p97 = scmp.eq.s32.totalorder %s20, 0
      %p98 = por %p96, %p97
      %p99 = scmp.ne.s32.totalorder %s91, %s93
      %p100 = scmp.eq.s32.totalorder %s25, 1
      %p101 = por %p99, %p100
      %p102 = scmp.ne.s32.totalorder %s93, %s94
      %p103 = scmp.eq.s32.totalorder %s25, 0
      %p104 = por %p102, %p103
      %p105 = scmp.ne.s32.totalorder %s93, %s94
      %p106 = scmp.eq.s32.totalorder %s26, 1
      %p107 = por %p105, %p106
      %p109 = scmp.ne.s32.totalorder %s94, %s108
      %p110 = scmp.eq.s32.totalorder %s26, 0
      %p111 = por %p109, %p110
      %s112 = ssub.s32 %s20, %s27
      %p113 = scmp.eq.s32.totalorder %s112, 0
      %s115 = sadd.s32 %s114, 1
      %s116 = scalar_select %p113, %s114, %s115
      %p119 = pneg %p113
      %p120 = scmp.eq.s32.totalorder %s20, 1
      %p121 = por %p119, %p120
      %p122 = scmp.ne.s32.totalorder %s114, %s117
      %p123 = scmp.eq.s32.totalorder %s20, 0
      %p124 = por %p122, %p123
      %p125 = scmp.ne.s32.totalorder %s114, %s117
      %p126 = scmp.eq.s32.totalorder %s25, 1
      %p127 = por %p125, %p126
      %p128 = scmp.ne.s32.totalorder %s117, %s118
      %p129 = scmp.eq.s32.totalorder %s25, 0
      %p130 = por %p128, %p129
      %p131 = scmp.ne.s32.totalorder %s117, %s118
      %p132 = scmp.eq.s32.totalorder %s26, 1
      %p133 = por %p131, %p132
      %p135 = scmp.ne.s32.totalorder %s118, %s134
      %p136 = scmp.eq.s32.totalorder %s26, 0
      %p137 = por %p135, %p136
      %s138 = ssub.s32 %s20, %s27
      %p139 = scmp.eq.s32.totalorder %s138, 0
      %s141 = sadd.s32 %s140, 1
      %s142 = scalar_select %p139, %s140, %s141
      %p145 = pneg %p139
      %p146 = scmp.eq.s32.totalorder %s20, 1
      %p147 = por %p145, %p146
      %p148 = scmp.ne.s32.totalorder %s140, %s143
      %p149 = scmp.eq.s32.totalorder %s20, 0
      %p150 = por %p148, %p149
      %p151 = scmp.ne.s32.totalorder %s140, %s143
      %p152 = scmp.eq.s32.totalorder %s25, 1
      %p153 = por %p151, %p152
      %p154 = scmp.ne.s32.totalorder %s143, %s144
      %p155 = scmp.eq.s32.totalorder %s25, 0
      %p156 = por %p154, %p155
      %p157 = scmp.ne.s32.totalorder %s143, %s144
      %p158 = scmp.eq.s32.totalorder %s26, 1
      %p159 = por %p157, %p158
      %p161 = scmp.ne.s32.totalorder %s144, %s160
      %p162 = scmp.eq.s32.totalorder %s26, 0
      %p163 = por %p161, %p162
      %s164 = ssub.s32 %s20, %s27
      %p165 = scmp.eq.s32.totalorder %s164, 0
      %s167 = sadd.s32 %s166, 1
      %s168 = scalar_select %p165, %s166, %s167
      %p171 = pneg %p165
      %p172 = scmp.eq.s32.totalorder %s20, 1
      %p173 = por %p171, %p172
      %p174 = scmp.ne.s32.totalorder %s166, %s169
      %p175 = scmp.eq.s32.totalorder %s20, 0
      %p176 = por %p174, %p175
      %p177 = scmp.ne.s32.totalorder %s166, %s169
      %p178 = scmp.eq.s32.totalorder %s25, 1
      %p179 = por %p177, %p178
      %p180 = scmp.ne.s32.totalorder %s169, %s170
      %p181 = scmp.eq.s32.totalorder %s25, 0
      %p182 = por %p180, %p181
      %p183 = scmp.ne.s32.totalorder %s169, %s170
      %p184 = scmp.eq.s32.totalorder %s26, 1
      %p185 = por %p183, %p184
      %p187 = scmp.ne.s32.totalorder %s170, %s186
      %p188 = scmp.eq.s32.totalorder %s26, 0
      %p189 = por %p187, %p188
      %p190 = scmp.le.s32.totalorder 1, %s20
      %p191 = scmp.lt.s32.totalorder %s20, 3
      %p192 = pnand %p190, %p191
      %p193 = pneg %p192
      // Predicated region
      $region9: #{tpu_custom_call.1} parent=5 // pred_check
        _
      $region10: #{tpu_custom_call.1} parent=5 // pred_check_branch
        %195 = sbr.rel (%p192) target = $region12
      $region11: #{tpu_custom_call.1} parent=5 // pred_region
        %s196 = ssub.s32 %s20, 1
        // Predicated region
        $region13: #{tpu_custom_call.1} parent=11 // pred_check
          %p197 = pneg %p41
        $region14: #{tpu_custom_call.1} parent=11 // pred_check_branch
          %199 = sbr.rel (%p197) target = $region16
        $region15: #{tpu_custom_call.1} parent=11 // pred_region
          %201 = vsyncadd [#allocation3], 0
          %s202 = sshll.u32 %s0, 4
          %s203 = int_to_ptr.hbm [resolvable:$true] %s202
          %s204 = sshll.u32 [#allocation2], 4
          %s205 = int_to_ptr.vmem [resolvable:$true] %s204
          %210 = dma.hbm_to_vmem [thread:$0]  %s203, 512, %s205, [#allocation3], 128, 128, 8
        $region16: #{tpu_custom_call.1} parent=11 // pred_fallthru
          _
        // Predicated region
        $region17: #{tpu_custom_call.1} parent=11 // pred_check
          %p211 = pneg %p62
        $region18: #{tpu_custom_call.1} parent=11 // pred_check_branch
          %213 = sbr.rel (%p211) target = $region20
        $region19: #{tpu_custom_call.1} parent=11 // pred_region
          _
        $region20: #{tpu_custom_call.1} parent=11 // pred_fallthru
          _
        // Predicated region
        $region21: #{tpu_custom_call.1} parent=11 // pred_check
          %p214 = pneg %p83
        $region22: #{tpu_custom_call.1} parent=11 // pred_check_branch
          %216 = sbr.rel (%p214) target = $region24
        $region23: #{tpu_custom_call.1} parent=11 // pred_region
          %218 = vsyncadd [#allocation6], 0
          %s219 = sshll.u32 %s2, 4
          %s220 = int_to_ptr.hbm [resolvable:$true] %s219
          %s221 = sshll.u32 [#allocation5], 4
          %s222 = int_to_ptr.vmem [resolvable:$true] %s221
          %227 = dma.hbm_to_vmem [thread:$0]  %s220, 512, %s222, [#allocation6], 128, 128, 8
        $region24: #{tpu_custom_call.1} parent=11 // pred_fallthru
          _
        // Predicated region
        $region25: #{tpu_custom_call.1} parent=11 // pred_check
          %p228 = pneg %p104
        $region26: #{tpu_custom_call.1} parent=11 // pred_check_branch
          %230 = sbr.rel (%p228) target = $region28
        $region27: #{tpu_custom_call.1} parent=11 // pred_region
          %232 = vsyncadd [#allocation6], 0
          %s233 = sshll.u32 %s3, 4
          %s234 = int_to_ptr.hbm [resolvable:$true] %s233
          %s235 = sshll.u32 [#allocation7], 4
          %s236 = int_to_ptr.vmem [resolvable:$true] %s235
          %241 = dma.hbm_to_vmem [thread:$0]  %s234, 1280, %s236, [#allocation6], 128, 128, 8
        $region28: #{tpu_custom_call.1} parent=11 // pred_fallthru
          _
      $region12: #{tpu_custom_call.1} parent=5 // pred_fallthru
        _
      %p242 = scmp.lt.s32.totalorder %s20, 2
      // Predicated region
      $region29: #{tpu_custom_call.1} parent=5 // pred_check
        %p243 = pneg %p242
      $region30: #{tpu_custom_call.1} parent=5 // pred_check_branch
        %245 = sbr.rel (%p243) target = $region32
      $region31: #{tpu_custom_call.1} parent=5 // pred_region
        // Predicated region
        $region33: #{tpu_custom_call.1} parent=31 // pred_check
          %p246 = pneg %p124
        $region34: #{tpu_custom_call.1} parent=31 // pred_check_branch
          %248 = sbr.rel (%p246) target = $region36
        $region35: #{tpu_custom_call.1} parent=31 // pred_region
          %p249 = scmp.lt.s32.totalorder %s20, 1
          %s250 = scalar_select %p249, %s20, 1
          %s251 = smul.addr %s250, 12
          %s252 = smul.addr %s251, 8
          %s253 = scalar_lea.vmem %s4, %s252
        $region36: #{tpu_custom_call.1} parent=31 // pred_fallthru
          _
        // Predicated region
        $region37: #{tpu_custom_call.1} parent=31 // pred_check
          %p254 = pneg %p150
        $region38: #{tpu_custom_call.1} parent=31 // pred_check_branch
          %256 = sbr.rel (%p254) target = $region40
        $region39: #{tpu_custom_call.1} parent=31 // pred_region
          %s257 = sand.u32 %s140, 1
          %s258 = scalar_lea.sflag [#allocation9], %s257
          %s259 = sand.u32 %s140, 1
          %s260 = smul.addr %s259, 96
          %s261 = scalar_lea.vmem [#allocation8], %s260
          %263 = vsyncadd %s258, 0
          %s264 = smul.addr %s20, 12
          %s265 = smul.addr %s264, 8
          %s266 = scalar_lea.hbm %s5, %s265
          %s267 = sshll.u32 %s266, 4
          %s268 = int_to_ptr.hbm [resolvable:$true] %s267
          %s269 = sshll.u32 %s261, 4
          %s270 = int_to_ptr.vmem [resolvable:$true] %s269
          %275 = dma.hbm_to_vmem [thread:$0]  %s268, 1536, %s270, %s258, 128, 128, 8
        $region40: #{tpu_custom_call.1} parent=31 // pred_fallthru
          _
      $region32: #{tpu_custom_call.1} parent=5 // pred_fallthru
        _
      %p276 = scmp.le.s32.totalorder 1, %s20
      %p277 = scmp.lt.s32.totalorder %s20, 3
      %p278 = pnand %p276, %p277
      %p279 = pneg %p278
      // Predicated region
      $region41: #{tpu_custom_call.1} parent=5 // pred_check
        _
      $region42: #{tpu_custom_call.1} parent=5 // pred_check_branch
        %281 = sbr.rel (%p278) target = $region44
      $region43: #{tpu_custom_call.1} parent=5 // pred_region
        %s282 = ssub.s32 %s20, 1
        // Predicated region
        $region45: #{tpu_custom_call.1} parent=43 // pred_check
          %p283 = pneg %p41
        $region46: #{tpu_custom_call.1} parent=43 // pred_check_branch
          %285 = sbr.rel (%p283) target = $region48
        $region47: #{tpu_custom_call.1} parent=43 // pred_region
          %287 = dma.done [#allocation3], 512
        $region48: #{tpu_custom_call.1} parent=43 // pred_fallthru
          _
        // Predicated region
        $region49: #{tpu_custom_call.1} parent=43 // pred_check
          %p288 = pneg %p83
        $region50: #{tpu_custom_call.1} parent=43 // pred_check_branch
          %290 = sbr.rel (%p288) target = $region52
        $region51: #{tpu_custom_call.1} parent=43 // pred_region
          %292 = dma.done [#allocation6], 512
        $region52: #{tpu_custom_call.1} parent=43 // pred_fallthru
          _
        // Predicated region
        $region53: #{tpu_custom_call.1} parent=43 // pred_check
          %p293 = pneg %p104
        $region54: #{tpu_custom_call.1} parent=43 // pred_check_branch
          %295 = sbr.rel (%p293) target = $region56
        $region55: #{tpu_custom_call.1} parent=43 // pred_region
          %297 = dma.done [#allocation6], 1280
        $region56: #{tpu_custom_call.1} parent=43 // pred_fallthru
          _
        %s298 = sand.u32 %s143, 1
        %s299 = scalar_lea.sflag [#allocation9], %s298
        %s300 = sand.u32 %s143, 1
        %s301 = smul.addr %s300, 96
        %s302 = scalar_lea.vmem [#allocation8], %s301
        // Predicated region
        $region57: #{tpu_custom_call.1} parent=43 // pred_check
          %p303 = pneg %p156
        $region58: #{tpu_custom_call.1} parent=43 // pred_check_branch
          %305 = sbr.rel (%p303) target = $region60
        $region59: #{tpu_custom_call.1} parent=43 // pred_region
          %307 = dma.done %s299, 1536
        $region60: #{tpu_custom_call.1} parent=43 // pred_fallthru
          _
        %p308 = pneg %p41
        %p309 = pneg %p38
        %p310 = pneg %p62
        %p311 = pneg %p59
        %p312 = pneg %p83
        %p313 = pneg %p80
        %p314 = pneg %p104
        %p315 = pneg %p101
        %p316 = scmp.lt.s32.totalorder %s25, 1
        %s317 = scalar_select %p316, %s25, 1
        %s318 = smul.addr %s317, 12
        %s319 = smul.addr %s318, 8
        %s320 = scalar_lea.vmem %s4, %s319
        %p321 = pneg %p130
        %p322 = pneg %p127
        %s323 = sand.u32 %s143, 1
        %s324 = scalar_lea.sflag [#allocation9], %s323
        %s325 = sand.u32 %s143, 1
        %s326 = smul.addr %s325, 96
        %s327 = scalar_lea.vmem [#allocation8], %s326
        %p328 = pneg %p156
        %p329 = pneg %p153
        %p330 = pneg %p182
        %p331 = pneg %p179
        %s332 = sand.u32 %s169, 1
        %s333 = scalar_lea.sflag [#allocation4], %s332
        %s334 = sand.u32 %s169, 1
        %s335 = smul.addr %s334, 8
        %s336 = scalar_lea.vmem [#allocation10], %s335
        %p337 = scmp.lt.s32.totalorder %s25, 1
        %s338 = scalar_select %p337, %s25, 1
        %s339 = smul.addr %s338, 12
        %s340 = smul.addr %s339, 8
        %s341 = scalar_lea.vmem %s4, %s340
        %v342 = vld [vmem:[%s341] sm:$0xff]
        %v343 = vld [vmem:[%s341 + $0x8] sm:$0xff]
        %v344 = vld [vmem:[%s341 + $0x10] sm:$0xff]
        %v345 = vld [vmem:[%s341 + $0x18] sm:$0xff]
        %v346 = vld [vmem:[%s341 + $0x20] sm:$0xff]
        %v347 = vld [vmem:[%s341 + $0x28] sm:$0xff]
        %s348 = scalar_lea.vmem %s341, 48
        %v349 = vld [vmem:[%s348] sm:$0xff]
        %v350 = vld [vmem:[%s348 + $0x8] sm:$0xff]
        %v351 = vld [vmem:[%s348 + $0x10] sm:$0xff]
        %v352 = vld [vmem:[%s348 + $0x18] sm:$0xff]
        %v353 = vld [vmem:[%s348 + $0x20] sm:$0xff]
        %v354 = vld [vmem:[%s348 + $0x28] sm:$0xff]
        %v355 = vld [vmem:[%s302] sm:$0xff]
        %v356 = vld [vmem:[%s302 + $0x8] sm:$0xff]
        %v357 = vld [vmem:[%s302 + $0x10] sm:$0xff]
        %v358 = vld [vmem:[%s302 + $0x18] sm:$0xff]
        %v359 = vld [vmem:[%s302 + $0x20] sm:$0xff]
        %v360 = vld [vmem:[%s302 + $0x28] sm:$0xff]
        %s361 = scalar_lea.vmem %s302, 48 [#allocation8]
        %v362 = vld [vmem:[%s361] sm:$0xff]
        %v363 = vld [vmem:[%s361 + $0x8] sm:$0xff]
        %v364 = vld [vmem:[%s361 + $0x10] sm:$0xff]
        %v365 = vld [vmem:[%s361 + $0x18] sm:$0xff]
        %v366 = vld [vmem:[%s361 + $0x20] sm:$0xff]
        %v367 = vld [vmem:[%s361 + $0x28] sm:$0xff]
        %v368 = vmul.f32 %v342, %v355
        %v369 = vmul.f32 %v343, %v356
        %v370 = vmul.f32 %v344, %v357
        %v371 = vmul.f32 %v345, %v358
        %v372 = vmul.f32 %v346, %v359
        %v373 = vmul.f32 %v347, %v360
        %v374 = vmul.f32 %v349, %v362
        %v375 = vmul.f32 %v350, %v363
        %v376 = vmul.f32 %v351, %v364
        %v377 = vmul.f32 %v352, %v365
        %v378 = vmul.f32 %v353, %v366
        %v379 = vmul.f32 %v354, %v367
        %v380 = vadd.f32 %v368, %v374
        %v381 = vadd.f32 %v369, %v375
        %v382 = vadd.f32 %v370, %v376
        %v383 = vadd.f32 %v371, %v377
        %v384 = vadd.f32 %v372, %v378
        %v385 = vadd.f32 %v373, %v379
        %v386 = vmul.f32 %v349, %v355
        %v387 = vmul.f32 %v350, %v356
        %v388 = vmul.f32 %v351, %v357
        %v389 = vmul.f32 %v352, %v358
        %v390 = vmul.f32 %v353, %v359
        %v391 = vmul.f32 %v354, %v360
        %v392 = vmul.f32 %v342, %v362
        %v393 = vmul.f32 %v343, %v363
        %v394 = vmul.f32 %v344, %v364
        %v395 = vmul.f32 %v345, %v365
        %v396 = vmul.f32 %v346, %v366
        %v397 = vmul.f32 %v347, %v367
        %v398 = vsub.f32 %v386, %v392
        %v399 = vsub.f32 %v387, %v393
        %v400 = vsub.f32 %v388, %v394
        %v401 = vsub.f32 %v389, %v395
        %v402 = vsub.f32 %v390, %v396
        %v403 = vsub.f32 %v391, %v397
        %v404 = vmul.f32 %v342, %v342
        %v405 = vmul.f32 %v343, %v343
        %v406 = vmul.f32 %v344, %v344
        %v407 = vmul.f32 %v345, %v345
        %v408 = vmul.f32 %v346, %v346
        %v409 = vmul.f32 %v347, %v347
        %v410 = vmul.f32 %v349, %v349
        %v411 = vmul.f32 %v350, %v350
        %v412 = vmul.f32 %v351, %v351
        %v413 = vmul.f32 %v352, %v352
        %v414 = vmul.f32 %v353, %v353
        %v415 = vmul.f32 %v354, %v354
        %v416 = vadd.f32 %v404, %v410
        %v417 = vadd.f32 %v405, %v411
        %v418 = vadd.f32 %v406, %v412
        %v419 = vadd.f32 %v407, %v413
        %v420 = vadd.f32 %v408, %v414
        %v421 = vadd.f32 %v409, %v415
        %v422 = vmul.f32 %v355, %v355
        %v423 = vmul.f32 %v356, %v356
        %v424 = vmul.f32 %v357, %v357
        %v425 = vmul.f32 %v358, %v358
        %v426 = vmul.f32 %v359, %v359
        %v427 = vmul.f32 %v360, %v360
        %v428 = vadd.f32 %v416, %v422
        %v429 = vadd.f32 %v417, %v423
        %v430 = vadd.f32 %v418, %v424
        %v431 = vadd.f32 %v419, %v425
        %v432 = vadd.f32 %v420, %v426
        %v433 = vadd.f32 %v421, %v427
        %v434 = vmul.f32 %v362, %v362
        %v435 = vmul.f32 %v363, %v363
        %v436 = vmul.f32 %v364, %v364
        %v437 = vmul.f32 %v365, %v365
        %v438 = vmul.f32 %v366, %v366
        %v439 = vmul.f32 %v367, %v367
        %v440 = vadd.f32 %v428, %v434
        %v441 = vadd.f32 %v429, %v435
        %v442 = vadd.f32 %v430, %v436
        %v443 = vadd.f32 %v431, %v437
        %v444 = vadd.f32 %v432, %v438
        %v445 = vadd.f32 %v433, %v439
        %v446 = vadd.f32 %v440, 2e-12
        %v447 = vadd.f32 %v441, 2e-12
        %v448 = vadd.f32 %v442, 2e-12
        %v449 = vadd.f32 %v443, 2e-12
        %v450 = vadd.f32 %v444, 2e-12
        %v451 = vadd.f32 %v445, 2e-12
        %v452 = vld [vmem:[#allocation2] sm:$0xff]
        %v453 = vld [vmem:[#allocation2 + $0x8] sm:$0xff]
        %v454 = vld [vmem:[#allocation2 + $0x10] sm:$0xff]
        %v455 = vld [vmem:[#allocation2 + $0x18] sm:$0x3f]
        %v456 = vld [vmem:[%s1] sm:$0xff]
        %v457 = vld [vmem:[%s1 + $0x8] sm:$0xff]
        %v458 = vld [vmem:[%s1 + $0x10] sm:$0xff]
        %v459 = vld [vmem:[%s1 + $0x18] sm:$0xff]
        %v460 = vld [vmem:[%s1 + $0x20] sm:$0xff]
        %v461 = vld [vmem:[%s1 + $0x28] sm:$0xff]
        %v462 = vld [vmem:[%s1 + $0x30] sm:$0xff]
        %v463 = vld [vmem:[%s1 + $0x38] sm:$0xff]
        %v464 = vld [vmem:[%s1 + $0x40] sm:$0xff]
        %v465 = vld [vmem:[%s1 + $0x48] sm:$0xff]
        %v466 = vld [vmem:[%s1 + $0x50] sm:$0xff]
        %v467 = vld [vmem:[%s1 + $0x58] sm:$0xff]
        %v468 = vld [vmem:[%s1 + $0x60] sm:$0xff]
        %v469 = vld [vmem:[%s1 + $0x68] sm:$0xff]
        %v470 = vld [vmem:[%s1 + $0x70] sm:$0xff]
        %v471 = vld [vmem:[%s1 + $0x78] sm:$0xff]
        %vm472 = vcmask 392192
        %v474 = vsel %vm472, %v452, 0
        %v477 = vsel %vm472, %v453, 0
        %v480 = vsel %vm472, %v454, 0
        %v483 = vsel %vm472, %v455, 0
        %485 = vmatpush.msra.mxu0 0.0
        %486 = vmatpush.msra.mxu0 0.0
        %487 = vmatpush.msra.mxu0 0.0
        %488 = vmatpush.msra.mxu0 0.0
        %489 = vmatpush.msra.mxu0 0.0
        %490 = vmatpush.msra.mxu0 0.0
        %491 = vmatpush.msra.mxu0 0.0
        %492 = vmatpush.msra.mxu0 0.0
        %493 = vmatpush.msra.mxu0 0.0
        %494 = vmatpush.msra.mxu0 0.0
        %v495 = vand.u32 %v385, 4294901760
        %496 = vmatpush.msra.mxu0 %v495
        %v497 = vand.u32 %v384, 4294901760
        %498 = vmatpush.msra.mxu0 %v497
        %v499 = vand.u32 %v383, 4294901760
        %500 = vmatpush.msra.mxu0 %v499
        %v501 = vand.u32 %v382, 4294901760
        %502 = vmatpush.msra.mxu0 %v501
        %v503 = vand.u32 %v381, 4294901760
        %504 = vmatpush.msra.mxu0 %v503
        %v505 = vand.u32 %v380, 4294901760
        %506 = vmatpush.msra.mxu0 %v505
        %v507 = vand.u32 %v474, 4294901760
        %v508 = vsub.f32 %v474, %v507
        %v509 = vand.u32 %v508, 4294901760
        %v510 = vsub.f32 %v508, %v509
        %v511 = vand.u32 %v510, 4294901760
        %512 = vmatmul.f32.gmra.mxu0 %v511
        %v513 = vpop.f32.mrf.mxu0
        %v514 = vadd.f32 0.0, %v513
        %v515 = vand.u32 %v477, 4294901760
        %v516 = vsub.f32 %v477, %v515
        %v517 = vand.u32 %v516, 4294901760
        %v518 = vsub.f32 %v516, %v517
        %v519 = vand.u32 %v518, 4294901760
        %520 = vmatmul.f32.gmra.mxu0 %v519
        %v521 = vpop.f32.mrf.mxu0
        %v522 = vadd.f32 0.0, %v521
        %v523 = vand.u32 %v480, 4294901760
        %v524 = vsub.f32 %v480, %v523
        %v525 = vand.u32 %v524, 4294901760
        %v526 = vsub.f32 %v524, %v525
        %v527 = vand.u32 %v526, 4294901760
        %528 = vmatmul.f32.gmra.mxu0 %v527
        %v529 = vpop.f32.mrf.mxu0
        %v530 = vadd.f32 0.0, %v529
        %v531 = vand.u32 %v483, 4294901760
        %v532 = vsub.f32 %v483, %v531
        %v533 = vand.u32 %v532, 4294901760
        %v534 = vsub.f32 %v532, %v533
        %v535 = vand.u32 %v534, 4294901760
        %536 = vmatmul.f32.gmra.mxu0 %v535
        %v537 = vpop.f32.mrf.mxu0
        %v538 = vadd.f32 0.0, %v537
        %539 = vdwg.mxu0
        %540 = vmatpush.msra.mxu0 0.0
        %541 = vmatpush.msra.mxu0 0.0
        %542 = vmatpush.msra.mxu0 0.0
        %543 = vmatpush.msra.mxu0 0.0
        %544 = vmatpush.msra.mxu0 0.0
        %545 = vmatpush.msra.mxu0 0.0
        %546 = vmatpush.msra.mxu0 0.0
        %547 = vmatpush.msra.mxu0 0.0
        %548 = vmatpush.msra.mxu0 0.0
        %549 = vmatpush.msra.mxu0 0.0
        %v550 = vand.u32 %v385, 4294901760
        %v551 = vsub.f32 %v385, %v550
        %v552 = vand.u32 %v551, 4294901760
        %v553 = vsub.f32 %v551, %v552
        %v554 = vand.u32 %v553, 4294901760
        %555 = vmatpush.msra.mxu0 %v554
        %v556 = vand.u32 %v384, 4294901760
        %v557 = vsub.f32 %v384, %v556
        %v558 = vand.u32 %v557, 4294901760
        %v559 = vsub.f32 %v557, %v558
        %v560 = vand.u32 %v559, 4294901760
        %561 = vmatpush.msra.mxu0 %v560
        %v562 = vand.u32 %v383, 4294901760
        %v563 = vsub.f32 %v383, %v562
        %v564 = vand.u32 %v563, 4294901760
        %v565 = vsub.f32 %v563, %v564
        %v566 = vand.u32 %v565, 4294901760
        %567 = vmatpush.msra.mxu0 %v566
        %v568 = vand.u32 %v382, 4294901760
        %v569 = vsub.f32 %v382, %v568
        %v570 = vand.u32 %v569, 4294901760
        %v571 = vsub.f32 %v569, %v570
        %v572 = vand.u32 %v571, 4294901760
        %573 = vmatpush.msra.mxu0 %v572
        %v574 = vand.u32 %v381, 4294901760
        %v575 = vsub.f32 %v381, %v574
        %v576 = vand.u32 %v575, 4294901760
        %v577 = vsub.f32 %v575, %v576
        %v578 = vand.u32 %v577, 4294901760
        %579 = vmatpush.msra.mxu0 %v578
        %v580 = vand.u32 %v380, 4294901760
        %v581 = vsub.f32 %v380, %v580
        %v582 = vand.u32 %v581, 4294901760
        %v583 = vsub.f32 %v581, %v582
        %v584 = vand.u32 %v583, 4294901760
        %585 = vmatpush.msra.mxu0 %v584
        %v586 = vand.u32 %v474, 4294901760
        %587 = vmatmul.f32.gmra.mxu0 %v586
        %v588 = vpop.f32.mrf.mxu0
        %v589 = vadd.f32 %v514, %v588
        %v590 = vand.u32 %v477, 4294901760
        %591 = vmatmul.f32.gmra.mxu0 %v590
        %v592 = vpop.f32.mrf.mxu0
        %v593 = vadd.f32 %v522, %v592
        %v594 = vand.u32 %v480, 4294901760
        %595 = vmatmul.f32.gmra.mxu0 %v594
        %v596 = vpop.f32.mrf.mxu0
        %v597 = vadd.f32 %v530, %v596
        %v598 = vand.u32 %v483, 4294901760
        %599 = vmatmul.f32.gmra.mxu0 %v598
        %v600 = vpop.f32.mrf.mxu0
        %v601 = vadd.f32 %v538, %v600
        %602 = vdwg.mxu0
        %603 = vmatpush.msra.mxu0 0.0
        %604 = vmatpush.msra.mxu0 0.0
        %605 = vmatpush.msra.mxu0 0.0
        %606 = vmatpush.msra.mxu0 0.0
        %607 = vmatpush.msra.mxu0 0.0
        %608 = vmatpush.msra.mxu0 0.0
        %609 = vmatpush.msra.mxu0 0.0
        %610 = vmatpush.msra.mxu0 0.0
        %611 = vmatpush.msra.mxu0 0.0
        %612 = vmatpush.msra.mxu0 0.0
        %v613 = vand.u32 %v385, 4294901760
        %v614 = vsub.f32 %v385, %v613
        %615 = vmatpush.msra.mxu0 %v614
        %v616 = vand.u32 %v384, 4294901760
        %v617 = vsub.f32 %v384, %v616
        %618 = vmatpush.msra.mxu0 %v617
        %v619 = vand.u32 %v383, 4294901760
        %v620 = vsub.f32 %v383, %v619
        %621 = vmatpush.msra.mxu0 %v620
        %v622 = vand.u32 %v382, 4294901760
        %v623 = vsub.f32 %v382, %v622
        %624 = vmatpush.msra.mxu0 %v623
        %v625 = vand.u32 %v381, 4294901760
        %v626 = vsub.f32 %v381, %v625
        %627 = vmatpush.msra.mxu0 %v626
        %v628 = vand.u32 %v380, 4294901760
        %v629 = vsub.f32 %v380, %v628
        %630 = vmatpush.msra.mxu0 %v629
        %v631 = vand.u32 %v474, 4294901760
        %v632 = vsub.f32 %v474, %v631
        %633 = vmatmul.f32.gmra.mxu0 %v632
        %v634 = vpop.f32.mrf.mxu0
        %v635 = vadd.f32 %v589, %v634
        %v636 = vand.u32 %v477, 4294901760
        %v637 = vsub.f32 %v477, %v636
        %638 = vmatmul.f32.gmra.mxu0 %v637
        %v639 = vpop.f32.mrf.mxu0
        %v640 = vadd.f32 %v593, %v639
        %v641 = vand.u32 %v480, 4294901760
        %v642 = vsub.f32 %v480, %v641
        %643 = vmatmul.f32.gmra.mxu0 %v642
        %v644 = vpop.f32.mrf.mxu0
        %v645 = vadd.f32 %v597, %v644
        %v646 = vand.u32 %v483, 4294901760
        %v647 = vsub.f32 %v483, %v646
        %648 = vmatmul.f32.gmra.mxu0 %v647
        %v649 = vpop.f32.mrf.mxu0
        %v650 = vadd.f32 %v601, %v649
        %651 = vdwg.mxu0
        %652 = vmatpush.msra.mxu0 0.0
        %653 = vmatpush.msra.mxu0 0.0
        %654 = vmatpush.msra.mxu0 0.0
        %655 = vmatpush.msra.mxu0 0.0
        %656 = vmatpush.msra.mxu0 0.0
        %657 = vmatpush.msra.mxu0 0.0
        %658 = vmatpush.msra.mxu0 0.0
        %659 = vmatpush.msra.mxu0 0.0
        %660 = vmatpush.msra.mxu0 0.0
        %661 = vmatpush.msra.mxu0 0.0
        %v662 = vand.u32 %v385, 4294901760
        %663 = vmatpush.msra.mxu0 %v662
        %v664 = vand.u32 %v384, 4294901760
        %665 = vmatpush.msra.mxu0 %v664
        %v666 = vand.u32 %v383, 4294901760
        %667 = vmatpush.msra.mxu0 %v666
        %v668 = vand.u32 %v382, 4294901760
        %669 = vmatpush.msra.mxu0 %v668
        %v670 = vand.u32 %v381, 4294901760
        %671 = vmatpush.msra.mxu0 %v670
        %v672 = vand.u32 %v380, 4294901760
        %673 = vmatpush.msra.mxu0 %v672
        %v674 = vand.u32 %v474, 4294901760
        %v675 = vsub.f32 %v474, %v674
        %v676 = vand.u32 %v675, 4294901760
        %677 = vmatmul.f32.gmra.mxu0 %v676
        %v678 = vpop.f32.mrf.mxu0
        %v679 = vadd.f32 %v635, %v678
        %v680 = vand.u32 %v477, 4294901760
        %v681 = vsub.f32 %v477, %v680
        %v682 = vand.u32 %v681, 4294901760
        %683 = vmatmul.f32.gmra.mxu0 %v682
        %v684 = vpop.f32.mrf.mxu0
        %v685 = vadd.f32 %v640, %v684
        %v686 = vand.u32 %v480, 4294901760
        %v687 = vsub.f32 %v480, %v686
        %v688 = vand.u32 %v687, 4294901760
        %689 = vmatmul.f32.gmra.mxu0 %v688
        %v690 = vpop.f32.mrf.mxu0
        %v691 = vadd.f32 %v645, %v690
        %v692 = vand.u32 %v483, 4294901760
        %v693 = vsub.f32 %v483, %v692
        %v694 = vand.u32 %v693, 4294901760
        %695 = vmatmul.f32.gmra.mxu0 %v694
        %v696 = vpop.f32.mrf.mxu0
        %v697 = vadd.f32 %v650, %v696
        %698 = vdwg.mxu0
        %699 = vmatpush.msra.mxu0 0.0
        %700 = vmatpush.msra.mxu0 0.0
        %701 = vmatpush.msra.mxu0 0.0
        %702 = vmatpush.msra.mxu0 0.0
        %703 = vmatpush.msra.mxu0 0.0
        %704 = vmatpush.msra.mxu0 0.0
        %705 = vmatpush.msra.mxu0 0.0
        %706 = vmatpush.msra.mxu0 0.0
        %707 = vmatpush.msra.mxu0 0.0
        %708 = vmatpush.msra.mxu0 0.0
        %v709 = vand.u32 %v385, 4294901760
        %v710 = vsub.f32 %v385, %v709
        %v711 = vand.u32 %v710, 4294901760
        %712 = vmatpush.msra.mxu0 %v711
        %v713 = vand.u32 %v384, 4294901760
        %v714 = vsub.f32 %v384, %v713
        %v715 = vand.u32 %v714, 4294901760
        %716 = vmatpush.msra.mxu0 %v715
        %v717 = vand.u32 %v383, 4294901760
        %v718 = vsub.f32 %v383, %v717
        %v719 = vand.u32 %v718, 4294901760
        %720 = vmatpush.msra.mxu0 %v719
        %v721 = vand.u32 %v382, 4294901760
        %v722 = vsub.f32 %v382, %v721
        %v723 = vand.u32 %v722, 4294901760
        %724 = vmatpush.msra.mxu0 %v723
        %v725 = vand.u32 %v381, 4294901760
        %v726 = vsub.f32 %v381, %v725
        %v727 = vand.u32 %v726, 4294901760
        %728 = vmatpush.msra.mxu0 %v727
        %v729 = vand.u32 %v380, 4294901760
        %v730 = vsub.f32 %v380, %v729
        %v731 = vand.u32 %v730, 4294901760
        %732 = vmatpush.msra.mxu0 %v731
        %v733 = vand.u32 %v474, 4294901760
        %734 = vmatmul.f32.gmra.mxu0 %v733
        %v735 = vpop.f32.mrf.mxu0
        %v736 = vadd.f32 %v679, %v735
        %v737 = vand.u32 %v477, 4294901760
        %738 = vmatmul.f32.gmra.mxu0 %v737
        %v739 = vpop.f32.mrf.mxu0
        %v740 = vadd.f32 %v685, %v739
        %v741 = vand.u32 %v480, 4294901760
        %742 = vmatmul.f32.gmra.mxu0 %v741
        %v743 = vpop.f32.mrf.mxu0
        %v744 = vadd.f32 %v691, %v743
        %v745 = vand.u32 %v483, 4294901760
        %746 = vmatmul.f32.gmra.mxu0 %v745
        %v747 = vpop.f32.mrf.mxu0
        %v748 = vadd.f32 %v697, %v747
        %749 = vdwg.mxu0
        %750 = vmatpush.msra.mxu0 0.0
        %751 = vmatpush.msra.mxu0 0.0
        %752 = vmatpush.msra.mxu0 0.0
        %753 = vmatpush.msra.mxu0 0.0
        %754 = vmatpush.msra.mxu0 0.0
        %755 = vmatpush.msra.mxu0 0.0
        %756 = vmatpush.msra.mxu0 0.0
        %757 = vmatpush.msra.mxu0 0.0
        %758 = vmatpush.msra.mxu0 0.0
        %759 = vmatpush.msra.mxu0 0.0
        %v760 = vand.u32 %v385, 4294901760
        %761 = vmatpush.msra.mxu0 %v760
        %v762 = vand.u32 %v384, 4294901760
        %763 = vmatpush.msra.mxu0 %v762
        %v764 = vand.u32 %v383, 4294901760
        %765 = vmatpush.msra.mxu0 %v764
        %v766 = vand.u32 %v382, 4294901760
        %767 = vmatpush.msra.mxu0 %v766
        %v768 = vand.u32 %v381, 4294901760
        %769 = vmatpush.msra.mxu0 %v768
        %v770 = vand.u32 %v380, 4294901760
        %771 = vmatpush.msra.mxu0 %v770
        %v772 = vand.u32 %v474, 4294901760
        %773 = vmatmul.f32.gmra.mxu0 %v772
        %v774 = vpop.f32.mrf.mxu0
        %v775 = vadd.f32 %v736, %v774
        %v776 = vand.u32 %v477, 4294901760
        %777 = vmatmul.f32.gmra.mxu0 %v776
        %v778 = vpop.f32.mrf.mxu0
        %v779 = vadd.f32 %v740, %v778
        %v780 = vand.u32 %v480, 4294901760
        %781 = vmatmul.f32.gmra.mxu0 %v780
        %v782 = vpop.f32.mrf.mxu0
        %v783 = vadd.f32 %v744, %v782
        %v784 = vand.u32 %v483, 4294901760
        %785 = vmatmul.f32.gmra.mxu0 %v784
        %v786 = vpop.f32.mrf.mxu0
        %v787 = vadd.f32 %v748, %v786
        %788 = vdwg.mxu0
        %v789 = vand.u32 %v471, 4294901760
        %790 = vmatpush.msra.mxu0 %v789
        %v791 = vand.u32 %v470, 4294901760
        %792 = vmatpush.msra.mxu0 %v791
        %v793 = vand.u32 %v469, 4294901760
        %794 = vmatpush.msra.mxu0 %v793
        %v795 = vand.u32 %v468, 4294901760
        %796 = vmatpush.msra.mxu0 %v795
        %v797 = vand.u32 %v467, 4294901760
        %798 = vmatpush.msra.mxu0 %v797
        %v799 = vand.u32 %v466, 4294901760
        %800 = vmatpush.msra.mxu0 %v799
        %v801 = vand.u32 %v465, 4294901760
        %802 = vmatpush.msra.mxu0 %v801
        %v803 = vand.u32 %v464, 4294901760
        %804 = vmatpush.msra.mxu0 %v803
        %v805 = vand.u32 %v463, 4294901760
        %806 = vmatpush.msra.mxu0 %v805
        %v807 = vand.u32 %v462, 4294901760
        %808 = vmatpush.msra.mxu0 %v807
        %v809 = vand.u32 %v461, 4294901760
        %810 = vmatpush.msra.mxu0 %v809
        %v811 = vand.u32 %v460, 4294901760
        %812 = vmatpush.msra.mxu0 %v811
        %v813 = vand.u32 %v459, 4294901760
        %814 = vmatpush.msra.mxu0 %v813
        %v815 = vand.u32 %v458, 4294901760
        %816 = vmatpush.msra.mxu0 %v815
        %v817 = vand.u32 %v457, 4294901760
        %818 = vmatpush.msra.mxu0 %v817
        %v819 = vand.u32 %v456, 4294901760
        %820 = vmatpush.msra.mxu0 %v819
        %v821 = vand.u32 %v775, 4294901760
        %v822 = vsub.f32 %v775, %v821
        %v823 = vand.u32 %v822, 4294901760
        %v824 = vsub.f32 %v822, %v823
        %v825 = vand.u32 %v824, 4294901760
        %826 = vmatmul.f32.gmra.mxu0 %v825
        %v827 = vpop.f32.mrf.mxu0
        %v828 = vadd.f32 0.0, %v827
        %v829 = vand.u32 %v779, 4294901760
        %v830 = vsub.f32 %v779, %v829
        %v831 = vand.u32 %v830, 4294901760
        %v832 = vsub.f32 %v830, %v831
        %v833 = vand.u32 %v832, 4294901760
        %834 = vmatmul.f32.gmra.mxu0 %v833
        %v835 = vpop.f32.mrf.mxu0
        %v836 = vadd.f32 0.0, %v835
        %v837 = vand.u32 %v783, 4294901760
        %v838 = vsub.f32 %v783, %v837
        %v839 = vand.u32 %v838, 4294901760
        %v840 = vsub.f32 %v838, %v839
        %v841 = vand.u32 %v840, 4294901760
        %842 = vmatmul.f32.gmra.mxu0 %v841
        %v843 = vpop.f32.mrf.mxu0
        %v844 = vadd.f32 0.0, %v843
        %v845 = vand.u32 %v787, 4294901760
        %v846 = vsub.f32 %v787, %v845
        %v847 = vand.u32 %v846, 4294901760
        %v848 = vsub.f32 %v846, %v847
        %v849 = vand.u32 %v848, 4294901760
        %850 = vmatmul.f32.gmra.mxu0 %v849
        %v851 = vpop.f32.mrf.mxu0
        %v852 = vadd.f32 0.0, %v851
        %853 = vdwg.mxu0
        %v854 = vand.u32 %v471, 4294901760
        %v855 = vsub.f32 %v471, %v854
        %v856 = vand.u32 %v855, 4294901760
        %v857 = vsub.f32 %v855, %v856
        %v858 = vand.u32 %v857, 4294901760
        %859 = vmatpush.msra.mxu0 %v858
        %v860 = vand.u32 %v470, 4294901760
        %v861 = vsub.f32 %v470, %v860
        %v862 = vand.u32 %v861, 4294901760
        %v863 = vsub.f32 %v861, %v862
        %v864 = vand.u32 %v863, 4294901760
        %865 = vmatpush.msra.mxu0 %v864
        %v866 = vand.u32 %v469, 4294901760
        %v867 = vsub.f32 %v469, %v866
        %v868 = vand.u32 %v867, 4294901760
        %v869 = vsub.f32 %v867, %v868
        %v870 = vand.u32 %v869, 4294901760
        %871 = vmatpush.msra.mxu0 %v870
        %v872 = vand.u32 %v468, 4294901760
        %v873 = vsub.f32 %v468, %v872
        %v874 = vand.u32 %v873, 4294901760
        %v875 = vsub.f32 %v873, %v874
        %v876 = vand.u32 %v875, 4294901760
        %877 = vmatpush.msra.mxu0 %v876
        %v878 = vand.u32 %v467, 4294901760
        %v879 = vsub.f32 %v467, %v878
        %v880 = vand.u32 %v879, 4294901760
        %v881 = vsub.f32 %v879, %v880
        %v882 = vand.u32 %v881, 4294901760
        %883 = vmatpush.msra.mxu0 %v882
        %v884 = vand.u32 %v466, 4294901760
        %v885 = vsub.f32 %v466, %v884
        %v886 = vand.u32 %v885, 4294901760
        %v887 = vsub.f32 %v885, %v886
        %v888 = vand.u32 %v887, 4294901760
        %889 = vmatpush.msra.mxu0 %v888
        %v890 = vand.u32 %v465, 4294901760
        %v891 = vsub.f32 %v465, %v890
        %v892 = vand.u32 %v891, 4294901760
        %v893 = vsub.f32 %v891, %v892
        %v894 = vand.u32 %v893, 4294901760
        %895 = vmatpush.msra.mxu0 %v894
        %v896 = vand.u32 %v464, 4294901760
        %v897 = vsub.f32 %v464, %v896
        %v898 = vand.u32 %v897, 4294901760
        %v899 = vsub.f32 %v897, %v898
        %v900 = vand.u32 %v899, 4294901760
        %901 = vmatpush.msra.mxu0 %v900
        %v902 = vand.u32 %v463, 4294901760
        %v903 = vsub.f32 %v463, %v902
        %v904 = vand.u32 %v903, 4294901760
        %v905 = vsub.f32 %v903, %v904
        %v906 = vand.u32 %v905, 4294901760
        %907 = vmatpush.msra.mxu0 %v906
        %v908 = vand.u32 %v462, 4294901760
        %v909 = vsub.f32 %v462, %v908
        %v910 = vand.u32 %v909, 4294901760
        %v911 = vsub.f32 %v909, %v910
        %v912 = vand.u32 %v911, 4294901760
        %913 = vmatpush.msra.mxu0 %v912
        %v914 = vand.u32 %v461, 4294901760
        %v915 = vsub.f32 %v461, %v914
        %v916 = vand.u32 %v915, 4294901760
        %v917 = vsub.f32 %v915, %v916
        %v918 = vand.u32 %v917, 4294901760
        %919 = vmatpush.msra.mxu0 %v918
        %v920 = vand.u32 %v460, 4294901760
        %v921 = vsub.f32 %v460, %v920
        %v922 = vand.u32 %v921, 4294901760
        %v923 = vsub.f32 %v921, %v922
        %v924 = vand.u32 %v923, 4294901760
        %925 = vmatpush.msra.mxu0 %v924
        %v926 = vand.u32 %v459, 4294901760
        %v927 = vsub.f32 %v459, %v926
        %v928 = vand.u32 %v927, 4294901760
        %v929 = vsub.f32 %v927, %v928
        %v930 = vand.u32 %v929, 4294901760
        %931 = vmatpush.msra.mxu0 %v930
        %v932 = vand.u32 %v458, 4294901760
        %v933 = vsub.f32 %v458, %v932
        %v934 = vand.u32 %v933, 4294901760
        %v935 = vsub.f32 %v933, %v934
        %v936 = vand.u32 %v935, 4294901760
        %937 = vmatpush.msra.mxu0 %v936
        %v938 = vand.u32 %v457, 4294901760
        %v939 = vsub.f32 %v457, %v938
        %v940 = vand.u32 %v939, 4294901760
        %v941 = vsub.f32 %v939, %v940
        %v942 = vand.u32 %v941, 4294901760
        %943 = vmatpush.msra.mxu0 %v942
        %v944 = vand.u32 %v456, 4294901760
        %v945 = vsub.f32 %v456, %v944
        %v946 = vand.u32 %v945, 4294901760
        %v947 = vsub.f32 %v945, %v946
        %v948 = vand.u32 %v947, 4294901760
        %949 = vmatpush.msra.mxu0 %v948
        %v950 = vand.u32 %v775, 4294901760
        %951 = vmatmul.f32.gmra.mxu0 %v950
        %v952 = vpop.f32.mrf.mxu0
        %v953 = vadd.f32 %v828, %v952
        %v954 = vand.u32 %v779, 4294901760
        %955 = vmatmul.f32.gmra.mxu0 %v954
        %v956 = vpop.f32.mrf.mxu0
        %v957 = vadd.f32 %v836, %v956
        %v958 = vand.u32 %v783, 4294901760
        %959 = vmatmul.f32.gmra.mxu0 %v958
        %v960 = vpop.f32.mrf.mxu0
        %v961 = vadd.f32 %v844, %v960
        %v962 = vand.u32 %v787, 4294901760
        %963 = vmatmul.f32.gmra.mxu0 %v962
        %v964 = vpop.f32.mrf.mxu0
        %v965 = vadd.f32 %v852, %v964
        %966 = vdwg.mxu0
        %v967 = vand.u32 %v471, 4294901760
        %v968 = vsub.f32 %v471, %v967
        %969 = vmatpush.msra.mxu0 %v968
        %v970 = vand.u32 %v470, 4294901760
        %v971 = vsub.f32 %v470, %v970
        %972 = vmatpush.msra.mxu0 %v971
        %v973 = vand.u32 %v469, 4294901760
        %v974 = vsub.f32 %v469, %v973
        %975 = vmatpush.msra.mxu0 %v974
        %v976 = vand.u32 %v468, 4294901760
        %v977 = vsub.f32 %v468, %v976
        %978 = vmatpush.msra.mxu0 %v977
        %v979 = vand.u32 %v467, 4294901760
        %v980 = vsub.f32 %v467, %v979
        %981 = vmatpush.msra.mxu0 %v980
        %v982 = vand.u32 %v466, 4294901760
        %v983 = vsub.f32 %v466, %v982
        %984 = vmatpush.msra.mxu0 %v983
        %v985 = vand.u32 %v465, 4294901760
        %v986 = vsub.f32 %v465, %v985
        %987 = vmatpush.msra.mxu0 %v986
        %v988 = vand.u32 %v464, 4294901760
        %v989 = vsub.f32 %v464, %v988
        %990 = vmatpush.msra.mxu0 %v989
        %v991 = vand.u32 %v463, 4294901760
        %v992 = vsub.f32 %v463, %v991
        %993 = vmatpush.msra.mxu0 %v992
        %v994 = vand.u32 %v462, 4294901760
        %v995 = vsub.f32 %v462, %v994
        %996 = vmatpush.msra.mxu0 %v995
        %v997 = vand.u32 %v461, 4294901760
        %v998 = vsub.f32 %v461, %v997
        %999 = vmatpush.msra.mxu0 %v998
        %v1000 = vand.u32 %v460, 4294901760
        %v1001 = vsub.f32 %v460, %v1000
        %1002 = vmatpush.msra.mxu0 %v1001
        %v1003 = vand.u32 %v459, 4294901760
        %v1004 = vsub.f32 %v459, %v1003
        %1005 = vmatpush.msra.mxu0 %v1004
        %v1006 = vand.u32 %v458, 4294901760
        %v1007 = vsub.f32 %v458, %v1006
        %1008 = vmatpush.msra.mxu0 %v1007
        %v1009 = vand.u32 %v457, 4294901760
        %v1010 = vsub.f32 %v457, %v1009
        %1011 = vmatpush.msra.mxu0 %v1010
        %v1012 = vand.u32 %v456, 4294901760
        %v1013 = vsub.f32 %v456, %v1012
        %1014 = vmatpush.msra.mxu0 %v1013
        %v1015 = vand.u32 %v775, 4294901760
        %v1016 = vsub.f32 %v775, %v1015
        %1017 = vmatmul.f32.gmra.mxu0 %v1016
        %v1018 = vpop.f32.mrf.mxu0
        %v1019 = vadd.f32 %v953, %v1018
        %v1020 = vand.u32 %v779, 4294901760
        %v1021 = vsub.f32 %v779, %v1020
        %1022 = vmatmul.f32.gmra.mxu0 %v1021
        %v1023 = vpop.f32.mrf.mxu0
        %v1024 = vadd.f32 %v957, %v1023
        %v1025 = vand.u32 %v783, 4294901760
        %v1026 = vsub.f32 %v783, %v1025
        %1027 = vmatmul.f32.gmra.mxu0 %v1026
        %v1028 = vpop.f32.mrf.mxu0
        %v1029 = vadd.f32 %v961, %v1028
        %v1030 = vand.u32 %v787, 4294901760
        %v1031 = vsub.f32 %v787, %v1030
        %1032 = vmatmul.f32.gmra.mxu0 %v1031
        %v1033 = vpop.f32.mrf.mxu0
        %v1034 = vadd.f32 %v965, %v1033
        %1035 = vdwg.mxu0
        %v1036 = vand.u32 %v471, 4294901760
        %1037 = vmatpush.msra.mxu0 %v1036
        %v1038 = vand.u32 %v470, 4294901760
        %1039 = vmatpush.msra.mxu0 %v1038
        %v1040 = vand.u32 %v469, 4294901760
        %1041 = vmatpush.msra.mxu0 %v1040
        %v1042 = vand.u32 %v468, 4294901760
        %1043 = vmatpush.msra.mxu0 %v1042
        %v1044 = vand.u32 %v467, 4294901760
        %1045 = vmatpush.msra.mxu0 %v1044
        %v1046 = vand.u32 %v466, 4294901760
        %1047 = vmatpush.msra.mxu0 %v1046
        %v1048 = vand.u32 %v465, 4294901760
        %1049 = vmatpush.msra.mxu0 %v1048
        %v1050 = vand.u32 %v464, 4294901760
        %1051 = vmatpush.msra.mxu0 %v1050
        %v1052 = vand.u32 %v463, 4294901760
        %1053 = vmatpush.msra.mxu0 %v1052
        %v1054 = vand.u32 %v462, 4294901760
        %1055 = vmatpush.msra.mxu0 %v1054
        %v1056 = vand.u32 %v461, 4294901760
        %1057 = vmatpush.msra.mxu0 %v1056
        %v1058 = vand.u32 %v460, 4294901760
        %1059 = vmatpush.msra.mxu0 %v1058
        %v1060 = vand.u32 %v459, 4294901760
        %1061 = vmatpush.msra.mxu0 %v1060
        %v1062 = vand.u32 %v458, 4294901760
        %1063 = vmatpush.msra.mxu0 %v1062
        %v1064 = vand.u32 %v457, 4294901760
        %1065 = vmatpush.msra.mxu0 %v1064
        %v1066 = vand.u32 %v456, 4294901760
        %1067 = vmatpush.msra.mxu0 %v1066
        %v1068 = vand.u32 %v775, 4294901760
        %v1069 = vsub.f32 %v775, %v1068
        %v1070 = vand.u32 %v1069, 4294901760
        %1071 = vmatmul.f32.gmra.mxu0 %v1070
        %v1072 = vpop.f32.mrf.mxu0
        %v1073 = vadd.f32 %v1019, %v1072
        %v1074 = vand.u32 %v779, 4294901760
        %v1075 = vsub.f32 %v779, %v1074
        %v1076 = vand.u32 %v1075, 4294901760
        %1077 = vmatmul.f32.gmra.mxu0 %v1076
        %v1078 = vpop.f32.mrf.mxu0
        %v1079 = vadd.f32 %v1024, %v1078
        %v1080 = vand.u32 %v783, 4294901760
        %v1081 = vsub.f32 %v783, %v1080
        %v1082 = vand.u32 %v1081, 4294901760
        %1083 = vmatmul.f32.gmra.mxu0 %v1082
        %v1084 = vpop.f32.mrf.mxu0
        %v1085 = vadd.f32 %v1029, %v1084
        %v1086 = vand.u32 %v787, 4294901760
        %v1087 = vsub.f32 %v787, %v1086
        %v1088 = vand.u32 %v1087, 4294901760
        %1089 = vmatmul.f32.gmra.mxu0 %v1088
        %v1090 = vpop.f32.mrf.mxu0
        %v1091 = vadd.f32 %v1034, %v1090
        %1092 = vdwg.mxu0
        %v1093 = vand.u32 %v471, 4294901760
        %v1094 = vsub.f32 %v471, %v1093
        %v1095 = vand.u32 %v1094, 4294901760
        %1096 = vmatpush.msra.mxu0 %v1095
        %v1097 = vand.u32 %v470, 4294901760
        %v1098 = vsub.f32 %v470, %v1097
        %v1099 = vand.u32 %v1098, 4294901760
        %1100 = vmatpush.msra.mxu0 %v1099
        %v1101 = vand.u32 %v469, 4294901760
        %v1102 = vsub.f32 %v469, %v1101
        %v1103 = vand.u32 %v1102, 4294901760
        %1104 = vmatpush.msra.mxu0 %v1103
        %v1105 = vand.u32 %v468, 4294901760
        %v1106 = vsub.f32 %v468, %v1105
        %v1107 = vand.u32 %v1106, 4294901760
        %1108 = vmatpush.msra.mxu0 %v1107
        %v1109 = vand.u32 %v467, 4294901760
        %v1110 = vsub.f32 %v467, %v1109
        %v1111 = vand.u32 %v1110, 4294901760
        %1112 = vmatpush.msra.mxu0 %v1111
        %v1113 = vand.u32 %v466, 4294901760
        %v1114 = vsub.f32 %v466, %v1113
        %v1115 = vand.u32 %v1114, 4294901760
        %1116 = vmatpush.msra.mxu0 %v1115
        %v1117 = vand.u32 %v465, 4294901760
        %v1118 = vsub.f32 %v465, %v1117
        %v1119 = vand.u32 %v1118, 4294901760
        %1120 = vmatpush.msra.mxu0 %v1119
        %v1121 = vand.u32 %v464, 4294901760
        %v1122 = vsub.f32 %v464, %v1121
        %v1123 = vand.u32 %v1122, 4294901760
        %1124 = vmatpush.msra.mxu0 %v1123
        %v1125 = vand.u32 %v463, 4294901760
        %v1126 = vsub.f32 %v463, %v1125
        %v1127 = vand.u32 %v1126, 4294901760
        %1128 = vmatpush.msra.mxu0 %v1127
        %v1129 = vand.u32 %v462, 4294901760
        %v1130 = vsub.f32 %v462, %v1129
        %v1131 = vand.u32 %v1130, 4294901760
        %1132 = vmatpush.msra.mxu0 %v1131
        %v1133 = vand.u32 %v461, 4294901760
        %v1134 = vsub.f32 %v461, %v1133
        %v1135 = vand.u32 %v1134, 4294901760
        %1136 = vmatpush.msra.mxu0 %v1135
        %v1137 = vand.u32 %v460, 4294901760
        %v1138 = vsub.f32 %v460, %v1137
        %v1139 = vand.u32 %v1138, 4294901760
        %1140 = vmatpush.msra.mxu0 %v1139
        %v1141 = vand.u32 %v459, 4294901760
        %v1142 = vsub.f32 %v459, %v1141
        %v1143 = vand.u32 %v1142, 4294901760
        %1144 = vmatpush.msra.mxu0 %v1143
        %v1145 = vand.u32 %v458, 4294901760
        %v1146 = vsub.f32 %v458, %v1145
        %v1147 = vand.u32 %v1146, 4294901760
        %1148 = vmatpush.msra.mxu0 %v1147
        %v1149 = vand.u32 %v457, 4294901760
        %v1150 = vsub.f32 %v457, %v1149
        %v1151 = vand.u32 %v1150, 4294901760
        %1152 = vmatpush.msra.mxu0 %v1151
        %v1153 = vand.u32 %v456, 4294901760
        %v1154 = vsub.f32 %v456, %v1153
        %v1155 = vand.u32 %v1154, 4294901760
        %1156 = vmatpush.msra.mxu0 %v1155
        %v1157 = vand.u32 %v775, 4294901760
        %1158 = vmatmul.f32.gmra.mxu0 %v1157
        %v1159 = vpop.f32.mrf.mxu0
        %v1160 = vadd.f32 %v1073, %v1159
        %v1161 = vand.u32 %v779, 4294901760
        %1162 = vmatmul.f32.gmra.mxu0 %v1161
        %v1163 = vpop.f32.mrf.mxu0
        %v1164 = vadd.f32 %v1079, %v1163
        %v1165 = vand.u32 %v783, 4294901760
        %1166 = vmatmul.f32.gmra.mxu0 %v1165
        %v1167 = vpop.f32.mrf.mxu0
        %v1168 = vadd.f32 %v1085, %v1167
        %v1169 = vand.u32 %v787, 4294901760
        %1170 = vmatmul.f32.gmra.mxu0 %v1169
        %v1171 = vpop.f32.mrf.mxu0
        %v1172 = vadd.f32 %v1091, %v1171
        %1173 = vdwg.mxu0
        %v1174 = vand.u32 %v471, 4294901760
        %1175 = vmatpush.msra.mxu0 %v1174
        %v1176 = vand.u32 %v470, 4294901760
        %1177 = vmatpush.msra.mxu0 %v1176
        %v1178 = vand.u32 %v469, 4294901760
        %1179 = vmatpush.msra.mxu0 %v1178
        %v1180 = vand.u32 %v468, 4294901760
        %1181 = vmatpush.msra.mxu0 %v1180
        %v1182 = vand.u32 %v467, 4294901760
        %1183 = vmatpush.msra.mxu0 %v1182
        %v1184 = vand.u32 %v466, 4294901760
        %1185 = vmatpush.msra.mxu0 %v1184
        %v1186 = vand.u32 %v465, 4294901760
        %1187 = vmatpush.msra.mxu0 %v1186
        %v1188 = vand.u32 %v464, 4294901760
        %1189 = vmatpush.msra.mxu0 %v1188
        %v1190 = vand.u32 %v463, 4294901760
        %1191 = vmatpush.msra.mxu0 %v1190
        %v1192 = vand.u32 %v462, 4294901760
        %1193 = vmatpush.msra.mxu0 %v1192
        %v1194 = vand.u32 %v461, 4294901760
        %1195 = vmatpush.msra.mxu0 %v1194
        %v1196 = vand.u32 %v460, 4294901760
        %1197 = vmatpush.msra.mxu0 %v1196
        %v1198 = vand.u32 %v459, 4294901760
        %1199 = vmatpush.msra.mxu0 %v1198
        %v1200 = vand.u32 %v458, 4294901760
        %1201 = vmatpush.msra.mxu0 %v1200
        %v1202 = vand.u32 %v457, 4294901760
        %1203 = vmatpush.msra.mxu0 %v1202
        %v1204 = vand.u32 %v456, 4294901760
        %1205 = vmatpush.msra.mxu0 %v1204
        %v1206 = vand.u32 %v775, 4294901760
        %1207 = vmatmul.f32.gmra.mxu0 %v1206
        %v1208 = vpop.f32.mrf.mxu0
        %v1209 = vadd.f32 %v1160, %v1208
        %v1210 = vand.u32 %v779, 4294901760
        %1211 = vmatmul.f32.gmra.mxu0 %v1210
        %v1212 = vpop.f32.mrf.mxu0
        %v1213 = vadd.f32 %v1164, %v1212
        %v1214 = vand.u32 %v783, 4294901760
        %1215 = vmatmul.f32.gmra.mxu0 %v1214
        %v1216 = vpop.f32.mrf.mxu0
        %v1217 = vadd.f32 %v1168, %v1216
        %v1218 = vand.u32 %v787, 4294901760
        %1219 = vmatmul.f32.gmra.mxu0 %v1218
        %v1220 = vpop.f32.mrf.mxu0
        %v1221 = vadd.f32 %v1172, %v1220
        %1222 = vdwg.mxu0
        %1223 = vmatpush.msra.mxu0 0.0
        %1224 = vmatpush.msra.mxu0 0.0
        %1225 = vmatpush.msra.mxu0 0.0
        %1226 = vmatpush.msra.mxu0 0.0
        %1227 = vmatpush.msra.mxu0 0.0
        %1228 = vmatpush.msra.mxu0 0.0
        %1229 = vmatpush.msra.mxu0 0.0
        %1230 = vmatpush.msra.mxu0 0.0
        %1231 = vmatpush.msra.mxu0 0.0
        %1232 = vmatpush.msra.mxu0 0.0
        %v1233 = vand.u32 %v403, 4294901760
        %1234 = vmatpush.msra.mxu0 %v1233
        %v1235 = vand.u32 %v402, 4294901760
        %1236 = vmatpush.msra.mxu0 %v1235
        %v1237 = vand.u32 %v401, 4294901760
        %1238 = vmatpush.msra.mxu0 %v1237
        %v1239 = vand.u32 %v400, 4294901760
        %1240 = vmatpush.msra.mxu0 %v1239
        %v1241 = vand.u32 %v399, 4294901760
        %1242 = vmatpush.msra.mxu0 %v1241
        %v1243 = vand.u32 %v398, 4294901760
        %1244 = vmatpush.msra.mxu0 %v1243
        %v1245 = vand.u32 %v474, 4294901760
        %v1246 = vsub.f32 %v474, %v1245
        %v1247 = vand.u32 %v1246, 4294901760
        %v1248 = vsub.f32 %v1246, %v1247
        %v1249 = vand.u32 %v1248, 4294901760
        %1250 = vmatmul.f32.gmra.mxu0 %v1249
        %v1251 = vpop.f32.mrf.mxu0
        %v1252 = vadd.f32 0.0, %v1251
        %v1253 = vand.u32 %v477, 4294901760
        %v1254 = vsub.f32 %v477, %v1253
        %v1255 = vand.u32 %v1254, 4294901760
        %v1256 = vsub.f32 %v1254, %v1255
        %v1257 = vand.u32 %v1256, 4294901760
        %1258 = vmatmul.f32.gmra.mxu0 %v1257
        %v1259 = vpop.f32.mrf.mxu0
        %v1260 = vadd.f32 0.0, %v1259
        %v1261 = vand.u32 %v480, 4294901760
        %v1262 = vsub.f32 %v480, %v1261
        %v1263 = vand.u32 %v1262, 4294901760
        %v1264 = vsub.f32 %v1262, %v1263
        %v1265 = vand.u32 %v1264, 4294901760
        %1266 = vmatmul.f32.gmra.mxu0 %v1265
        %v1267 = vpop.f32.mrf.mxu0
        %v1268 = vadd.f32 0.0, %v1267
        %v1269 = vand.u32 %v483, 4294901760
        %v1270 = vsub.f32 %v483, %v1269
        %v1271 = vand.u32 %v1270, 4294901760
        %v1272 = vsub.f32 %v1270, %v1271
        %v1273 = vand.u32 %v1272, 4294901760
        %1274 = vmatmul.f32.gmra.mxu0 %v1273
        %v1275 = vpop.f32.mrf.mxu0
        %v1276 = vadd.f32 0.0, %v1275
        %1277 = vdwg.mxu0
        %1278 = vmatpush.msra.mxu0 0.0
        %1279 = vmatpush.msra.mxu0 0.0
        %1280 = vmatpush.msra.mxu0 0.0
        %1281 = vmatpush.msra.mxu0 0.0
        %1282 = vmatpush.msra.mxu0 0.0
        %1283 = vmatpush.msra.mxu0 0.0
        %1284 = vmatpush.msra.mxu0 0.0
        %1285 = vmatpush.msra.mxu0 0.0
        %1286 = vmatpush.msra.mxu0 0.0
        %1287 = vmatpush.msra.mxu0 0.0
        %v1288 = vand.u32 %v403, 4294901760
        %v1289 = vsub.f32 %v403, %v1288
        %v1290 = vand.u32 %v1289, 4294901760
        %v1291 = vsub.f32 %v1289, %v1290
        %v1292 = vand.u32 %v1291, 4294901760
        %1293 = vmatpush.msra.mxu0 %v1292
        %v1294 = vand.u32 %v402, 4294901760
        %v1295 = vsub.f32 %v402, %v1294
        %v1296 = vand.u32 %v1295, 4294901760
        %v1297 = vsub.f32 %v1295, %v1296
        %v1298 = vand.u32 %v1297, 4294901760
        %1299 = vmatpush.msra.mxu0 %v1298
        %v1300 = vand.u32 %v401, 4294901760
        %v1301 = vsub.f32 %v401, %v1300
        %v1302 = vand.u32 %v1301, 4294901760
        %v1303 = vsub.f32 %v1301, %v1302
        %v1304 = vand.u32 %v1303, 4294901760
        %1305 = vmatpush.msra.mxu0 %v1304
        %v1306 = vand.u32 %v400, 4294901760
        %v1307 = vsub.f32 %v400, %v1306
        %v1308 = vand.u32 %v1307, 4294901760
        %v1309 = vsub.f32 %v1307, %v1308
        %v1310 = vand.u32 %v1309, 4294901760
        %1311 = vmatpush.msra.mxu0 %v1310
        %v1312 = vand.u32 %v399, 4294901760
        %v1313 = vsub.f32 %v399, %v1312
        %v1314 = vand.u32 %v1313, 4294901760
        %v1315 = vsub.f32 %v1313, %v1314
        %v1316 = vand.u32 %v1315, 4294901760
        %1317 = vmatpush.msra.mxu0 %v1316
        %v1318 = vand.u32 %v398, 4294901760
        %v1319 = vsub.f32 %v398, %v1318
        %v1320 = vand.u32 %v1319, 4294901760
        %v1321 = vsub.f32 %v1319, %v1320
        %v1322 = vand.u32 %v1321, 4294901760
        %1323 = vmatpush.msra.mxu0 %v1322
        %v1324 = vand.u32 %v474, 4294901760
        %1325 = vmatmul.f32.gmra.mxu0 %v1324
        %v1326 = vpop.f32.mrf.mxu0
        %v1327 = vadd.f32 %v1252, %v1326
        %v1328 = vand.u32 %v477, 4294901760
        %1329 = vmatmul.f32.gmra.mxu0 %v1328
        %v1330 = vpop.f32.mrf.mxu0
        %v1331 = vadd.f32 %v1260, %v1330
        %v1332 = vand.u32 %v480, 4294901760
        %1333 = vmatmul.f32.gmra.mxu0 %v1332
        %v1334 = vpop.f32.mrf.mxu0
        %v1335 = vadd.f32 %v1268, %v1334
        %v1336 = vand.u32 %v483, 4294901760
        %1337 = vmatmul.f32.gmra.mxu0 %v1336
        %v1338 = vpop.f32.mrf.mxu0
        %v1339 = vadd.f32 %v1276, %v1338
        %1340 = vdwg.mxu0
        %1341 = vmatpush.msra.mxu0 0.0
        %1342 = vmatpush.msra.mxu0 0.0
        %1343 = vmatpush.msra.mxu0 0.0
        %1344 = vmatpush.msra.mxu0 0.0
        %1345 = vmatpush.msra.mxu0 0.0
        %1346 = vmatpush.msra.mxu0 0.0
        %1347 = vmatpush.msra.mxu0 0.0
        %1348 = vmatpush.msra.mxu0 0.0
        %1349 = vmatpush.msra.mxu0 0.0
        %1350 = vmatpush.msra.mxu0 0.0
        %v1351 = vand.u32 %v403, 4294901760
        %v1352 = vsub.f32 %v403, %v1351
        %1353 = vmatpush.msra.mxu0 %v1352
        %v1354 = vand.u32 %v402, 4294901760
        %v1355 = vsub.f32 %v402, %v1354
        %1356 = vmatpush.msra.mxu0 %v1355
        %v1357 = vand.u32 %v401, 4294901760
        %v1358 = vsub.f32 %v401, %v1357
        %1359 = vmatpush.msra.mxu0 %v1358
        %v1360 = vand.u32 %v400, 4294901760
        %v1361 = vsub.f32 %v400, %v1360
        %1362 = vmatpush.msra.mxu0 %v1361
        %v1363 = vand.u32 %v399, 4294901760
        %v1364 = vsub.f32 %v399, %v1363
        %1365 = vmatpush.msra.mxu0 %v1364
        %v1366 = vand.u32 %v398, 4294901760
        %v1367 = vsub.f32 %v398, %v1366
        %1368 = vmatpush.msra.mxu0 %v1367
        %v1369 = vand.u32 %v474, 4294901760
        %v1370 = vsub.f32 %v474, %v1369
        %1371 = vmatmul.f32.gmra.mxu0 %v1370
        %v1372 = vpop.f32.mrf.mxu0
        %v1373 = vadd.f32 %v1327, %v1372
        %v1374 = vand.u32 %v477, 4294901760
        %v1375 = vsub.f32 %v477, %v1374
        %1376 = vmatmul.f32.gmra.mxu0 %v1375
        %v1377 = vpop.f32.mrf.mxu0
        %v1378 = vadd.f32 %v1331, %v1377
        %v1379 = vand.u32 %v480, 4294901760
        %v1380 = vsub.f32 %v480, %v1379
        %1381 = vmatmul.f32.gmra.mxu0 %v1380
        %v1382 = vpop.f32.mrf.mxu0
        %v1383 = vadd.f32 %v1335, %v1382
        %v1384 = vand.u32 %v483, 4294901760
        %v1385 = vsub.f32 %v483, %v1384
        %1386 = vmatmul.f32.gmra.mxu0 %v1385
        %v1387 = vpop.f32.mrf.mxu0
        %v1388 = vadd.f32 %v1339, %v1387
        %1389 = vdwg.mxu0
        %1390 = vmatpush.msra.mxu0 0.0
        %1391 = vmatpush.msra.mxu0 0.0
        %1392 = vmatpush.msra.mxu0 0.0
        %1393 = vmatpush.msra.mxu0 0.0
        %1394 = vmatpush.msra.mxu0 0.0
        %1395 = vmatpush.msra.mxu0 0.0
        %1396 = vmatpush.msra.mxu0 0.0
        %1397 = vmatpush.msra.mxu0 0.0
        %1398 = vmatpush.msra.mxu0 0.0
        %1399 = vmatpush.msra.mxu0 0.0
        %v1400 = vand.u32 %v403, 4294901760
        %1401 = vmatpush.msra.mxu0 %v1400
        %v1402 = vand.u32 %v402, 4294901760
        %1403 = vmatpush.msra.mxu0 %v1402
        %v1404 = vand.u32 %v401, 4294901760
        %1405 = vmatpush.msra.mxu0 %v1404
        %v1406 = vand.u32 %v400, 4294901760
        %1407 = vmatpush.msra.mxu0 %v1406
        %v1408 = vand.u32 %v399, 4294901760
        %1409 = vmatpush.msra.mxu0 %v1408
        %v1410 = vand.u32 %v398, 4294901760
        %1411 = vmatpush.msra.mxu0 %v1410
        %v1412 = vand.u32 %v474, 4294901760
        %v1413 = vsub.f32 %v474, %v1412
        %v1414 = vand.u32 %v1413, 4294901760
        %1415 = vmatmul.f32.gmra.mxu0 %v1414
        %v1416 = vpop.f32.mrf.mxu0
        %v1417 = vadd.f32 %v1373, %v1416
        %v1418 = vand.u32 %v477, 4294901760
        %v1419 = vsub.f32 %v477, %v1418
        %v1420 = vand.u32 %v1419, 4294901760
        %1421 = vmatmul.f32.gmra.mxu0 %v1420
        %v1422 = vpop.f32.mrf.mxu0
        %v1423 = vadd.f32 %v1378, %v1422
        %v1424 = vand.u32 %v480, 4294901760
        %v1425 = vsub.f32 %v480, %v1424
        %v1426 = vand.u32 %v1425, 4294901760
        %1427 = vmatmul.f32.gmra.mxu0 %v1426
        %v1428 = vpop.f32.mrf.mxu0
        %v1429 = vadd.f32 %v1383, %v1428
        %v1430 = vand.u32 %v483, 4294901760
        %v1431 = vsub.f32 %v483, %v1430
        %v1432 = vand.u32 %v1431, 4294901760
        %1433 = vmatmul.f32.gmra.mxu0 %v1432
        %v1434 = vpop.f32.mrf.mxu0
        %v1435 = vadd.f32 %v1388, %v1434
        %1436 = vdwg.mxu0
        %1437 = vmatpush.msra.mxu0 0.0
        %1438 = vmatpush.msra.mxu0 0.0
        %1439 = vmatpush.msra.mxu0 0.0
        %1440 = vmatpush.msra.mxu0 0.0
        %1441 = vmatpush.msra.mxu0 0.0
        %1442 = vmatpush.msra.mxu0 0.0
        %1443 = vmatpush.msra.mxu0 0.0
        %1444 = vmatpush.msra.mxu0 0.0
        %1445 = vmatpush.msra.mxu0 0.0
        %1446 = vmatpush.msra.mxu0 0.0
        %v1447 = vand.u32 %v403, 4294901760
        %v1448 = vsub.f32 %v403, %v1447
        %v1449 = vand.u32 %v1448, 4294901760
        %1450 = vmatpush.msra.mxu0 %v1449
        %v1451 = vand.u32 %v402, 4294901760
        %v1452 = vsub.f32 %v402, %v1451
        %v1453 = vand.u32 %v1452, 4294901760
        %1454 = vmatpush.msra.mxu0 %v1453
        %v1455 = vand.u32 %v401, 4294901760
        %v1456 = vsub.f32 %v401, %v1455
        %v1457 = vand.u32 %v1456, 4294901760
        %1458 = vmatpush.msra.mxu0 %v1457
        %v1459 = vand.u32 %v400, 4294901760
        %v1460 = vsub.f32 %v400, %v1459
        %v1461 = vand.u32 %v1460, 4294901760
        %1462 = vmatpush.msra.mxu0 %v1461
        %v1463 = vand.u32 %v399, 4294901760
        %v1464 = vsub.f32 %v399, %v1463
        %v1465 = vand.u32 %v1464, 4294901760
        %1466 = vmatpush.msra.mxu0 %v1465
        %v1467 = vand.u32 %v398, 4294901760
        %v1468 = vsub.f32 %v398, %v1467
        %v1469 = vand.u32 %v1468, 4294901760
        %1470 = vmatpush.msra.mxu0 %v1469
        %v1471 = vand.u32 %v474, 4294901760
        %1472 = vmatmul.f32.gmra.mxu0 %v1471
        %v1473 = vpop.f32.mrf.mxu0
        %v1474 = vadd.f32 %v1417, %v1473
        %v1475 = vand.u32 %v477, 4294901760
        %1476 = vmatmul.f32.gmra.mxu0 %v1475
        %v1477 = vpop.f32.mrf.mxu0
        %v1478 = vadd.f32 %v1423, %v1477
        %v1479 = vand.u32 %v480, 4294901760
        %1480 = vmatmul.f32.gmra.mxu0 %v1479
        %v1481 = vpop.f32.mrf.mxu0
        %v1482 = vadd.f32 %v1429, %v1481
        %v1483 = vand.u32 %v483, 4294901760
        %1484 = vmatmul.f32.gmra.mxu0 %v1483
        %v1485 = vpop.f32.mrf.mxu0
        %v1486 = vadd.f32 %v1435, %v1485
        %1487 = vdwg.mxu0
        %1488 = vmatpush.msra.mxu0 0.0
        %1489 = vmatpush.msra.mxu0 0.0
        %1490 = vmatpush.msra.mxu0 0.0
        %1491 = vmatpush.msra.mxu0 0.0
        %1492 = vmatpush.msra.mxu0 0.0
        %1493 = vmatpush.msra.mxu0 0.0
        %1494 = vmatpush.msra.mxu0 0.0
        %1495 = vmatpush.msra.mxu0 0.0
        %1496 = vmatpush.msra.mxu0 0.0
        %1497 = vmatpush.msra.mxu0 0.0
        %v1498 = vand.u32 %v403, 4294901760
        %1499 = vmatpush.msra.mxu0 %v1498
        %v1500 = vand.u32 %v402, 4294901760
        %1501 = vmatpush.msra.mxu0 %v1500
        %v1502 = vand.u32 %v401, 4294901760
        %1503 = vmatpush.msra.mxu0 %v1502
        %v1504 = vand.u32 %v400, 4294901760
        %1505 = vmatpush.msra.mxu0 %v1504
        %v1506 = vand.u32 %v399, 4294901760
        %1507 = vmatpush.msra.mxu0 %v1506
        %v1508 = vand.u32 %v398, 4294901760
        %1509 = vmatpush.msra.mxu0 %v1508
        %v1510 = vand.u32 %v474, 4294901760
        %1511 = vmatmul.f32.gmra.mxu0 %v1510
        %v1512 = vpop.f32.mrf.mxu0
        %v1513 = vadd.f32 %v1474, %v1512
        %v1514 = vand.u32 %v477, 4294901760
        %1515 = vmatmul.f32.gmra.mxu0 %v1514
        %v1516 = vpop.f32.mrf.mxu0
        %v1517 = vadd.f32 %v1478, %v1516
        %v1518 = vand.u32 %v480, 4294901760
        %1519 = vmatmul.f32.gmra.mxu0 %v1518
        %v1520 = vpop.f32.mrf.mxu0
        %v1521 = vadd.f32 %v1482, %v1520
        %v1522 = vand.u32 %v483, 4294901760
        %1523 = vmatmul.f32.gmra.mxu0 %v1522
        %v1524 = vpop.f32.mrf.mxu0
        %v1525 = vadd.f32 %v1486, %v1524
        %1526 = vdwg.mxu0
        %v1527 = vand.u32 %v471, 4294901760
        %1528 = vmatpush.msra.mxu0 %v1527
        %v1529 = vand.u32 %v470, 4294901760
        %1530 = vmatpush.msra.mxu0 %v1529
        %v1531 = vand.u32 %v469, 4294901760
        %1532 = vmatpush.msra.mxu0 %v1531
        %v1533 = vand.u32 %v468, 4294901760
        %1534 = vmatpush.msra.mxu0 %v1533
        %v1535 = vand.u32 %v467, 4294901760
        %1536 = vmatpush.msra.mxu0 %v1535
        %v1537 = vand.u32 %v466, 4294901760
        %1538 = vmatpush.msra.mxu0 %v1537
        %v1539 = vand.u32 %v465, 4294901760
        %1540 = vmatpush.msra.mxu0 %v1539
        %v1541 = vand.u32 %v464, 4294901760
        %1542 = vmatpush.msra.mxu0 %v1541
        %v1543 = vand.u32 %v463, 4294901760
        %1544 = vmatpush.msra.mxu0 %v1543
        %v1545 = vand.u32 %v462, 4294901760
        %1546 = vmatpush.msra.mxu0 %v1545
        %v1547 = vand.u32 %v461, 4294901760
        %1548 = vmatpush.msra.mxu0 %v1547
        %v1549 = vand.u32 %v460, 4294901760
        %1550 = vmatpush.msra.mxu0 %v1549
        %v1551 = vand.u32 %v459, 4294901760
        %1552 = vmatpush.msra.mxu0 %v1551
        %v1553 = vand.u32 %v458, 4294901760
        %1554 = vmatpush.msra.mxu0 %v1553
        %v1555 = vand.u32 %v457, 4294901760
        %1556 = vmatpush.msra.mxu0 %v1555
        %v1557 = vand.u32 %v456, 4294901760
        %1558 = vmatpush.msra.mxu0 %v1557
        %v1559 = vand.u32 %v1513, 4294901760
        %v1560 = vsub.f32 %v1513, %v1559
        %v1561 = vand.u32 %v1560, 4294901760
        %v1562 = vsub.f32 %v1560, %v1561
        %v1563 = vand.u32 %v1562, 4294901760
        %1564 = vmatmul.f32.gmra.mxu0 %v1563
        %v1565 = vpop.f32.mrf.mxu0
        %v1566 = vadd.f32 0.0, %v1565
        %v1567 = vand.u32 %v1517, 4294901760
        %v1568 = vsub.f32 %v1517, %v1567
        %v1569 = vand.u32 %v1568, 4294901760
        %v1570 = vsub.f32 %v1568, %v1569
        %v1571 = vand.u32 %v1570, 4294901760
        %1572 = vmatmul.f32.gmra.mxu0 %v1571
        %v1573 = vpop.f32.mrf.mxu0
        %v1574 = vadd.f32 0.0, %v1573
        %v1575 = vand.u32 %v1521, 4294901760
        %v1576 = vsub.f32 %v1521, %v1575
        %v1577 = vand.u32 %v1576, 4294901760
        %v1578 = vsub.f32 %v1576, %v1577
        %v1579 = vand.u32 %v1578, 4294901760
        %1580 = vmatmul.f32.gmra.mxu0 %v1579
        %v1581 = vpop.f32.mrf.mxu0
        %v1582 = vadd.f32 0.0, %v1581
        %v1583 = vand.u32 %v1525, 4294901760
        %v1584 = vsub.f32 %v1525, %v1583
        %v1585 = vand.u32 %v1584, 4294901760
        %v1586 = vsub.f32 %v1584, %v1585
        %v1587 = vand.u32 %v1586, 4294901760
        %1588 = vmatmul.f32.gmra.mxu0 %v1587
        %v1589 = vpop.f32.mrf.mxu0
        %v1590 = vadd.f32 0.0, %v1589
        %1591 = vdwg.mxu0
        %v1592 = vand.u32 %v471, 4294901760
        %v1593 = vsub.f32 %v471, %v1592
        %v1594 = vand.u32 %v1593, 4294901760
        %v1595 = vsub.f32 %v1593, %v1594
        %v1596 = vand.u32 %v1595, 4294901760
        %1597 = vmatpush.msra.mxu0 %v1596
        %v1598 = vand.u32 %v470, 4294901760
        %v1599 = vsub.f32 %v470, %v1598
        %v1600 = vand.u32 %v1599, 4294901760
        %v1601 = vsub.f32 %v1599, %v1600
        %v1602 = vand.u32 %v1601, 4294901760
        %1603 = vmatpush.msra.mxu0 %v1602
        %v1604 = vand.u32 %v469, 4294901760
        %v1605 = vsub.f32 %v469, %v1604
        %v1606 = vand.u32 %v1605, 4294901760
        %v1607 = vsub.f32 %v1605, %v1606
        %v1608 = vand.u32 %v1607, 4294901760
        %1609 = vmatpush.msra.mxu0 %v1608
        %v1610 = vand.u32 %v468, 4294901760
        %v1611 = vsub.f32 %v468, %v1610
        %v1612 = vand.u32 %v1611, 4294901760
        %v1613 = vsub.f32 %v1611, %v1612
        %v1614 = vand.u32 %v1613, 4294901760
        %1615 = vmatpush.msra.mxu0 %v1614
        %v1616 = vand.u32 %v467, 4294901760
        %v1617 = vsub.f32 %v467, %v1616
        %v1618 = vand.u32 %v1617, 4294901760
        %v1619 = vsub.f32 %v1617, %v1618
        %v1620 = vand.u32 %v1619, 4294901760
        %1621 = vmatpush.msra.mxu0 %v1620
        %v1622 = vand.u32 %v466, 4294901760
        %v1623 = vsub.f32 %v466, %v1622
        %v1624 = vand.u32 %v1623, 4294901760
        %v1625 = vsub.f32 %v1623, %v1624
        %v1626 = vand.u32 %v1625, 4294901760
        %1627 = vmatpush.msra.mxu0 %v1626
        %v1628 = vand.u32 %v465, 4294901760
        %v1629 = vsub.f32 %v465, %v1628
        %v1630 = vand.u32 %v1629, 4294901760
        %v1631 = vsub.f32 %v1629, %v1630
        %v1632 = vand.u32 %v1631, 4294901760
        %1633 = vmatpush.msra.mxu0 %v1632
        %v1634 = vand.u32 %v464, 4294901760
        %v1635 = vsub.f32 %v464, %v1634
        %v1636 = vand.u32 %v1635, 4294901760
        %v1637 = vsub.f32 %v1635, %v1636
        %v1638 = vand.u32 %v1637, 4294901760
        %1639 = vmatpush.msra.mxu0 %v1638
        %v1640 = vand.u32 %v463, 4294901760
        %v1641 = vsub.f32 %v463, %v1640
        %v1642 = vand.u32 %v1641, 4294901760
        %v1643 = vsub.f32 %v1641, %v1642
        %v1644 = vand.u32 %v1643, 4294901760
        %1645 = vmatpush.msra.mxu0 %v1644
        %v1646 = vand.u32 %v462, 4294901760
        %v1647 = vsub.f32 %v462, %v1646
        %v1648 = vand.u32 %v1647, 4294901760
        %v1649 = vsub.f32 %v1647, %v1648
        %v1650 = vand.u32 %v1649, 4294901760
        %1651 = vmatpush.msra.mxu0 %v1650
        %v1652 = vand.u32 %v461, 4294901760
        %v1653 = vsub.f32 %v461, %v1652
        %v1654 = vand.u32 %v1653, 4294901760
        %v1655 = vsub.f32 %v1653, %v1654
        %v1656 = vand.u32 %v1655, 4294901760
        %1657 = vmatpush.msra.mxu0 %v1656
        %v1658 = vand.u32 %v460, 4294901760
        %v1659 = vsub.f32 %v460, %v1658
        %v1660 = vand.u32 %v1659, 4294901760
        %v1661 = vsub.f32 %v1659, %v1660
        %v1662 = vand.u32 %v1661, 4294901760
        %1663 = vmatpush.msra.mxu0 %v1662
        %v1664 = vand.u32 %v459, 4294901760
        %v1665 = vsub.f32 %v459, %v1664
        %v1666 = vand.u32 %v1665, 4294901760
        %v1667 = vsub.f32 %v1665, %v1666
        %v1668 = vand.u32 %v1667, 4294901760
        %1669 = vmatpush.msra.mxu0 %v1668
        %v1670 = vand.u32 %v458, 4294901760
        %v1671 = vsub.f32 %v458, %v1670
        %v1672 = vand.u32 %v1671, 4294901760
        %v1673 = vsub.f32 %v1671, %v1672
        %v1674 = vand.u32 %v1673, 4294901760
        %1675 = vmatpush.msra.mxu0 %v1674
        %v1676 = vand.u32 %v457, 4294901760
        %v1677 = vsub.f32 %v457, %v1676
        %v1678 = vand.u32 %v1677, 4294901760
        %v1679 = vsub.f32 %v1677, %v1678
        %v1680 = vand.u32 %v1679, 4294901760
        %1681 = vmatpush.msra.mxu0 %v1680
        %v1682 = vand.u32 %v456, 4294901760
        %v1683 = vsub.f32 %v456, %v1682
        %v1684 = vand.u32 %v1683, 4294901760
        %v1685 = vsub.f32 %v1683, %v1684
        %v1686 = vand.u32 %v1685, 4294901760
        %1687 = vmatpush.msra.mxu0 %v1686
        %v1688 = vand.u32 %v1513, 4294901760
        %1689 = vmatmul.f32.gmra.mxu0 %v1688
        %v1690 = vpop.f32.mrf.mxu0
        %v1691 = vadd.f32 %v1566, %v1690
        %v1692 = vand.u32 %v1517, 4294901760
        %1693 = vmatmul.f32.gmra.mxu0 %v1692
        %v1694 = vpop.f32.mrf.mxu0
        %v1695 = vadd.f32 %v1574, %v1694
        %v1696 = vand.u32 %v1521, 4294901760
        %1697 = vmatmul.f32.gmra.mxu0 %v1696
        %v1698 = vpop.f32.mrf.mxu0
        %v1699 = vadd.f32 %v1582, %v1698
        %v1700 = vand.u32 %v1525, 4294901760
        %1701 = vmatmul.f32.gmra.mxu0 %v1700
        %v1702 = vpop.f32.mrf.mxu0
        %v1703 = vadd.f32 %v1590, %v1702
        %1704 = vdwg.mxu0
        %v1705 = vand.u32 %v471, 4294901760
        %v1706 = vsub.f32 %v471, %v1705
        %1707 = vmatpush.msra.mxu0 %v1706
        %v1708 = vand.u32 %v470, 4294901760
        %v1709 = vsub.f32 %v470, %v1708
        %1710 = vmatpush.msra.mxu0 %v1709
        %v1711 = vand.u32 %v469, 4294901760
        %v1712 = vsub.f32 %v469, %v1711
        %1713 = vmatpush.msra.mxu0 %v1712
        %v1714 = vand.u32 %v468, 4294901760
        %v1715 = vsub.f32 %v468, %v1714
        %1716 = vmatpush.msra.mxu0 %v1715
        %v1717 = vand.u32 %v467, 4294901760
        %v1718 = vsub.f32 %v467, %v1717
        %1719 = vmatpush.msra.mxu0 %v1718
        %v1720 = vand.u32 %v466, 4294901760
        %v1721 = vsub.f32 %v466, %v1720
        %1722 = vmatpush.msra.mxu0 %v1721
        %v1723 = vand.u32 %v465, 4294901760
        %v1724 = vsub.f32 %v465, %v1723
        %1725 = vmatpush.msra.mxu0 %v1724
        %v1726 = vand.u32 %v464, 4294901760
        %v1727 = vsub.f32 %v464, %v1726
        %1728 = vmatpush.msra.mxu0 %v1727
        %v1729 = vand.u32 %v463, 4294901760
        %v1730 = vsub.f32 %v463, %v1729
        %1731 = vmatpush.msra.mxu0 %v1730
        %v1732 = vand.u32 %v462, 4294901760
        %v1733 = vsub.f32 %v462, %v1732
        %1734 = vmatpush.msra.mxu0 %v1733
        %v1735 = vand.u32 %v461, 4294901760
        %v1736 = vsub.f32 %v461, %v1735
        %1737 = vmatpush.msra.mxu0 %v1736
        %v1738 = vand.u32 %v460, 4294901760
        %v1739 = vsub.f32 %v460, %v1738
        %1740 = vmatpush.msra.mxu0 %v1739
        %v1741 = vand.u32 %v459, 4294901760
        %v1742 = vsub.f32 %v459, %v1741
        %1743 = vmatpush.msra.mxu0 %v1742
        %v1744 = vand.u32 %v458, 4294901760
        %v1745 = vsub.f32 %v458, %v1744
        %1746 = vmatpush.msra.mxu0 %v1745
        %v1747 = vand.u32 %v457, 4294901760
        %v1748 = vsub.f32 %v457, %v1747
        %1749 = vmatpush.msra.mxu0 %v1748
        %v1750 = vand.u32 %v456, 4294901760
        %v1751 = vsub.f32 %v456, %v1750
        %1752 = vmatpush.msra.mxu0 %v1751
        %v1753 = vand.u32 %v1513, 4294901760
        %v1754 = vsub.f32 %v1513, %v1753
        %1755 = vmatmul.f32.gmra.mxu0 %v1754
        %v1756 = vpop.f32.mrf.mxu0
        %v1757 = vadd.f32 %v1691, %v1756
        %v1758 = vand.u32 %v1517, 4294901760
        %v1759 = vsub.f32 %v1517, %v1758
        %1760 = vmatmul.f32.gmra.mxu0 %v1759
        %v1761 = vpop.f32.mrf.mxu0
        %v1762 = vadd.f32 %v1695, %v1761
        %v1763 = vand.u32 %v1521, 4294901760
        %v1764 = vsub.f32 %v1521, %v1763
        %1765 = vmatmul.f32.gmra.mxu0 %v1764
        %v1766 = vpop.f32.mrf.mxu0
        %v1767 = vadd.f32 %v1699, %v1766
        %v1768 = vand.u32 %v1525, 4294901760
        %v1769 = vsub.f32 %v1525, %v1768
        %1770 = vmatmul.f32.gmra.mxu0 %v1769
        %v1771 = vpop.f32.mrf.mxu0
        %v1772 = vadd.f32 %v1703, %v1771
        %1773 = vdwg.mxu0
        %v1774 = vand.u32 %v471, 4294901760
        %1775 = vmatpush.msra.mxu0 %v1774
        %v1776 = vand.u32 %v470, 4294901760
        %1777 = vmatpush.msra.mxu0 %v1776
        %v1778 = vand.u32 %v469, 4294901760
        %1779 = vmatpush.msra.mxu0 %v1778
        %v1780 = vand.u32 %v468, 4294901760
        %1781 = vmatpush.msra.mxu0 %v1780
        %v1782 = vand.u32 %v467, 4294901760
        %1783 = vmatpush.msra.mxu0 %v1782
        %v1784 = vand.u32 %v466, 4294901760
        %1785 = vmatpush.msra.mxu0 %v1784
        %v1786 = vand.u32 %v465, 4294901760
        %1787 = vmatpush.msra.mxu0 %v1786
        %v1788 = vand.u32 %v464, 4294901760
        %1789 = vmatpush.msra.mxu0 %v1788
        %v1790 = vand.u32 %v463, 4294901760
        %1791 = vmatpush.msra.mxu0 %v1790
        %v1792 = vand.u32 %v462, 4294901760
        %1793 = vmatpush.msra.mxu0 %v1792
        %v1794 = vand.u32 %v461, 4294901760
        %1795 = vmatpush.msra.mxu0 %v1794
        %v1796 = vand.u32 %v460, 4294901760
        %1797 = vmatpush.msra.mxu0 %v1796
        %v1798 = vand.u32 %v459, 4294901760
        %1799 = vmatpush.msra.mxu0 %v1798
        %v1800 = vand.u32 %v458, 4294901760
        %1801 = vmatpush.msra.mxu0 %v1800
        %v1802 = vand.u32 %v457, 4294901760
        %1803 = vmatpush.msra.mxu0 %v1802
        %v1804 = vand.u32 %v456, 4294901760
        %1805 = vmatpush.msra.mxu0 %v1804
        %v1806 = vand.u32 %v1513, 4294901760
        %v1807 = vsub.f32 %v1513, %v1806
        %v1808 = vand.u32 %v1807, 4294901760
        %1809 = vmatmul.f32.gmra.mxu0 %v1808
        %v1810 = vpop.f32.mrf.mxu0
        %v1811 = vadd.f32 %v1757, %v1810
        %v1812 = vand.u32 %v1517, 4294901760
        %v1813 = vsub.f32 %v1517, %v1812
        %v1814 = vand.u32 %v1813, 4294901760
        %1815 = vmatmul.f32.gmra.mxu0 %v1814
        %v1816 = vpop.f32.mrf.mxu0
        %v1817 = vadd.f32 %v1762, %v1816
        %v1818 = vand.u32 %v1521, 4294901760
        %v1819 = vsub.f32 %v1521, %v1818
        %v1820 = vand.u32 %v1819, 4294901760
        %1821 = vmatmul.f32.gmra.mxu0 %v1820
        %v1822 = vpop.f32.mrf.mxu0
        %v1823 = vadd.f32 %v1767, %v1822
        %v1824 = vand.u32 %v1525, 4294901760
        %v1825 = vsub.f32 %v1525, %v1824
        %v1826 = vand.u32 %v1825, 4294901760
        %1827 = vmatmul.f32.gmra.mxu0 %v1826
        %v1828 = vpop.f32.mrf.mxu0
        %v1829 = vadd.f32 %v1772, %v1828
        %1830 = vdwg.mxu0
        %v1831 = vand.u32 %v471, 4294901760
        %v1832 = vsub.f32 %v471, %v1831
        %v1833 = vand.u32 %v1832, 4294901760
        %1834 = vmatpush.msra.mxu0 %v1833
        %v1835 = vand.u32 %v470, 4294901760
        %v1836 = vsub.f32 %v470, %v1835
        %v1837 = vand.u32 %v1836, 4294901760
        %1838 = vmatpush.msra.mxu0 %v1837
        %v1839 = vand.u32 %v469, 4294901760
        %v1840 = vsub.f32 %v469, %v1839
        %v1841 = vand.u32 %v1840, 4294901760
        %1842 = vmatpush.msra.mxu0 %v1841
        %v1843 = vand.u32 %v468, 4294901760
        %v1844 = vsub.f32 %v468, %v1843
        %v1845 = vand.u32 %v1844, 4294901760
        %1846 = vmatpush.msra.mxu0 %v1845
        %v1847 = vand.u32 %v467, 4294901760
        %v1848 = vsub.f32 %v467, %v1847
        %v1849 = vand.u32 %v1848, 4294901760
        %1850 = vmatpush.msra.mxu0 %v1849
        %v1851 = vand.u32 %v466, 4294901760
        %v1852 = vsub.f32 %v466, %v1851
        %v1853 = vand.u32 %v1852, 4294901760
        %1854 = vmatpush.msra.mxu0 %v1853
        %v1855 = vand.u32 %v465, 4294901760
        %v1856 = vsub.f32 %v465, %v1855
        %v1857 = vand.u32 %v1856, 4294901760
        %1858 = vmatpush.msra.mxu0 %v1857
        %v1859 = vand.u32 %v464, 4294901760
        %v1860 = vsub.f32 %v464, %v1859
        %v1861 = vand.u32 %v1860, 4294901760
        %1862 = vmatpush.msra.mxu0 %v1861
        %v1863 = vand.u32 %v463, 4294901760
        %v1864 = vsub.f32 %v463, %v1863
        %v1865 = vand.u32 %v1864, 4294901760
        %1866 = vmatpush.msra.mxu0 %v1865
        %v1867 = vand.u32 %v462, 4294901760
        %v1868 = vsub.f32 %v462, %v1867
        %v1869 = vand.u32 %v1868, 4294901760
        %1870 = vmatpush.msra.mxu0 %v1869
        %v1871 = vand.u32 %v461, 4294901760
        %v1872 = vsub.f32 %v461, %v1871
        %v1873 = vand.u32 %v1872, 4294901760
        %1874 = vmatpush.msra.mxu0 %v1873
        %v1875 = vand.u32 %v460, 4294901760
        %v1876 = vsub.f32 %v460, %v1875
        %v1877 = vand.u32 %v1876, 4294901760
        %1878 = vmatpush.msra.mxu0 %v1877
        %v1879 = vand.u32 %v459, 4294901760
        %v1880 = vsub.f32 %v459, %v1879
        %v1881 = vand.u32 %v1880, 4294901760
        %1882 = vmatpush.msra.mxu0 %v1881
        %v1883 = vand.u32 %v458, 4294901760
        %v1884 = vsub.f32 %v458, %v1883
        %v1885 = vand.u32 %v1884, 4294901760
        %1886 = vmatpush.msra.mxu0 %v1885
        %v1887 = vand.u32 %v457, 4294901760
        %v1888 = vsub.f32 %v457, %v1887
        %v1889 = vand.u32 %v1888, 4294901760
        %1890 = vmatpush.msra.mxu0 %v1889
        %v1891 = vand.u32 %v456, 4294901760
        %v1892 = vsub.f32 %v456, %v1891
        %v1893 = vand.u32 %v1892, 4294901760
        %1894 = vmatpush.msra.mxu0 %v1893
        %v1895 = vand.u32 %v1513, 4294901760
        %1896 = vmatmul.f32.gmra.mxu0 %v1895
        %v1897 = vpop.f32.mrf.mxu0
        %v1898 = vadd.f32 %v1811, %v1897
        %v1899 = vand.u32 %v1517, 4294901760
        %1900 = vmatmul.f32.gmra.mxu0 %v1899
        %v1901 = vpop.f32.mrf.mxu0
        %v1902 = vadd.f32 %v1817, %v1901
        %v1903 = vand.u32 %v1521, 4294901760
        %1904 = vmatmul.f32.gmra.mxu0 %v1903
        %v1905 = vpop.f32.mrf.mxu0
        %v1906 = vadd.f32 %v1823, %v1905
        %v1907 = vand.u32 %v1525, 4294901760
        %1908 = vmatmul.f32.gmra.mxu0 %v1907
        %v1909 = vpop.f32.mrf.mxu0
        %v1910 = vadd.f32 %v1829, %v1909
        %1911 = vdwg.mxu0
        %v1912 = vand.u32 %v471, 4294901760
        %1913 = vmatpush.msra.mxu0 %v1912
        %v1914 = vand.u32 %v470, 4294901760
        %1915 = vmatpush.msra.mxu0 %v1914
        %v1916 = vand.u32 %v469, 4294901760
        %1917 = vmatpush.msra.mxu0 %v1916
        %v1918 = vand.u32 %v468, 4294901760
        %1919 = vmatpush.msra.mxu0 %v1918
        %v1920 = vand.u32 %v467, 4294901760
        %1921 = vmatpush.msra.mxu0 %v1920
        %v1922 = vand.u32 %v466, 4294901760
        %1923 = vmatpush.msra.mxu0 %v1922
        %v1924 = vand.u32 %v465, 4294901760
        %1925 = vmatpush.msra.mxu0 %v1924
        %v1926 = vand.u32 %v464, 4294901760
        %1927 = vmatpush.msra.mxu0 %v1926
        %v1928 = vand.u32 %v463, 4294901760
        %1929 = vmatpush.msra.mxu0 %v1928
        %v1930 = vand.u32 %v462, 4294901760
        %1931 = vmatpush.msra.mxu0 %v1930
        %v1932 = vand.u32 %v461, 4294901760
        %1933 = vmatpush.msra.mxu0 %v1932
        %v1934 = vand.u32 %v460, 4294901760
        %1935 = vmatpush.msra.mxu0 %v1934
        %v1936 = vand.u32 %v459, 4294901760
        %1937 = vmatpush.msra.mxu0 %v1936
        %v1938 = vand.u32 %v458, 4294901760
        %1939 = vmatpush.msra.mxu0 %v1938
        %v1940 = vand.u32 %v457, 4294901760
        %1941 = vmatpush.msra.mxu0 %v1940
        %v1942 = vand.u32 %v456, 4294901760
        %1943 = vmatpush.msra.mxu0 %v1942
        %v1944 = vand.u32 %v1513, 4294901760
        %1945 = vmatmul.f32.gmra.mxu0 %v1944
        %v1946 = vpop.f32.mrf.mxu0
        %v1947 = vadd.f32 %v1898, %v1946
        %v1948 = vand.u32 %v1517, 4294901760
        %1949 = vmatmul.f32.gmra.mxu0 %v1948
        %v1950 = vpop.f32.mrf.mxu0
        %v1951 = vadd.f32 %v1902, %v1950
        %v1952 = vand.u32 %v1521, 4294901760
        %1953 = vmatmul.f32.gmra.mxu0 %v1952
        %v1954 = vpop.f32.mrf.mxu0
        %v1955 = vadd.f32 %v1906, %v1954
        %v1956 = vand.u32 %v1525, 4294901760
        %1957 = vmatmul.f32.gmra.mxu0 %v1956
        %v1958 = vpop.f32.mrf.mxu0
        %v1959 = vadd.f32 %v1910, %v1958
        %1960 = vdwg.mxu0
        %1961 = vmatpush.msra.mxu0 0.0
        %1962 = vmatpush.msra.mxu0 0.0
        %1963 = vmatpush.msra.mxu0 0.0
        %1964 = vmatpush.msra.mxu0 0.0
        %1965 = vmatpush.msra.mxu0 0.0
        %1966 = vmatpush.msra.mxu0 0.0
        %1967 = vmatpush.msra.mxu0 0.0
        %1968 = vmatpush.msra.mxu0 0.0
        %1969 = vmatpush.msra.mxu0 0.0
        %1970 = vmatpush.msra.mxu0 0.0
        %v1971 = vand.u32 %v451, 4294901760
        %1972 = vmatpush.msra.mxu0 %v1971
        %v1973 = vand.u32 %v450, 4294901760
        %1974 = vmatpush.msra.mxu0 %v1973
        %v1975 = vand.u32 %v449, 4294901760
        %1976 = vmatpush.msra.mxu0 %v1975
        %v1977 = vand.u32 %v448, 4294901760
        %1978 = vmatpush.msra.mxu0 %v1977
        %v1979 = vand.u32 %v447, 4294901760
        %1980 = vmatpush.msra.mxu0 %v1979
        %v1981 = vand.u32 %v446, 4294901760
        %1982 = vmatpush.msra.mxu0 %v1981
        %v1983 = vand.u32 %v474, 4294901760
        %v1984 = vsub.f32 %v474, %v1983
        %v1985 = vand.u32 %v1984, 4294901760
        %v1986 = vsub.f32 %v1984, %v1985
        %v1987 = vand.u32 %v1986, 4294901760
        %1988 = vmatmul.f32.gmra.mxu0 %v1987
        %v1989 = vpop.f32.mrf.mxu0
        %v1990 = vadd.f32 0.0, %v1989
        %v1991 = vand.u32 %v477, 4294901760
        %v1992 = vsub.f32 %v477, %v1991
        %v1993 = vand.u32 %v1992, 4294901760
        %v1994 = vsub.f32 %v1992, %v1993
        %v1995 = vand.u32 %v1994, 4294901760
        %1996 = vmatmul.f32.gmra.mxu0 %v1995
        %v1997 = vpop.f32.mrf.mxu0
        %v1998 = vadd.f32 0.0, %v1997
        %v1999 = vand.u32 %v480, 4294901760
        %v2000 = vsub.f32 %v480, %v1999
        %v2001 = vand.u32 %v2000, 4294901760
        %v2002 = vsub.f32 %v2000, %v2001
        %v2003 = vand.u32 %v2002, 4294901760
        %2004 = vmatmul.f32.gmra.mxu0 %v2003
        %v2005 = vpop.f32.mrf.mxu0
        %v2006 = vadd.f32 0.0, %v2005
        %v2007 = vand.u32 %v483, 4294901760
        %v2008 = vsub.f32 %v483, %v2007
        %v2009 = vand.u32 %v2008, 4294901760
        %v2010 = vsub.f32 %v2008, %v2009
        %v2011 = vand.u32 %v2010, 4294901760
        %2012 = vmatmul.f32.gmra.mxu0 %v2011
        %v2013 = vpop.f32.mrf.mxu0
        %v2014 = vadd.f32 0.0, %v2013
        %2015 = vdwg.mxu0
        %2016 = vmatpush.msra.mxu0 0.0
        %2017 = vmatpush.msra.mxu0 0.0
        %2018 = vmatpush.msra.mxu0 0.0
        %2019 = vmatpush.msra.mxu0 0.0
        %2020 = vmatpush.msra.mxu0 0.0
        %2021 = vmatpush.msra.mxu0 0.0
        %2022 = vmatpush.msra.mxu0 0.0
        %2023 = vmatpush.msra.mxu0 0.0
        %2024 = vmatpush.msra.mxu0 0.0
        %2025 = vmatpush.msra.mxu0 0.0
        %v2026 = vand.u32 %v451, 4294901760
        %v2027 = vsub.f32 %v451, %v2026
        %v2028 = vand.u32 %v2027, 4294901760
        %v2029 = vsub.f32 %v2027, %v2028
        %v2030 = vand.u32 %v2029, 4294901760
        %2031 = vmatpush.msra.mxu0 %v2030
        %v2032 = vand.u32 %v450, 4294901760
        %v2033 = vsub.f32 %v450, %v2032
        %v2034 = vand.u32 %v2033, 4294901760
        %v2035 = vsub.f32 %v2033, %v2034
        %v2036 = vand.u32 %v2035, 4294901760
        %2037 = vmatpush.msra.mxu0 %v2036
        %v2038 = vand.u32 %v449, 4294901760
        %v2039 = vsub.f32 %v449, %v2038
        %v2040 = vand.u32 %v2039, 4294901760
        %v2041 = vsub.f32 %v2039, %v2040
        %v2042 = vand.u32 %v2041, 4294901760
        %2043 = vmatpush.msra.mxu0 %v2042
        %v2044 = vand.u32 %v448, 4294901760
        %v2045 = vsub.f32 %v448, %v2044
        %v2046 = vand.u32 %v2045, 4294901760
        %v2047 = vsub.f32 %v2045, %v2046
        %v2048 = vand.u32 %v2047, 4294901760
        %2049 = vmatpush.msra.mxu0 %v2048
        %v2050 = vand.u32 %v447, 4294901760
        %v2051 = vsub.f32 %v447, %v2050
        %v2052 = vand.u32 %v2051, 4294901760
        %v2053 = vsub.f32 %v2051, %v2052
        %v2054 = vand.u32 %v2053, 4294901760
        %2055 = vmatpush.msra.mxu0 %v2054
        %v2056 = vand.u32 %v446, 4294901760
        %v2057 = vsub.f32 %v446, %v2056
        %v2058 = vand.u32 %v2057, 4294901760
        %v2059 = vsub.f32 %v2057, %v2058
        %v2060 = vand.u32 %v2059, 4294901760
        %2061 = vmatpush.msra.mxu0 %v2060
        %v2062 = vand.u32 %v474, 4294901760
        %2063 = vmatmul.f32.gmra.mxu0 %v2062
        %v2064 = vpop.f32.mrf.mxu0
        %v2065 = vadd.f32 %v1990, %v2064
        %v2066 = vand.u32 %v477, 4294901760
        %2067 = vmatmul.f32.gmra.mxu0 %v2066
        %v2068 = vpop.f32.mrf.mxu0
        %v2069 = vadd.f32 %v1998, %v2068
        %v2070 = vand.u32 %v480, 4294901760
        %2071 = vmatmul.f32.gmra.mxu0 %v2070
        %v2072 = vpop.f32.mrf.mxu0
        %v2073 = vadd.f32 %v2006, %v2072
        %v2074 = vand.u32 %v483, 4294901760
        %2075 = vmatmul.f32.gmra.mxu0 %v2074
        %v2076 = vpop.f32.mrf.mxu0
        %v2077 = vadd.f32 %v2014, %v2076
        %2078 = vdwg.mxu0
        %2079 = vmatpush.msra.mxu0 0.0
        %2080 = vmatpush.msra.mxu0 0.0
        %2081 = vmatpush.msra.mxu0 0.0
        %2082 = vmatpush.msra.mxu0 0.0
        %2083 = vmatpush.msra.mxu0 0.0
        %2084 = vmatpush.msra.mxu0 0.0
        %2085 = vmatpush.msra.mxu0 0.0
        %2086 = vmatpush.msra.mxu0 0.0
        %2087 = vmatpush.msra.mxu0 0.0
        %2088 = vmatpush.msra.mxu0 0.0
        %v2089 = vand.u32 %v451, 4294901760
        %v2090 = vsub.f32 %v451, %v2089
        %2091 = vmatpush.msra.mxu0 %v2090
        %v2092 = vand.u32 %v450, 4294901760
        %v2093 = vsub.f32 %v450, %v2092
        %2094 = vmatpush.msra.mxu0 %v2093
        %v2095 = vand.u32 %v449, 4294901760
        %v2096 = vsub.f32 %v449, %v2095
        %2097 = vmatpush.msra.mxu0 %v2096
        %v2098 = vand.u32 %v448, 4294901760
        %v2099 = vsub.f32 %v448, %v2098
        %2100 = vmatpush.msra.mxu0 %v2099
        %v2101 = vand.u32 %v447, 4294901760
        %v2102 = vsub.f32 %v447, %v2101
        %2103 = vmatpush.msra.mxu0 %v2102
        %v2104 = vand.u32 %v446, 4294901760
        %v2105 = vsub.f32 %v446, %v2104
        %2106 = vmatpush.msra.mxu0 %v2105
        %v2107 = vand.u32 %v474, 4294901760
        %v2108 = vsub.f32 %v474, %v2107
        %2109 = vmatmul.f32.gmra.mxu0 %v2108
        %v2110 = vpop.f32.mrf.mxu0
        %v2111 = vadd.f32 %v2065, %v2110
        %v2112 = vand.u32 %v477, 4294901760
        %v2113 = vsub.f32 %v477, %v2112
        %2114 = vmatmul.f32.gmra.mxu0 %v2113
        %v2115 = vpop.f32.mrf.mxu0
        %v2116 = vadd.f32 %v2069, %v2115
        %v2117 = vand.u32 %v480, 4294901760
        %v2118 = vsub.f32 %v480, %v2117
        %2119 = vmatmul.f32.gmra.mxu0 %v2118
        %v2120 = vpop.f32.mrf.mxu0
        %v2121 = vadd.f32 %v2073, %v2120
        %v2122 = vand.u32 %v483, 4294901760
        %v2123 = vsub.f32 %v483, %v2122
        %2124 = vmatmul.f32.gmra.mxu0 %v2123
        %v2125 = vpop.f32.mrf.mxu0
        %v2126 = vadd.f32 %v2077, %v2125
        %2127 = vdwg.mxu0
        %2128 = vmatpush.msra.mxu0 0.0
        %2129 = vmatpush.msra.mxu0 0.0
        %2130 = vmatpush.msra.mxu0 0.0
        %2131 = vmatpush.msra.mxu0 0.0
        %2132 = vmatpush.msra.mxu0 0.0
        %2133 = vmatpush.msra.mxu0 0.0
        %2134 = vmatpush.msra.mxu0 0.0
        %2135 = vmatpush.msra.mxu0 0.0
        %2136 = vmatpush.msra.mxu0 0.0
        %2137 = vmatpush.msra.mxu0 0.0
        %v2138 = vand.u32 %v451, 4294901760
        %2139 = vmatpush.msra.mxu0 %v2138
        %v2140 = vand.u32 %v450, 4294901760
        %2141 = vmatpush.msra.mxu0 %v2140
        %v2142 = vand.u32 %v449, 4294901760
        %2143 = vmatpush.msra.mxu0 %v2142
        %v2144 = vand.u32 %v448, 4294901760
        %2145 = vmatpush.msra.mxu0 %v2144
        %v2146 = vand.u32 %v447, 4294901760
        %2147 = vmatpush.msra.mxu0 %v2146
        %v2148 = vand.u32 %v446, 4294901760
        %2149 = vmatpush.msra.mxu0 %v2148
        %v2150 = vand.u32 %v474, 4294901760
        %v2151 = vsub.f32 %v474, %v2150
        %v2152 = vand.u32 %v2151, 4294901760
        %2153 = vmatmul.f32.gmra.mxu0 %v2152
        %v2154 = vpop.f32.mrf.mxu0
        %v2155 = vadd.f32 %v2111, %v2154
        %v2156 = vand.u32 %v477, 4294901760
        %v2157 = vsub.f32 %v477, %v2156
        %v2158 = vand.u32 %v2157, 4294901760
        %2159 = vmatmul.f32.gmra.mxu0 %v2158
        %v2160 = vpop.f32.mrf.mxu0
        %v2161 = vadd.f32 %v2116, %v2160
        %v2162 = vand.u32 %v480, 4294901760
        %v2163 = vsub.f32 %v480, %v2162
        %v2164 = vand.u32 %v2163, 4294901760
        %2165 = vmatmul.f32.gmra.mxu0 %v2164
        %v2166 = vpop.f32.mrf.mxu0
        %v2167 = vadd.f32 %v2121, %v2166
        %v2168 = vand.u32 %v483, 4294901760
        %v2169 = vsub.f32 %v483, %v2168
        %v2170 = vand.u32 %v2169, 4294901760
        %2171 = vmatmul.f32.gmra.mxu0 %v2170
        %v2172 = vpop.f32.mrf.mxu0
        %v2173 = vadd.f32 %v2126, %v2172
        %2174 = vdwg.mxu0
        %2175 = vmatpush.msra.mxu0 0.0
        %2176 = vmatpush.msra.mxu0 0.0
        %2177 = vmatpush.msra.mxu0 0.0
        %2178 = vmatpush.msra.mxu0 0.0
        %2179 = vmatpush.msra.mxu0 0.0
        %2180 = vmatpush.msra.mxu0 0.0
        %2181 = vmatpush.msra.mxu0 0.0
        %2182 = vmatpush.msra.mxu0 0.0
        %2183 = vmatpush.msra.mxu0 0.0
        %2184 = vmatpush.msra.mxu0 0.0
        %v2185 = vand.u32 %v451, 4294901760
        %v2186 = vsub.f32 %v451, %v2185
        %v2187 = vand.u32 %v2186, 4294901760
        %2188 = vmatpush.msra.mxu0 %v2187
        %v2189 = vand.u32 %v450, 4294901760
        %v2190 = vsub.f32 %v450, %v2189
        %v2191 = vand.u32 %v2190, 4294901760
        %2192 = vmatpush.msra.mxu0 %v2191
        %v2193 = vand.u32 %v449, 4294901760
        %v2194 = vsub.f32 %v449, %v2193
        %v2195 = vand.u32 %v2194, 4294901760
        %2196 = vmatpush.msra.mxu0 %v2195
        %v2197 = vand.u32 %v448, 4294901760
        %v2198 = vsub.f32 %v448, %v2197
        %v2199 = vand.u32 %v2198, 4294901760
        %2200 = vmatpush.msra.mxu0 %v2199
        %v2201 = vand.u32 %v447, 4294901760
        %v2202 = vsub.f32 %v447, %v2201
        %v2203 = vand.u32 %v2202, 4294901760
        %2204 = vmatpush.msra.mxu0 %v2203
        %v2205 = vand.u32 %v446, 4294901760
        %v2206 = vsub.f32 %v446, %v2205
        %v2207 = vand.u32 %v2206, 4294901760
        %2208 = vmatpush.msra.mxu0 %v2207
        %v2209 = vand.u32 %v474, 4294901760
        %2210 = vmatmul.f32.gmra.mxu0 %v2209
        %v2211 = vpop.f32.mrf.mxu0
        %v2212 = vadd.f32 %v2155, %v2211
        %v2213 = vand.u32 %v477, 4294901760
        %2214 = vmatmul.f32.gmra.mxu0 %v2213
        %v2215 = vpop.f32.mrf.mxu0
        %v2216 = vadd.f32 %v2161, %v2215
        %v2217 = vand.u32 %v480, 4294901760
        %2218 = vmatmul.f32.gmra.mxu0 %v2217
        %v2219 = vpop.f32.mrf.mxu0
        %v2220 = vadd.f32 %v2167, %v2219
        %v2221 = vand.u32 %v483, 4294901760
        %2222 = vmatmul.f32.gmra.mxu0 %v2221
        %v2223 = vpop.f32.mrf.mxu0
        %v2224 = vadd.f32 %v2173, %v2223
        %2225 = vdwg.mxu0
        %2226 = vmatpush.msra.mxu0 0.0
        %2227 = vmatpush.msra.mxu0 0.0
        %2228 = vmatpush.msra.mxu0 0.0
        %2229 = vmatpush.msra.mxu0 0.0
        %2230 = vmatpush.msra.mxu0 0.0
        %2231 = vmatpush.msra.mxu0 0.0
        %2232 = vmatpush.msra.mxu0 0.0
        %2233 = vmatpush.msra.mxu0 0.0
        %2234 = vmatpush.msra.mxu0 0.0
        %2235 = vmatpush.msra.mxu0 0.0
        %v2236 = vand.u32 %v451, 4294901760
        %2237 = vmatpush.msra.mxu0 %v2236
        %v2238 = vand.u32 %v450, 4294901760
        %2239 = vmatpush.msra.mxu0 %v2238
        %v2240 = vand.u32 %v449, 4294901760
        %2241 = vmatpush.msra.mxu0 %v2240
        %v2242 = vand.u32 %v448, 4294901760
        %2243 = vmatpush.msra.mxu0 %v2242
        %v2244 = vand.u32 %v447, 4294901760
        %2245 = vmatpush.msra.mxu0 %v2244
        %v2246 = vand.u32 %v446, 4294901760
        %2247 = vmatpush.msra.mxu0 %v2246
        %v2248 = vand.u32 %v474, 4294901760
        %2249 = vmatmul.f32.gmra.mxu0 %v2248
        %v2250 = vpop.f32.mrf.mxu0
        %v2251 = vadd.f32 %v2212, %v2250
        %v2252 = vand.u32 %v477, 4294901760
        %2253 = vmatmul.f32.gmra.mxu0 %v2252
        %v2254 = vpop.f32.mrf.mxu0
        %v2255 = vadd.f32 %v2216, %v2254
        %v2256 = vand.u32 %v480, 4294901760
        %2257 = vmatmul.f32.gmra.mxu0 %v2256
        %v2258 = vpop.f32.mrf.mxu0
        %v2259 = vadd.f32 %v2220, %v2258
        %v2260 = vand.u32 %v483, 4294901760
        %2261 = vmatmul.f32.gmra.mxu0 %v2260
        %v2262 = vpop.f32.mrf.mxu0
        %v2263 = vadd.f32 %v2224, %v2262
        %2264 = vdwg.mxu0
        %v2265 = vmul.f32 %v1209, %v1209
        %v2266 = vmul.f32 %v1213, %v1213
        %v2267 = vmul.f32 %v1217, %v1217
        %v2268 = vmul.f32 %v1221, %v1221
        %v2269 = vmul.f32 %v1947, %v1947
        %v2270 = vmul.f32 %v1951, %v1951
        %v2271 = vmul.f32 %v1955, %v1955
        %v2272 = vmul.f32 %v1959, %v1959
        %v2273 = vadd.f32 %v2265, %v2269
        %v2274 = vadd.f32 %v2266, %v2270
        %v2275 = vadd.f32 %v2267, %v2271
        %v2276 = vadd.f32 %v2268, %v2272
        %v2277 = vadd.f32 %v2273, 1e-12
        %v2278 = vadd.f32 %v2274, 1e-12
        %v2279 = vadd.f32 %v2275, 1e-12
        %v2280 = vadd.f32 %v2276, 1e-12
        %v2281 = vrsqrt.pop %v2277
        %v2282 = vmul.f32 %v2281, %v2277
        %v2283 = vmul.f32 %v2282, %v2281
        %v2284 = vmul.f32 0.5, %v2283
        %v2285 = vsub.f32 1.5, %v2284
        %v2286 = vmul.f32 %v2281, %v2285
        %v2287 = vmul.f32 %v2277, %v2286
        %vm2288 = vcmp.eq.f32.partialorder %v2277, inf
        %v2289 = vsel %vm2288, %v2277, %v2287
        %vm2290 = vcmp.eq.f32.partialorder %v2277, 0.0
        %v2291 = vand.u32 %v2277, 2147483648
        %v2292 = vsel %vm2290, %v2291, %v2289
        %v2293 = vrsqrt.pop %v2278
        %v2294 = vmul.f32 %v2293, %v2278
        %v2295 = vmul.f32 %v2294, %v2293
        %v2296 = vmul.f32 0.5, %v2295
        %v2297 = vsub.f32 1.5, %v2296
        %v2298 = vmul.f32 %v2293, %v2297
        %v2299 = vmul.f32 %v2278, %v2298
        %vm2300 = vcmp.eq.f32.partialorder %v2278, inf
        %v2301 = vsel %vm2300, %v2278, %v2299
        %vm2302 = vcmp.eq.f32.partialorder %v2278, 0.0
        %v2303 = vand.u32 %v2278, 2147483648
        %v2304 = vsel %vm2302, %v2303, %v2301
        %v2305 = vrsqrt.pop %v2279
        %v2306 = vmul.f32 %v2305, %v2279
        %v2307 = vmul.f32 %v2306, %v2305
        %v2308 = vmul.f32 0.5, %v2307
        %v2309 = vsub.f32 1.5, %v2308
        %v2310 = vmul.f32 %v2305, %v2309
        %v2311 = vmul.f32 %v2279, %v2310
        %vm2312 = vcmp.eq.f32.partialorder %v2279, inf
        %v2313 = vsel %vm2312, %v2279, %v2311
        %vm2314 = vcmp.eq.f32.partialorder %v2279, 0.0
        %v2315 = vand.u32 %v2279, 2147483648
        %v2316 = vsel %vm2314, %v2315, %v2313
        %v2317 = vrsqrt.pop %v2280
        %v2318 = vmul.f32 %v2317, %v2280
        %v2319 = vmul.f32 %v2318, %v2317
        %v2320 = vmul.f32 0.5, %v2319
        %v2321 = vsub.f32 1.5, %v2320
        %v2322 = vmul.f32 %v2317, %v2321
        %v2323 = vmul.f32 %v2280, %v2322
        %vm2324 = vcmp.eq.f32.partialorder %v2280, inf
        %v2325 = vsel %vm2324, %v2280, %v2323
        %vm2326 = vcmp.eq.f32.partialorder %v2280, 0.0
        %v2327 = vand.u32 %v2280, 2147483648
        %v2328 = vsel %vm2326, %v2327, %v2325
        %v2329 = vmul.f32 %v2292, 2.0
        %v2330 = vmul.f32 %v2304, 2.0
        %v2331 = vmul.f32 %v2316, 2.0
        %v2332 = vmul.f32 %v2328, 2.0
        %v2333 = vadd.f32 %v2329, 1e-12
        %v2334 = vadd.f32 %v2330, 1e-12
        %v2335 = vadd.f32 %v2331, 1e-12
        %v2336 = vadd.f32 %v2332, 1e-12
        %v2337 = vand.u32 %v471, 4294901760
        %2338 = vmatpush.msra.mxu0 %v2337
        %v2339 = vand.u32 %v470, 4294901760
        %2340 = vmatpush.msra.mxu0 %v2339
        %v2341 = vand.u32 %v469, 4294901760
        %2342 = vmatpush.msra.mxu0 %v2341
        %v2343 = vand.u32 %v468, 4294901760
        %2344 = vmatpush.msra.mxu0 %v2343
        %v2345 = vand.u32 %v467, 4294901760
        %2346 = vmatpush.msra.mxu0 %v2345
        %v2347 = vand.u32 %v466, 4294901760
        %2348 = vmatpush.msra.mxu0 %v2347
        %v2349 = vand.u32 %v465, 4294901760
        %2350 = vmatpush.msra.mxu0 %v2349
        %v2351 = vand.u32 %v464, 4294901760
        %2352 = vmatpush.msra.mxu0 %v2351
        %v2353 = vand.u32 %v463, 4294901760
        %2354 = vmatpush.msra.mxu0 %v2353
        %v2355 = vand.u32 %v462, 4294901760
        %2356 = vmatpush.msra.mxu0 %v2355
        %v2357 = vand.u32 %v461, 4294901760
        %2358 = vmatpush.msra.mxu0 %v2357
        %v2359 = vand.u32 %v460, 4294901760
        %2360 = vmatpush.msra.mxu0 %v2359
        %v2361 = vand.u32 %v459, 4294901760
        %2362 = vmatpush.msra.mxu0 %v2361
        %v2363 = vand.u32 %v458, 4294901760
        %2364 = vmatpush.msra.mxu0 %v2363
        %v2365 = vand.u32 %v457, 4294901760
        %2366 = vmatpush.msra.mxu0 %v2365
        %v2367 = vand.u32 %v456, 4294901760
        %2368 = vmatpush.msra.mxu0 %v2367
        %v2369 = vand.u32 %v2251, 4294901760
        %v2370 = vsub.f32 %v2251, %v2369
        %v2371 = vand.u32 %v2370, 4294901760
        %v2372 = vsub.f32 %v2370, %v2371
        %v2373 = vand.u32 %v2372, 4294901760
        %2374 = vmatmul.f32.gmra.mxu0 %v2373
        %v2375 = vpop.f32.mrf.mxu0
        %v2376 = vadd.f32 1e-12, %v2375
        %v2377 = vand.u32 %v2255, 4294901760
        %v2378 = vsub.f32 %v2255, %v2377
        %v2379 = vand.u32 %v2378, 4294901760
        %v2380 = vsub.f32 %v2378, %v2379
        %v2381 = vand.u32 %v2380, 4294901760
        %2382 = vmatmul.f32.gmra.mxu0 %v2381
        %v2383 = vpop.f32.mrf.mxu0
        %v2384 = vadd.f32 1e-12, %v2383
        %v2385 = vand.u32 %v2259, 4294901760
        %v2386 = vsub.f32 %v2259, %v2385
        %v2387 = vand.u32 %v2386, 4294901760
        %v2388 = vsub.f32 %v2386, %v2387
        %v2389 = vand.u32 %v2388, 4294901760
        %2390 = vmatmul.f32.gmra.mxu0 %v2389
        %v2391 = vpop.f32.mrf.mxu0
        %v2392 = vadd.f32 1e-12, %v2391
        %v2393 = vand.u32 %v2263, 4294901760
        %v2394 = vsub.f32 %v2263, %v2393
        %v2395 = vand.u32 %v2394, 4294901760
        %v2396 = vsub.f32 %v2394, %v2395
        %v2397 = vand.u32 %v2396, 4294901760
        %2398 = vmatmul.f32.gmra.mxu0 %v2397
        %v2399 = vpop.f32.mrf.mxu0
        %v2400 = vadd.f32 1e-12, %v2399
        %2401 = vdwg.mxu0
        %v2402 = vand.u32 %v471, 4294901760
        %v2403 = vsub.f32 %v471, %v2402
        %v2404 = vand.u32 %v2403, 4294901760
        %v2405 = vsub.f32 %v2403, %v2404
        %v2406 = vand.u32 %v2405, 4294901760
        %2407 = vmatpush.msra.mxu0 %v2406
        %v2408 = vand.u32 %v470, 4294901760
        %v2409 = vsub.f32 %v470, %v2408
        %v2410 = vand.u32 %v2409, 4294901760
        %v2411 = vsub.f32 %v2409, %v2410
        %v2412 = vand.u32 %v2411, 4294901760
        %2413 = vmatpush.msra.mxu0 %v2412
        %v2414 = vand.u32 %v469, 4294901760
        %v2415 = vsub.f32 %v469, %v2414
        %v2416 = vand.u32 %v2415, 4294901760
        %v2417 = vsub.f32 %v2415, %v2416
        %v2418 = vand.u32 %v2417, 4294901760
        %2419 = vmatpush.msra.mxu0 %v2418
        %v2420 = vand.u32 %v468, 4294901760
        %v2421 = vsub.f32 %v468, %v2420
        %v2422 = vand.u32 %v2421, 4294901760
        %v2423 = vsub.f32 %v2421, %v2422
        %v2424 = vand.u32 %v2423, 4294901760
        %2425 = vmatpush.msra.mxu0 %v2424
        %v2426 = vand.u32 %v467, 4294901760
        %v2427 = vsub.f32 %v467, %v2426
        %v2428 = vand.u32 %v2427, 4294901760
        %v2429 = vsub.f32 %v2427, %v2428
        %v2430 = vand.u32 %v2429, 4294901760
        %2431 = vmatpush.msra.mxu0 %v2430
        %v2432 = vand.u32 %v466, 4294901760
        %v2433 = vsub.f32 %v466, %v2432
        %v2434 = vand.u32 %v2433, 4294901760
        %v2435 = vsub.f32 %v2433, %v2434
        %v2436 = vand.u32 %v2435, 4294901760
        %2437 = vmatpush.msra.mxu0 %v2436
        %v2438 = vand.u32 %v465, 4294901760
        %v2439 = vsub.f32 %v465, %v2438
        %v2440 = vand.u32 %v2439, 4294901760
        %v2441 = vsub.f32 %v2439, %v2440
        %v2442 = vand.u32 %v2441, 4294901760
        %2443 = vmatpush.msra.mxu0 %v2442
        %v2444 = vand.u32 %v464, 4294901760
        %v2445 = vsub.f32 %v464, %v2444
        %v2446 = vand.u32 %v2445, 4294901760
        %v2447 = vsub.f32 %v2445, %v2446
        %v2448 = vand.u32 %v2447, 4294901760
        %2449 = vmatpush.msra.mxu0 %v2448
        %v2450 = vand.u32 %v463, 4294901760
        %v2451 = vsub.f32 %v463, %v2450
        %v2452 = vand.u32 %v2451, 4294901760
        %v2453 = vsub.f32 %v2451, %v2452
        %v2454 = vand.u32 %v2453, 4294901760
        %2455 = vmatpush.msra.mxu0 %v2454
        %v2456 = vand.u32 %v462, 4294901760
        %v2457 = vsub.f32 %v462, %v2456
        %v2458 = vand.u32 %v2457, 4294901760
        %v2459 = vsub.f32 %v2457, %v2458
        %v2460 = vand.u32 %v2459, 4294901760
        %2461 = vmatpush.msra.mxu0 %v2460
        %v2462 = vand.u32 %v461, 4294901760
        %v2463 = vsub.f32 %v461, %v2462
        %v2464 = vand.u32 %v2463, 4294901760
        %v2465 = vsub.f32 %v2463, %v2464
        %v2466 = vand.u32 %v2465, 4294901760
        %2467 = vmatpush.msra.mxu0 %v2466
        %v2468 = vand.u32 %v460, 4294901760
        %v2469 = vsub.f32 %v460, %v2468
        %v2470 = vand.u32 %v2469, 4294901760
        %v2471 = vsub.f32 %v2469, %v2470
        %v2472 = vand.u32 %v2471, 4294901760
        %2473 = vmatpush.msra.mxu0 %v2472
        %v2474 = vand.u32 %v459, 4294901760
        %v2475 = vsub.f32 %v459, %v2474
        %v2476 = vand.u32 %v2475, 4294901760
        %v2477 = vsub.f32 %v2475, %v2476
        %v2478 = vand.u32 %v2477, 4294901760
        %2479 = vmatpush.msra.mxu0 %v2478
        %v2480 = vand.u32 %v458, 4294901760
        %v2481 = vsub.f32 %v458, %v2480
        %v2482 = vand.u32 %v2481, 4294901760
        %v2483 = vsub.f32 %v2481, %v2482
        %v2484 = vand.u32 %v2483, 4294901760
        %2485 = vmatpush.msra.mxu0 %v2484
        %v2486 = vand.u32 %v457, 4294901760
        %v2487 = vsub.f32 %v457, %v2486
        %v2488 = vand.u32 %v2487, 4294901760
        %v2489 = vsub.f32 %v2487, %v2488
        %v2490 = vand.u32 %v2489, 4294901760
        %2491 = vmatpush.msra.mxu0 %v2490
        %v2492 = vand.u32 %v456, 4294901760
        %v2493 = vsub.f32 %v456, %v2492
        %v2494 = vand.u32 %v2493, 4294901760
        %v2495 = vsub.f32 %v2493, %v2494
        %v2496 = vand.u32 %v2495, 4294901760
        %2497 = vmatpush.msra.mxu0 %v2496
        %v2498 = vand.u32 %v2251, 4294901760
        %2499 = vmatmul.f32.gmra.mxu0 %v2498
        %v2500 = vpop.f32.mrf.mxu0
        %v2501 = vadd.f32 %v2376, %v2500
        %v2502 = vand.u32 %v2255, 4294901760
        %2503 = vmatmul.f32.gmra.mxu0 %v2502
        %v2504 = vpop.f32.mrf.mxu0
        %v2505 = vadd.f32 %v2384, %v2504
        %v2506 = vand.u32 %v2259, 4294901760
        %2507 = vmatmul.f32.gmra.mxu0 %v2506
        %v2508 = vpop.f32.mrf.mxu0
        %v2509 = vadd.f32 %v2392, %v2508
        %v2510 = vand.u32 %v2263, 4294901760
        %2511 = vmatmul.f32.gmra.mxu0 %v2510
        %v2512 = vpop.f32.mrf.mxu0
        %v2513 = vadd.f32 %v2400, %v2512
        %2514 = vdwg.mxu0
        %v2515 = vand.u32 %v471, 4294901760
        %v2516 = vsub.f32 %v471, %v2515
        %2517 = vmatpush.msra.mxu0 %v2516
        %v2518 = vand.u32 %v470, 4294901760
        %v2519 = vsub.f32 %v470, %v2518
        %2520 = vmatpush.msra.mxu0 %v2519
        %v2521 = vand.u32 %v469, 4294901760
        %v2522 = vsub.f32 %v469, %v2521
        %2523 = vmatpush.msra.mxu0 %v2522
        %v2524 = vand.u32 %v468, 4294901760
        %v2525 = vsub.f32 %v468, %v2524
        %2526 = vmatpush.msra.mxu0 %v2525
        %v2527 = vand.u32 %v467, 4294901760
        %v2528 = vsub.f32 %v467, %v2527
        %2529 = vmatpush.msra.mxu0 %v2528
        %v2530 = vand.u32 %v466, 4294901760
        %v2531 = vsub.f32 %v466, %v2530
        %2532 = vmatpush.msra.mxu0 %v2531
        %v2533 = vand.u32 %v465, 4294901760
        %v2534 = vsub.f32 %v465, %v2533
        %2535 = vmatpush.msra.mxu0 %v2534
        %v2536 = vand.u32 %v464, 4294901760
        %v2537 = vsub.f32 %v464, %v2536
        %2538 = vmatpush.msra.mxu0 %v2537
        %v2539 = vand.u32 %v463, 4294901760
        %v2540 = vsub.f32 %v463, %v2539
        %2541 = vmatpush.msra.mxu0 %v2540
        %v2542 = vand.u32 %v462, 4294901760
        %v2543 = vsub.f32 %v462, %v2542
        %2544 = vmatpush.msra.mxu0 %v2543
        %v2545 = vand.u32 %v461, 4294901760
        %v2546 = vsub.f32 %v461, %v2545
        %2547 = vmatpush.msra.mxu0 %v2546
        %v2548 = vand.u32 %v460, 4294901760
        %v2549 = vsub.f32 %v460, %v2548
        %2550 = vmatpush.msra.mxu0 %v2549
        %v2551 = vand.u32 %v459, 4294901760
        %v2552 = vsub.f32 %v459, %v2551
        %2553 = vmatpush.msra.mxu0 %v2552
        %v2554 = vand.u32 %v458, 4294901760
        %v2555 = vsub.f32 %v458, %v2554
        %2556 = vmatpush.msra.mxu0 %v2555
        %v2557 = vand.u32 %v457, 4294901760
        %v2558 = vsub.f32 %v457, %v2557
        %2559 = vmatpush.msra.mxu0 %v2558
        %v2560 = vand.u32 %v456, 4294901760
        %v2561 = vsub.f32 %v456, %v2560
        %2562 = vmatpush.msra.mxu0 %v2561
        %v2563 = vand.u32 %v2251, 4294901760
        %v2564 = vsub.f32 %v2251, %v2563
        %2565 = vmatmul.f32.gmra.mxu0 %v2564
        %v2566 = vpop.f32.mrf.mxu0
        %v2567 = vadd.f32 %v2501, %v2566
        %v2568 = vand.u32 %v2255, 4294901760
        %v2569 = vsub.f32 %v2255, %v2568
        %2570 = vmatmul.f32.gmra.mxu0 %v2569
        %v2571 = vpop.f32.mrf.mxu0
        %v2572 = vadd.f32 %v2505, %v2571
        %v2573 = vand.u32 %v2259, 4294901760
        %v2574 = vsub.f32 %v2259, %v2573
        %2575 = vmatmul.f32.gmra.mxu0 %v2574
        %v2576 = vpop.f32.mrf.mxu0
        %v2577 = vadd.f32 %v2509, %v2576
        %v2578 = vand.u32 %v2263, 4294901760
        %v2579 = vsub.f32 %v2263, %v2578
        %2580 = vmatmul.f32.gmra.mxu0 %v2579
        %v2581 = vpop.f32.mrf.mxu0
        %v2582 = vadd.f32 %v2513, %v2581
        %2583 = vdwg.mxu0
        %v2584 = vand.u32 %v471, 4294901760
        %2585 = vmatpush.msra.mxu0 %v2584
        %v2586 = vand.u32 %v470, 4294901760
        %2587 = vmatpush.msra.mxu0 %v2586
        %v2588 = vand.u32 %v469, 4294901760
        %2589 = vmatpush.msra.mxu0 %v2588
        %v2590 = vand.u32 %v468, 4294901760
        %2591 = vmatpush.msra.mxu0 %v2590
        %v2592 = vand.u32 %v467, 4294901760
        %2593 = vmatpush.msra.mxu0 %v2592
        %v2594 = vand.u32 %v466, 4294901760
        %2595 = vmatpush.msra.mxu0 %v2594
        %v2596 = vand.u32 %v465, 4294901760
        %2597 = vmatpush.msra.mxu0 %v2596
        %v2598 = vand.u32 %v464, 4294901760
        %2599 = vmatpush.msra.mxu0 %v2598
        %v2600 = vand.u32 %v463, 4294901760
        %2601 = vmatpush.msra.mxu0 %v2600
        %v2602 = vand.u32 %v462, 4294901760
        %2603 = vmatpush.msra.mxu0 %v2602
        %v2604 = vand.u32 %v461, 4294901760
        %2605 = vmatpush.msra.mxu0 %v2604
        %v2606 = vand.u32 %v460, 4294901760
        %2607 = vmatpush.msra.mxu0 %v2606
        %v2608 = vand.u32 %v459, 4294901760
        %2609 = vmatpush.msra.mxu0 %v2608
        %v2610 = vand.u32 %v458, 4294901760
        %2611 = vmatpush.msra.mxu0 %v2610
        %v2612 = vand.u32 %v457, 4294901760
        %2613 = vmatpush.msra.mxu0 %v2612
        %v2614 = vand.u32 %v456, 4294901760
        %2615 = vmatpush.msra.mxu0 %v2614
        %v2616 = vand.u32 %v2251, 4294901760
        %v2617 = vsub.f32 %v2251, %v2616
        %v2618 = vand.u32 %v2617, 4294901760
        %2619 = vmatmul.f32.gmra.mxu0 %v2618
        %v2620 = vpop.f32.mrf.mxu0
        %v2621 = vadd.f32 %v2567, %v2620
        %v2622 = vand.u32 %v2255, 4294901760
        %v2623 = vsub.f32 %v2255, %v2622
        %v2624 = vand.u32 %v2623, 4294901760
        %2625 = vmatmul.f32.gmra.mxu0 %v2624
        %v2626 = vpop.f32.mrf.mxu0
        %v2627 = vadd.f32 %v2572, %v2626
        %v2628 = vand.u32 %v2259, 4294901760
        %v2629 = vsub.f32 %v2259, %v2628
        %v2630 = vand.u32 %v2629, 4294901760
        %2631 = vmatmul.f32.gmra.mxu0 %v2630
        %v2632 = vpop.f32.mrf.mxu0
        %v2633 = vadd.f32 %v2577, %v2632
        %v2634 = vand.u32 %v2263, 4294901760
        %v2635 = vsub.f32 %v2263, %v2634
        %v2636 = vand.u32 %v2635, 4294901760
        %2637 = vmatmul.f32.gmra.mxu0 %v2636
        %v2638 = vpop.f32.mrf.mxu0
        %v2639 = vadd.f32 %v2582, %v2638
        %2640 = vdwg.mxu0
        %v2641 = vand.u32 %v471, 4294901760
        %v2642 = vsub.f32 %v471, %v2641
        %v2643 = vand.u32 %v2642, 4294901760
        %2644 = vmatpush.msra.mxu0 %v2643
        %v2645 = vand.u32 %v470, 4294901760
        %v2646 = vsub.f32 %v470, %v2645
        %v2647 = vand.u32 %v2646, 4294901760
        %2648 = vmatpush.msra.mxu0 %v2647
        %v2649 = vand.u32 %v469, 4294901760
        %v2650 = vsub.f32 %v469, %v2649
        %v2651 = vand.u32 %v2650, 4294901760
        %2652 = vmatpush.msra.mxu0 %v2651
        %v2653 = vand.u32 %v468, 4294901760
        %v2654 = vsub.f32 %v468, %v2653
        %v2655 = vand.u32 %v2654, 4294901760
        %2656 = vmatpush.msra.mxu0 %v2655
        %v2657 = vand.u32 %v467, 4294901760
        %v2658 = vsub.f32 %v467, %v2657
        %v2659 = vand.u32 %v2658, 4294901760
        %2660 = vmatpush.msra.mxu0 %v2659
        %v2661 = vand.u32 %v466, 4294901760
        %v2662 = vsub.f32 %v466, %v2661
        %v2663 = vand.u32 %v2662, 4294901760
        %2664 = vmatpush.msra.mxu0 %v2663
        %v2665 = vand.u32 %v465, 4294901760
        %v2666 = vsub.f32 %v465, %v2665
        %v2667 = vand.u32 %v2666, 4294901760
        %2668 = vmatpush.msra.mxu0 %v2667
        %v2669 = vand.u32 %v464, 4294901760
        %v2670 = vsub.f32 %v464, %v2669
        %v2671 = vand.u32 %v2670, 4294901760
        %2672 = vmatpush.msra.mxu0 %v2671
        %v2673 = vand.u32 %v463, 4294901760
        %v2674 = vsub.f32 %v463, %v2673
        %v2675 = vand.u32 %v2674, 4294901760
        %2676 = vmatpush.msra.mxu0 %v2675
        %v2677 = vand.u32 %v462, 4294901760
        %v2678 = vsub.f32 %v462, %v2677
        %v2679 = vand.u32 %v2678, 4294901760
        %2680 = vmatpush.msra.mxu0 %v2679
        %v2681 = vand.u32 %v461, 4294901760
        %v2682 = vsub.f32 %v461, %v2681
        %v2683 = vand.u32 %v2682, 4294901760
        %2684 = vmatpush.msra.mxu0 %v2683
        %v2685 = vand.u32 %v460, 4294901760
        %v2686 = vsub.f32 %v460, %v2685
        %v2687 = vand.u32 %v2686, 4294901760
        %2688 = vmatpush.msra.mxu0 %v2687
        %v2689 = vand.u32 %v459, 4294901760
        %v2690 = vsub.f32 %v459, %v2689
        %v2691 = vand.u32 %v2690, 4294901760
        %2692 = vmatpush.msra.mxu0 %v2691
        %v2693 = vand.u32 %v458, 4294901760
        %v2694 = vsub.f32 %v458, %v2693
        %v2695 = vand.u32 %v2694, 4294901760
        %2696 = vmatpush.msra.mxu0 %v2695
        %v2697 = vand.u32 %v457, 4294901760
        %v2698 = vsub.f32 %v457, %v2697
        %v2699 = vand.u32 %v2698, 4294901760
        %2700 = vmatpush.msra.mxu0 %v2699
        %v2701 = vand.u32 %v456, 4294901760
        %v2702 = vsub.f32 %v456, %v2701
        %v2703 = vand.u32 %v2702, 4294901760
        %2704 = vmatpush.msra.mxu0 %v2703
        %v2705 = vand.u32 %v2251, 4294901760
        %2706 = vmatmul.f32.gmra.mxu0 %v2705
        %v2707 = vpop.f32.mrf.mxu0
        %v2708 = vadd.f32 %v2621, %v2707
        %v2709 = vand.u32 %v2255, 4294901760
        %2710 = vmatmul.f32.gmra.mxu0 %v2709
        %v2711 = vpop.f32.mrf.mxu0
        %v2712 = vadd.f32 %v2627, %v2711
        %v2713 = vand.u32 %v2259, 4294901760
        %2714 = vmatmul.f32.gmra.mxu0 %v2713
        %v2715 = vpop.f32.mrf.mxu0
        %v2716 = vadd.f32 %v2633, %v2715
        %v2717 = vand.u32 %v2263, 4294901760
        %2718 = vmatmul.f32.gmra.mxu0 %v2717
        %v2719 = vpop.f32.mrf.mxu0
        %v2720 = vadd.f32 %v2639, %v2719
        %2721 = vdwg.mxu0
        %v2722 = vand.u32 %v471, 4294901760
        %2723 = vmatpush.msra.mxu0 %v2722
        %v2724 = vand.u32 %v470, 4294901760
        %2725 = vmatpush.msra.mxu0 %v2724
        %v2726 = vand.u32 %v469, 4294901760
        %2727 = vmatpush.msra.mxu0 %v2726
        %v2728 = vand.u32 %v468, 4294901760
        %2729 = vmatpush.msra.mxu0 %v2728
        %v2730 = vand.u32 %v467, 4294901760
        %2731 = vmatpush.msra.mxu0 %v2730
        %v2732 = vand.u32 %v466, 4294901760
        %2733 = vmatpush.msra.mxu0 %v2732
        %v2734 = vand.u32 %v465, 4294901760
        %2735 = vmatpush.msra.mxu0 %v2734
        %v2736 = vand.u32 %v464, 4294901760
        %2737 = vmatpush.msra.mxu0 %v2736
        %v2738 = vand.u32 %v463, 4294901760
        %2739 = vmatpush.msra.mxu0 %v2738
        %v2740 = vand.u32 %v462, 4294901760
        %2741 = vmatpush.msra.mxu0 %v2740
        %v2742 = vand.u32 %v461, 4294901760
        %2743 = vmatpush.msra.mxu0 %v2742
        %v2744 = vand.u32 %v460, 4294901760
        %2745 = vmatpush.msra.mxu0 %v2744
        %v2746 = vand.u32 %v459, 4294901760
        %2747 = vmatpush.msra.mxu0 %v2746
        %v2748 = vand.u32 %v458, 4294901760
        %2749 = vmatpush.msra.mxu0 %v2748
        %v2750 = vand.u32 %v457, 4294901760
        %2751 = vmatpush.msra.mxu0 %v2750
        %v2752 = vand.u32 %v456, 4294901760
        %2753 = vmatpush.msra.mxu0 %v2752
        %v2754 = vand.u32 %v2251, 4294901760
        %2755 = vmatmul.f32.gmra.mxu0 %v2754
        %v2756 = vpop.f32.mrf.mxu0
        %v2757 = vadd.f32 %v2708, %v2756
        %v2758 = vand.u32 %v2255, 4294901760
        %2759 = vmatmul.f32.gmra.mxu0 %v2758
        %v2760 = vpop.f32.mrf.mxu0
        %v2761 = vadd.f32 %v2712, %v2760
        %v2762 = vand.u32 %v2259, 4294901760
        %2763 = vmatmul.f32.gmra.mxu0 %v2762
        %v2764 = vpop.f32.mrf.mxu0
        %v2765 = vadd.f32 %v2716, %v2764
        %v2766 = vand.u32 %v2263, 4294901760
        %2767 = vmatmul.f32.gmra.mxu0 %v2766
        %v2768 = vpop.f32.mrf.mxu0
        %v2769 = vadd.f32 %v2720, %v2768
        %2770 = vdwg.mxu0
        %v2771 = vrcp.pop %v2757
        %v2772 = vmul.f32 %v2757, %v2771
        %v2773 = vsub.f32 1.0, %v2772
        %v2774 = vmul.f32 %v2771, %v2773
        %v2775 = vadd.f32 %v2771, %v2774
        %vm2776 = vweird.f32 %v2757
        %vm2777 = vweird.f32 %v2771
        %vm2778 = vmor %vm2776, %vm2777
        %v2779 = vsel %vm2778, %v2771, %v2775
        %v2780 = vand.u32 2147483647, %v2757
        %vm2781 = vcmp.eq.f32.partialorder %v2780, 8.507059e+37
        %v2782 = vand.u32 %v2757, 2147483648
        %v2783 = vor.u32 1.1754944e-38, %v2782
        %v2784 = vsel %vm2781, %v2783, %v2779
        %v2785 = vmul.f32 %v2333, %v2784
        %v2786 = vrcp.pop %v2761
        %v2787 = vmul.f32 %v2761, %v2786
        %v2788 = vsub.f32 1.0, %v2787
        %v2789 = vmul.f32 %v2786, %v2788
        %v2790 = vadd.f32 %v2786, %v2789
        %vm2791 = vweird.f32 %v2761
        %vm2792 = vweird.f32 %v2786
        %vm2793 = vmor %vm2791, %vm2792
        %v2794 = vsel %vm2793, %v2786, %v2790
        %v2795 = vand.u32 2147483647, %v2761
        %vm2796 = vcmp.eq.f32.partialorder %v2795, 8.507059e+37
        %v2797 = vand.u32 %v2761, 2147483648
        %v2798 = vor.u32 1.1754944e-38, %v2797
        %v2799 = vsel %vm2796, %v2798, %v2794
        %v2800 = vmul.f32 %v2334, %v2799
        %v2801 = vrcp.pop %v2765
        %v2802 = vmul.f32 %v2765, %v2801
        %v2803 = vsub.f32 1.0, %v2802
        %v2804 = vmul.f32 %v2801, %v2803
        %v2805 = vadd.f32 %v2801, %v2804
        %vm2806 = vweird.f32 %v2765
        %vm2807 = vweird.f32 %v2801
        %vm2808 = vmor %vm2806, %vm2807
        %v2809 = vsel %vm2808, %v2801, %v2805
        %v2810 = vand.u32 2147483647, %v2765
        %vm2811 = vcmp.eq.f32.partialorder %v2810, 8.507059e+37
        %v2812 = vand.u32 %v2765, 2147483648
        %v2813 = vor.u32 1.1754944e-38, %v2812
        %v2814 = vsel %vm2811, %v2813, %v2809
        %v2815 = vmul.f32 %v2335, %v2814
        %v2816 = vrcp.pop %v2769
        %v2817 = vmul.f32 %v2769, %v2816
        %v2818 = vsub.f32 1.0, %v2817
        %v2819 = vmul.f32 %v2816, %v2818
        %v2820 = vadd.f32 %v2816, %v2819
        %vm2821 = vweird.f32 %v2769
        %vm2822 = vweird.f32 %v2816
        %vm2823 = vmor %vm2821, %vm2822
        %v2824 = vsel %vm2823, %v2816, %v2820
        %v2825 = vand.u32 2147483647, %v2769
        %vm2826 = vcmp.eq.f32.partialorder %v2825, 8.507059e+37
        %v2827 = vand.u32 %v2769, 2147483648
        %v2828 = vor.u32 1.1754944e-38, %v2827
        %v2829 = vsel %vm2826, %v2828, %v2824
        %v2830 = vmul.f32 %v2336, %v2829
        %v2831 = vld [vmem:[#allocation5] sm:$0xff]
        %v2832 = vld [vmem:[#allocation5 + $0x8] sm:$0xff]
        %v2833 = vld [vmem:[#allocation5 + $0x10] sm:$0xff]
        %v2834 = vld [vmem:[#allocation5 + $0x18] sm:$0x3f]
        %v2835 = vmul.f32 %v2785, %v2831
        %v2836 = vmul.f32 %v2800, %v2832
        %v2837 = vmul.f32 %v2815, %v2833
        %v2838 = vmul.f32 %v2830, %v2834
        %vm2839 = vcmask 654336
        %v2840 = vsel %vm2839, %v2835, 0.0
        %v2841 = vsel %vm2839, %v2836, 0.0
        %v2842 = vadd.f32 %v2840, %v2841
        %v2843 = vsel %vm2839, %v2837, 0.0
        %v2844 = vadd.f32 %v2842, %v2843
        %vm2845 = vcmask 652288
        %v2846 = vsel %vm2845, %v2838, 0.0
        %v2847 = vadd.f32 %v2844, %v2846
        %v2848 = vrot.slane %v2847, 4
        %v2849 = vadd.f32 %v2847, %v2848
        %v2850 = vrot.slane %v2849, 2
        %v2851 = vadd.f32 %v2849, %v2850
        %v2852 = vrot.slane %v2851, 1
        %v2853 = vadd.f32 %v2851, %v2852
        %v2854 = vld [vmem:[#allocation7] sm:$0xff]
        %v2855 = vld [vmem:[#allocation7 + $0x8] sm:$0xff]
        %v2856 = vld [vmem:[#allocation7 + $0x10] sm:$0xff]
        %v2857 = vld [vmem:[#allocation7 + $0x18] sm:$0xff]
        %v2858 = vld [vmem:[#allocation7 + $0x20] sm:$0xff]
        %v2859 = vld [vmem:[#allocation7 + $0x28] sm:$0xff]
        %v2860 = vld [vmem:[#allocation7 + $0x30] sm:$0xff]
        %v2861 = vld [vmem:[#allocation7 + $0x38] sm:$0xff]
        %v2862 = vld [vmem:[#allocation7 + $0x40] sm:$0xff]
        %v2863 = vld [vmem:[#allocation7 + $0x48] sm:$0xff]
        %v2865 = vsel %vm2839, %v2853, 0
        %2867 = vmatpush.msra.mxu0 0.0
        %2868 = vmatpush.msra.mxu0 0.0
        %2869 = vmatpush.msra.mxu0 0.0
        %2870 = vmatpush.msra.mxu0 0.0
        %2871 = vmatpush.msra.mxu0 0.0
        %2872 = vmatpush.msra.mxu0 0.0
        %v2873 = vand.u32 %v2863, 4294901760
        %2874 = vmatpush.msra.mxu0 %v2873
        %v2875 = vand.u32 %v2862, 4294901760
        %2876 = vmatpush.msra.mxu0 %v2875
        %v2877 = vand.u32 %v2861, 4294901760
        %2878 = vmatpush.msra.mxu0 %v2877
        %v2879 = vand.u32 %v2860, 4294901760
        %2880 = vmatpush.msra.mxu0 %v2879
        %v2881 = vand.u32 %v2859, 4294901760
        %2882 = vmatpush.msra.mxu0 %v2881
        %v2883 = vand.u32 %v2858, 4294901760
        %2884 = vmatpush.msra.mxu0 %v2883
        %v2885 = vand.u32 %v2857, 4294901760
        %2886 = vmatpush.msra.mxu0 %v2885
        %v2887 = vand.u32 %v2856, 4294901760
        %2888 = vmatpush.msra.mxu0 %v2887
        %v2889 = vand.u32 %v2855, 4294901760
        %2890 = vmatpush.msra.mxu0 %v2889
        %v2891 = vand.u32 %v2854, 4294901760
        %2892 = vmatpush.msra.mxu0 %v2891
        %v2893 = vand.u32 %v2865, 4294901760
        %v2894 = vsub.f32 %v2865, %v2893
        %v2895 = vand.u32 %v2894, 4294901760
        %v2896 = vsub.f32 %v2894, %v2895
        %v2897 = vand.u32 %v2896, 4294901760
        %2898 = vmatmul.f32.gmra.mxu0 %v2897
        %v2899 = vpop.f32.mrf.mxu0
        %v2900 = vadd.f32 0.0, %v2899
        %2901 = vdwg.mxu0
        %2902 = vmatpush.msra.mxu0 0.0
        %2903 = vmatpush.msra.mxu0 0.0
        %2904 = vmatpush.msra.mxu0 0.0
        %2905 = vmatpush.msra.mxu0 0.0
        %2906 = vmatpush.msra.mxu0 0.0
        %2907 = vmatpush.msra.mxu0 0.0
        %v2908 = vand.u32 %v2863, 4294901760
        %v2909 = vsub.f32 %v2863, %v2908
        %v2910 = vand.u32 %v2909, 4294901760
        %v2911 = vsub.f32 %v2909, %v2910
        %v2912 = vand.u32 %v2911, 4294901760
        %2913 = vmatpush.msra.mxu0 %v2912
        %v2914 = vand.u32 %v2862, 4294901760
        %v2915 = vsub.f32 %v2862, %v2914
        %v2916 = vand.u32 %v2915, 4294901760
        %v2917 = vsub.f32 %v2915, %v2916
        %v2918 = vand.u32 %v2917, 4294901760
        %2919 = vmatpush.msra.mxu0 %v2918
        %v2920 = vand.u32 %v2861, 4294901760
        %v2921 = vsub.f32 %v2861, %v2920
        %v2922 = vand.u32 %v2921, 4294901760
        %v2923 = vsub.f32 %v2921, %v2922
        %v2924 = vand.u32 %v2923, 4294901760
        %2925 = vmatpush.msra.mxu0 %v2924
        %v2926 = vand.u32 %v2860, 4294901760
        %v2927 = vsub.f32 %v2860, %v2926
        %v2928 = vand.u32 %v2927, 4294901760
        %v2929 = vsub.f32 %v2927, %v2928
        %v2930 = vand.u32 %v2929, 4294901760
        %2931 = vmatpush.msra.mxu0 %v2930
        %v2932 = vand.u32 %v2859, 4294901760
        %v2933 = vsub.f32 %v2859, %v2932
        %v2934 = vand.u32 %v2933, 4294901760
        %v2935 = vsub.f32 %v2933, %v2934
        %v2936 = vand.u32 %v2935, 4294901760
        %2937 = vmatpush.msra.mxu0 %v2936
        %v2938 = vand.u32 %v2858, 4294901760
        %v2939 = vsub.f32 %v2858, %v2938
        %v2940 = vand.u32 %v2939, 4294901760
        %v2941 = vsub.f32 %v2939, %v2940
        %v2942 = vand.u32 %v2941, 4294901760
        %2943 = vmatpush.msra.mxu0 %v2942
        %v2944 = vand.u32 %v2857, 4294901760
        %v2945 = vsub.f32 %v2857, %v2944
        %v2946 = vand.u32 %v2945, 4294901760
        %v2947 = vsub.f32 %v2945, %v2946
        %v2948 = vand.u32 %v2947, 4294901760
        %2949 = vmatpush.msra.mxu0 %v2948
        %v2950 = vand.u32 %v2856, 4294901760
        %v2951 = vsub.f32 %v2856, %v2950
        %v2952 = vand.u32 %v2951, 4294901760
        %v2953 = vsub.f32 %v2951, %v2952
        %v2954 = vand.u32 %v2953, 4294901760
        %2955 = vmatpush.msra.mxu0 %v2954
        %v2956 = vand.u32 %v2855, 4294901760
        %v2957 = vsub.f32 %v2855, %v2956
        %v2958 = vand.u32 %v2957, 4294901760
        %v2959 = vsub.f32 %v2957, %v2958
        %v2960 = vand.u32 %v2959, 4294901760
        %2961 = vmatpush.msra.mxu0 %v2960
        %v2962 = vand.u32 %v2854, 4294901760
        %v2963 = vsub.f32 %v2854, %v2962
        %v2964 = vand.u32 %v2963, 4294901760
        %v2965 = vsub.f32 %v2963, %v2964
        %v2966 = vand.u32 %v2965, 4294901760
        %2967 = vmatpush.msra.mxu0 %v2966
        %v2968 = vand.u32 %v2865, 4294901760
        %2969 = vmatmul.f32.gmra.mxu0 %v2968
        %v2970 = vpop.f32.mrf.mxu0
        %v2971 = vadd.f32 %v2900, %v2970
        %2972 = vdwg.mxu0
        %2973 = vmatpush.msra.mxu0 0.0
        %2974 = vmatpush.msra.mxu0 0.0
        %2975 = vmatpush.msra.mxu0 0.0
        %2976 = vmatpush.msra.mxu0 0.0
        %2977 = vmatpush.msra.mxu0 0.0
        %2978 = vmatpush.msra.mxu0 0.0
        %v2979 = vand.u32 %v2863, 4294901760
        %v2980 = vsub.f32 %v2863, %v2979
        %2981 = vmatpush.msra.mxu0 %v2980
        %v2982 = vand.u32 %v2862, 4294901760
        %v2983 = vsub.f32 %v2862, %v2982
        %2984 = vmatpush.msra.mxu0 %v2983
        %v2985 = vand.u32 %v2861, 4294901760
        %v2986 = vsub.f32 %v2861, %v2985
        %2987 = vmatpush.msra.mxu0 %v2986
        %v2988 = vand.u32 %v2860, 4294901760
        %v2989 = vsub.f32 %v2860, %v2988
        %2990 = vmatpush.msra.mxu0 %v2989
        %v2991 = vand.u32 %v2859, 4294901760
        %v2992 = vsub.f32 %v2859, %v2991
        %2993 = vmatpush.msra.mxu0 %v2992
        %v2994 = vand.u32 %v2858, 4294901760
        %v2995 = vsub.f32 %v2858, %v2994
        %2996 = vmatpush.msra.mxu0 %v2995
        %v2997 = vand.u32 %v2857, 4294901760
        %v2998 = vsub.f32 %v2857, %v2997
        %2999 = vmatpush.msra.mxu0 %v2998
        %v3000 = vand.u32 %v2856, 4294901760
        %v3001 = vsub.f32 %v2856, %v3000
        %3002 = vmatpush.msra.mxu0 %v3001
        %v3003 = vand.u32 %v2855, 4294901760
        %v3004 = vsub.f32 %v2855, %v3003
        %3005 = vmatpush.msra.mxu0 %v3004
        %v3006 = vand.u32 %v2854, 4294901760
        %v3007 = vsub.f32 %v2854, %v3006
        %3008 = vmatpush.msra.mxu0 %v3007
        %v3009 = vand.u32 %v2865, 4294901760
        %v3010 = vsub.f32 %v2865, %v3009
        %3011 = vmatmul.f32.gmra.mxu0 %v3010
        %v3012 = vpop.f32.mrf.mxu0
        %v3013 = vadd.f32 %v2971, %v3012
        %3014 = vdwg.mxu0
        %3015 = vmatpush.msra.mxu0 0.0
        %3016 = vmatpush.msra.mxu0 0.0
        %3017 = vmatpush.msra.mxu0 0.0
        %3018 = vmatpush.msra.mxu0 0.0
        %3019 = vmatpush.msra.mxu0 0.0
        %3020 = vmatpush.msra.mxu0 0.0
        %v3021 = vand.u32 %v2863, 4294901760
        %3022 = vmatpush.msra.mxu0 %v3021
        %v3023 = vand.u32 %v2862, 4294901760
        %3024 = vmatpush.msra.mxu0 %v3023
        %v3025 = vand.u32 %v2861, 4294901760
        %3026 = vmatpush.msra.mxu0 %v3025
        %v3027 = vand.u32 %v2860, 4294901760
        %3028 = vmatpush.msra.mxu0 %v3027
        %v3029 = vand.u32 %v2859, 4294901760
        %3030 = vmatpush.msra.mxu0 %v3029
        %v3031 = vand.u32 %v2858, 4294901760
        %3032 = vmatpush.msra.mxu0 %v3031
        %v3033 = vand.u32 %v2857, 4294901760
        %3034 = vmatpush.msra.mxu0 %v3033
        %v3035 = vand.u32 %v2856, 4294901760
        %3036 = vmatpush.msra.mxu0 %v3035
        %v3037 = vand.u32 %v2855, 4294901760
        %3038 = vmatpush.msra.mxu0 %v3037
        %v3039 = vand.u32 %v2854, 4294901760
        %3040 = vmatpush.msra.mxu0 %v3039
        %v3041 = vand.u32 %v2865, 4294901760
        %v3042 = vsub.f32 %v2865, %v3041
        %v3043 = vand.u32 %v3042, 4294901760
        %3044 = vmatmul.f32.gmra.mxu0 %v3043
        %v3045 = vpop.f32.mrf.mxu0
        %v3046 = vadd.f32 %v3013, %v3045
        %3047 = vdwg.mxu0
        %3048 = vmatpush.msra.mxu0 0.0
        %3049 = vmatpush.msra.mxu0 0.0
        %3050 = vmatpush.msra.mxu0 0.0
        %3051 = vmatpush.msra.mxu0 0.0
        %3052 = vmatpush.msra.mxu0 0.0
        %3053 = vmatpush.msra.mxu0 0.0
        %v3054 = vand.u32 %v2863, 4294901760
        %v3055 = vsub.f32 %v2863, %v3054
        %v3056 = vand.u32 %v3055, 4294901760
        %3057 = vmatpush.msra.mxu0 %v3056
        %v3058 = vand.u32 %v2862, 4294901760
        %v3059 = vsub.f32 %v2862, %v3058
        %v3060 = vand.u32 %v3059, 4294901760
        %3061 = vmatpush.msra.mxu0 %v3060
        %v3062 = vand.u32 %v2861, 4294901760
        %v3063 = vsub.f32 %v2861, %v3062
        %v3064 = vand.u32 %v3063, 4294901760
        %3065 = vmatpush.msra.mxu0 %v3064
        %v3066 = vand.u32 %v2860, 4294901760
        %v3067 = vsub.f32 %v2860, %v3066
        %v3068 = vand.u32 %v3067, 4294901760
        %3069 = vmatpush.msra.mxu0 %v3068
        %v3070 = vand.u32 %v2859, 4294901760
        %v3071 = vsub.f32 %v2859, %v3070
        %v3072 = vand.u32 %v3071, 4294901760
        %3073 = vmatpush.msra.mxu0 %v3072
        %v3074 = vand.u32 %v2858, 4294901760
        %v3075 = vsub.f32 %v2858, %v3074
        %v3076 = vand.u32 %v3075, 4294901760
        %3077 = vmatpush.msra.mxu0 %v3076
        %v3078 = vand.u32 %v2857, 4294901760
        %v3079 = vsub.f32 %v2857, %v3078
        %v3080 = vand.u32 %v3079, 4294901760
        %3081 = vmatpush.msra.mxu0 %v3080
        %v3082 = vand.u32 %v2856, 4294901760
        %v3083 = vsub.f32 %v2856, %v3082
        %v3084 = vand.u32 %v3083, 4294901760
        %3085 = vmatpush.msra.mxu0 %v3084
        %v3086 = vand.u32 %v2855, 4294901760
        %v3087 = vsub.f32 %v2855, %v3086
        %v3088 = vand.u32 %v3087, 4294901760
        %3089 = vmatpush.msra.mxu0 %v3088
        %v3090 = vand.u32 %v2854, 4294901760
        %v3091 = vsub.f32 %v2854, %v3090
        %v3092 = vand.u32 %v3091, 4294901760
        %3093 = vmatpush.msra.mxu0 %v3092
        %v3094 = vand.u32 %v2865, 4294901760
        %3095 = vmatmul.f32.gmra.mxu0 %v3094
        %v3096 = vpop.f32.mrf.mxu0
        %v3097 = vadd.f32 %v3046, %v3096
        %3098 = vdwg.mxu0
        %3099 = vmatpush.msra.mxu0 0.0
        %3100 = vmatpush.msra.mxu0 0.0
        %3101 = vmatpush.msra.mxu0 0.0
        %3102 = vmatpush.msra.mxu0 0.0
        %3103 = vmatpush.msra.mxu0 0.0
        %3104 = vmatpush.msra.mxu0 0.0
        %v3105 = vand.u32 %v2863, 4294901760
        %3106 = vmatpush.msra.mxu0 %v3105
        %v3107 = vand.u32 %v2862, 4294901760
        %3108 = vmatpush.msra.mxu0 %v3107
        %v3109 = vand.u32 %v2861, 4294901760
        %3110 = vmatpush.msra.mxu0 %v3109
        %v3111 = vand.u32 %v2860, 4294901760
        %3112 = vmatpush.msra.mxu0 %v3111
        %v3113 = vand.u32 %v2859, 4294901760
        %3114 = vmatpush.msra.mxu0 %v3113
        %v3115 = vand.u32 %v2858, 4294901760
        %3116 = vmatpush.msra.mxu0 %v3115
        %v3117 = vand.u32 %v2857, 4294901760
        %3118 = vmatpush.msra.mxu0 %v3117
        %v3119 = vand.u32 %v2856, 4294901760
        %3120 = vmatpush.msra.mxu0 %v3119
        %v3121 = vand.u32 %v2855, 4294901760
        %3122 = vmatpush.msra.mxu0 %v3121
        %v3123 = vand.u32 %v2854, 4294901760
        %3124 = vmatpush.msra.mxu0 %v3123
        %v3125 = vand.u32 %v2865, 4294901760
        %3126 = vmatmul.f32.gmra.mxu0 %v3125
        %v3127 = vpop.f32.mrf.mxu0
        %v3128 = vadd.f32 %v3097, %v3127
        %3129 = vdwg.mxu0
        %v3130 = vperm.slane %v3128, 0
        %3131 = vst [vmem:[%s336] sm:$0xff] %v3130
        %s3132 = sand.u32 %s169, 1
        %s3133 = scalar_lea.sflag [#allocation4], %s3132
        %s3134 = sand.u32 %s169, 1
        %s3135 = smul.addr %s3134, 8
        %s3136 = scalar_lea.vmem [#allocation10], %s3135
        // Predicated region
        $region61: #{tpu_custom_call.1} parent=43 // pred_check
          %p3137 = pneg %p179
        $region62: #{tpu_custom_call.1} parent=43 // pred_check_branch
          %3139 = sbr.rel (%p3137) target = $region64
        $region63: #{tpu_custom_call.1} parent=43 // pred_region
          %3141 = vsyncadd %s3133, 0
          %s3142 = smul.addr %s25, 8
          %s3143 = scalar_lea.hbm %s6, %s3142
          %s3145 = sshll.u32 %s3136, 4
          %s3146 = int_to_ptr.vmem [resolvable:$true] %s3145
          %s3147 = sshll.u32 %s3143, 4
          %s3148 = int_to_ptr.hbm [resolvable:$true] %s3147
          %3150 = dma.vmem_to_hbm [thread:$0]  %s3146, 128, %s3148, %s3133
        $region64: #{tpu_custom_call.1} parent=43 // pred_fallthru
          _
      $region44: #{tpu_custom_call.1} parent=5 // pred_fallthru
        _
      %p3151 = scmp.le.s32.totalorder 2, %s20
      // Predicated region
      $region65: #{tpu_custom_call.1} parent=5 // pred_check
        %p3152 = pneg %p3151
      $region66: #{tpu_custom_call.1} parent=5 // pred_check_branch
        %3154 = sbr.rel (%p3152) target = $region68
      $region67: #{tpu_custom_call.1} parent=5 // pred_region
        %s3155 = ssub.s32 %s20, 2
        // Predicated region
        $region69: #{tpu_custom_call.1} parent=67 // pred_check
          %p3156 = pneg %p185
        $region70: #{tpu_custom_call.1} parent=67 // pred_check_branch
          %3158 = sbr.rel (%p3156) target = $region72
        $region71: #{tpu_custom_call.1} parent=67 // pred_region
          %s3159 = sand.u32 %s170, 1
          %s3160 = scalar_lea.sflag [#allocation4], %s3159
          %s3161 = sand.u32 %s170, 1
          %s3162 = smul.addr %s3161, 8
          %s3163 = scalar_lea.vmem [#allocation10], %s3162
          %3165 = dma.done %s3160, 128
        $region72: #{tpu_custom_call.1} parent=67 // pred_fallthru
          _
      $region68: #{tpu_custom_call.1} parent=5 // pred_fallthru
        _
    $region6: #{tpu_custom_call.1} parent=1 // loop_footer
      %s24 = sadd.s32 1, %s20
    $region7: #{tpu_custom_call.1} parent=1 // loop_footer_branch
      %19 = sbr.rel target = $region3
    $region8: #{tpu_custom_call.1} parent=1 // loop_exit
      _
    %3166 = vsyncpa [#allocation3], 1
    %s3167 = scalar_lea.sflag [#allocation3], 1
    %3168 = vsyncpa %s3167, 1
    %3169 = vsyncpa [#allocation6], 1
    %3170 = vsyncpa [#allocation9], 1
    %s3171 = scalar_lea.sflag [#allocation9], 1
    %3172 = vsyncpa %s3171, 1
    %3173 = vsyncpa [#allocation4], 1
    %s3174 = scalar_lea.sflag [#allocation4], 1
    %3175 = vsyncpa %s3174, 1

</llo_original>
